<compile_context>
chip_gen: v5e
topology: v5e:2x2
jax: 0.10.0
libtpu: 0.0.40
codegen_flags: <defaults>
</compile_context>

<pallas_src>
import math
import numpy as np
import jax
import jax.numpy as jnp
from jax import lax
from jax.experimental import pallas as pl
from jax.experimental.pallas import tpu as pltpu


def _get_wavelength(V):
    # de Broglie wavelength with relativistic correction (Angstrom), V in volts.
    return 12.2639 / math.sqrt(V + 9.7845e-07 * V ** 2)


def _lcm(*vals):
    out = 1
    for v in vals:
        out = out * v // math.gcd(out, v)
    return out


def make_em_simulator(img_side_len, ctf_side_len, resolution, stds, densities,
                      accelerating_voltage, spherical_aberration, amplitude_contrast,
                      batch_tile=None):
    S = int(img_side_len)
    SC = int(ctf_side_len)
    PAD = (SC - S) // 2
    stds_np = np.asarray(stds, np.float64).reshape(-1)
    dens_np = np.asarray(densities, np.float64).reshape(-1)
    A = stds_np.shape[0]

    # Minimal batch tile such that TB*S and TB*SC are multiples of 128 (lane-dense
    # slabs / unmasked stores) and TB*A is a multiple of 8 (sublane-aligned blocks).
    if batch_tile is None:
        TB = _lcm(128 // math.gcd(128, S),
                  128 // math.gcd(128, SC),
                  8 // math.gcd(8, A))
    else:
        TB = int(batch_tile)
        assert (TB * S) % 128 == 0 and (TB * SC) % 128 == 0 and (TB * A) % 8 == 0
    TBA, TBS, TBSC = TB * A, TB * S, TB * SC

    # ---- CTF physical constants ----
    lam = _get_wavelength(accelerating_voltage * 1000.0)
    cs = spherical_aberration * 1.0e7
    phase_term = math.atan(amplitude_contrast / math.sqrt(1.0 - amplitude_contrast ** 2))
    pi_lam = math.pi * lam
    half_pi_cs_lam3 = 0.5 * math.pi * cs * lam ** 3

    # ---- frequency-grid tables, pre-fftshifted, per-pixel trig hoisted to host ----
    freqs = np.fft.fftfreq(SC, d=resolution).astype(np.float64)
    fx = freqs[None, :]
    fy = freqs[:, None]
    r2_sh = np.fft.fftshift(fx ** 2 + fy ** 2)
    polar_sh = np.fft.fftshift(np.arctan2(fy, fx))
    t0 = pi_lam * r2_sh                                    # multiplies 0.5*(du+dv)
    tc = t0 * np.cos(2.0 * polar_sh)                       # multiplies 0.5*(du-dv)*cos(2*ang)
    ts = t0 * np.sin(2.0 * polar_sh)                       # multiplies 0.5*(du-dv)*sin(2*ang)
    tb = phase_term - half_pi_cs_lam3 * r2_sh ** 2         # constant phase part
    t0_t = np.tile(t0, (1, TB)).astype(np.float32)         # [SC, TB*SC]
    tc_t = np.tile(tc, (1, TB)).astype(np.float32)
    ts_t = np.tile(ts, (1, TB)).astype(np.float32)
    tb_t = np.tile(tb, (1, TB)).astype(np.float32)

    # ---- dense DFT matrices with the fft shifts and pad/crop folded in ----
    #   fftshift2(fft2(ifftshift2(pad(P))))   == Uc @ P @ Ur     (Uc: SCxS, Ur: SxSC)
    #   crop(fftshift2(ifft2(ifftshift2(G)))) == Vrows @ G @ Vcols
    k = np.arange(SC)
    W = np.exp(-2j * np.pi * np.outer(k, k) / SC)
    Winv = np.conj(W) / SC
    Pf = np.eye(SC)[np.fft.fftshift(k)]
    Pi = np.eye(SC)[np.fft.ifftshift(k)]
    Ufold = Pf @ W @ Pi
    Ainv = Pf @ Winv @ Pi
    Uc = Ufold[:, PAD:PAD + S]                             # [SC, S]
    Ur = Ufold.T[PAD:PAD + S, :]                           # [S, SC]
    Vrows = Ainv[PAD:PAD + S, :]                           # [S, SC]
    Vcols = Ainv.T[:, PAD:PAD + S]                         # [SC, S]

    eyeTB = np.eye(TB)
    ucr = np.ascontiguousarray(Uc.real).astype(np.float32)                    # [SC, S]
    uci = np.ascontiguousarray(Uc.imag).astype(np.float32)
    urr_bd = np.kron(eyeTB, Ur.real).astype(np.float32)                       # [TB*S, TB*SC]
    uri_bd = np.kron(eyeTB, Ur.imag).astype(np.float32)
    Isel = np.zeros((SC, S))
    Isel[PAD:PAD + S, :] = np.eye(S)
    sel_bd = np.kron(eyeTB, Isel).astype(np.float32)                          # [TB*SC, TB*S]
    vrr_rows = np.ascontiguousarray(Vrows.real).astype(np.float32)            # [S, SC]
    vri_rows = np.ascontiguousarray(Vrows.imag).astype(np.float32)
    vcr_bd = np.kron(eyeTB, Vcols.real).astype(np.float32)                    # [TB*SC, TB*S]
    vci_bd = np.kron(eyeTB, Vcols.imag).astype(np.float32)

    # ---- projector constant tables ----
    x_max = (S - 1) * resolution / 2.0
    coord = np.arange(S, dtype=np.float64) * resolution - x_max               # robust "arange"
    coord_row = coord.reshape(1, S).astype(np.float32)                        # [1, S]
    coord_til = np.tile(coord, TB).reshape(1, TBS).astype(np.float32)         # [1, TB*S]
    var = stds_np ** 2
    nhiv_ba = np.tile(-0.5 / var, TB).reshape(TBA, 1).astype(np.float32)      # [TB*A, 1]
    dens_ba = np.tile(dens_np / (2.0 * np.pi * var), TB).reshape(TBA, 1).astype(np.float32)
    mask_big = np.kron(eyeTB, np.ones((A, S))).astype(np.float32)             # [TB*A, TB*S]

    const_host = [coord_row, coord_til, nhiv_ba, dens_ba, mask_big,
                  ucr, uci, urr_bd, uri_bd, sel_bd,
                  vrr_rows, vri_rows, vcr_bd, vci_bd,
                  t0_t, tc_t, ts_t, tb_t]
    const_dev = [jnp.asarray(c) for c in const_host]

    def kernel(xm_ref, ym_ref, cs_ref,
               coordr_ref, coordt_ref, nhiv_ref, dens_ref, mask_ref,
               ucr_ref, uci_ref, urr_ref, uri_ref, sel_ref,
               vrr_ref, vri_ref, vcr_ref, vci_ref,
               t0_ref, tc_ref, ts_ref, tb_ref,
               four_re_ref, four_im_ref, real_ref):
        f32 = jnp.float32
        # ---- projector: PROJ[y, b*S+x] = sum_a dens_a/(2 pi var_a)
        #                 * exp(-(y-ym_ba)^2/(2 var_a)) * exp(-(x-xm_ba)^2/(2 var_a))
        nhiv = nhiv_ref[...]                                                   # [TB*A, 1]
        gx = jnp.exp(nhiv * (coordt_ref[...] - xm_ref[...]) ** 2)              # [TB*A, TB*S]
        r_bd = mask_ref[...] * gx                                              # block-diag in images
        gy = dens_ref[...] * jnp.exp(nhiv * (coordr_ref[...] - ym_ref[...]) ** 2)  # [TB*A, S]
        proj = lax.dot_general(gy, r_bd, (((0,), (0,)), ((), ())),
                               preferred_element_type=f32)                     # [S, TB*S]

        # ---- forward DFT (pad + fft-shifts folded into cropped DFT matrices) ----
        # Re-associated: the TBx-redundant block-diag factor multiplies the REAL
        # projection (2 matmuls), the shared complex Uc factor is dense (4 matmuls).
        q_re = jnp.dot(proj, urr_ref[...], preferred_element_type=f32)         # [S, TB*SC]
        q_im = jnp.dot(proj, uri_ref[...], preferred_element_type=f32)
        uc_r = ucr_ref[...]                                                    # [SC, S]
        uc_i = uci_ref[...]
        f_re = (jnp.dot(uc_r, q_re, preferred_element_type=f32)
                - jnp.dot(uc_i, q_im, preferred_element_type=f32))             # [SC, TB*SC]
        f_im = (jnp.dot(uc_r, q_im, preferred_element_type=f32)
                + jnp.dot(uc_i, q_re, preferred_element_type=f32))

        # ---- CTF: per-image trig hoisted to wrapper; only per-pixel sin remains ----
        s0 = cs_ref[0:1, :]                                                    # [1, TB*SC]
        cc = cs_ref[1:2, :]
        ss = cs_ref[2:3, :]
        ctf = -jnp.sin(s0 * t0_ref[...] + cc * tc_ref[...]
                       + ss * ts_ref[...] + tb_ref[...])                       # [SC, TB*SC]
        g_re = f_re * ctf
        g_im = f_im * ctf

        # ---- Fourier-space output: centre crop via block-diag column selection ----
        sel = sel_ref[...]
        four_re_ref[...] = jnp.dot(g_re[PAD:PAD + S, :], sel, preferred_element_type=f32)
        four_im_ref[...] = jnp.dot(g_im[PAD:PAD + S, :], sel, preferred_element_type=f32)

        # ---- inverse DFT (real part), crop folded into sliced V matrices ----
        vrr = vrr_ref[...]
        vri = vri_ref[...]
        m_re = (jnp.dot(vrr, g_re, preferred_element_type=f32)
                - jnp.dot(vri, g_im, preferred_element_type=f32))              # [S, TB*SC]
        m_im = (jnp.dot(vrr, g_im, preferred_element_type=f32)
                + jnp.dot(vri, g_re, preferred_element_type=f32))
        real_ref[...] = (jnp.dot(m_re, vcr_ref[...], preferred_element_type=f32)
                         - jnp.dot(m_im, vci_ref[...], preferred_element_type=f32))

    @jax.jit
    def forward(conf, pose, shift, defocus_u, defocus_v, astigm_angle):
        conf = conf.astype(jnp.float32)
        pose = pose.astype(jnp.float32)
        shift = shift.astype(jnp.float32)
        du = defocus_u.astype(jnp.float32)
        dv = defocus_v.astype(jnp.float32)
        ang = astigm_angle.astype(jnp.float32)

        B = conf.shape[0]
        Bp = ((B + TB - 1) // TB) * TB

        # rigid transform + per-image CTF scalars in XLA (lane-sparse work)
        mol = jnp.einsum('bij,baj->bai', pose, conf)
        mxy = mol[:, :, :2] + shift[:, None, :]
        x_m = mxy[:, :, 0]                                                     # [B, A]
        y_m = mxy[:, :, 1]
        s0 = 0.5 * (du + dv)
        cc = 0.5 * (du - dv) * jnp.cos(2.0 * ang)
        ss = 0.5 * (du - dv) * jnp.sin(2.0 * ang)
        if Bp != B:
            pb = Bp - B
            x_m = jnp.pad(x_m, ((0, pb), (0, 0)))
            y_m = jnp.pad(y_m, ((0, pb), (0, 0)))
            s0 = jnp.pad(s0, (0, pb))
            cc = jnp.pad(cc, (0, pb))
            ss = jnp.pad(ss, (0, pb))
        xm_col = x_m.reshape(Bp * A, 1)
        ym_col = y_m.reshape(Bp * A, 1)
        cs_rows = jnp.stack([jnp.repeat(s0, SC), jnp.repeat(cc, SC),
                             jnp.repeat(ss, SC)], axis=0)                      # [3, Bp*SC]

        n_steps = Bp // TB
        in_specs = [
            pl.BlockSpec((TBA, 1), lambda i: (i, 0)),          # x_m per (image, atom)
            pl.BlockSpec((TBA, 1), lambda i: (i, 0)),          # y_m per (image, atom)
            pl.BlockSpec((3, TBSC), lambda i: (0, i)),         # CTF scalar rows
        ] + [pl.BlockSpec(c.shape, lambda i: (0, 0)) for c in const_host]

        fre, fim, rr = pl.pallas_call(
            kernel,
            grid=(n_steps,),
            in_specs=in_specs,
            out_specs=[
                pl.BlockSpec((S, TBS), lambda i: (0, i)),
                pl.BlockSpec((S, TBS), lambda i: (0, i)),
                pl.BlockSpec((S, TBS), lambda i: (0, i)),
            ],
            out_shape=[
                jax.ShapeDtypeStruct((S, Bp * S), jnp.float32),
                jax.ShapeDtypeStruct((S, Bp * S), jnp.float32),
                jax.ShapeDtypeStruct((S, Bp * S), jnp.float32),
            ],
            compiler_params=pltpu.CompilerParams(
                dimension_semantics=("parallel",),
                vmem_limit_bytes=64 * 1024 * 1024),
        )(xm_col, ym_col, cs_rows, *const_dev)

        def unstack(v):                                        # [S, Bp*S] -> [B, S, S]
            return v.reshape(S, Bp, S).transpose(1, 0, 2)[:B]

        img_four = (unstack(fre) + 1j * unstack(fim)).astype(jnp.complex64)
        img_real = unstack(rr)
        return img_four, img_real

    return forward


if __name__ == "__main__":
    B, A, S, SC = 12, 8, 16, 32
    resolution = 1.0
    stds = (1.0 + 0.1 * np.arange(A)).astype(np.float32)
    densities = (1.0 + 0.05 * np.arange(A)).astype(np.float32)

    forward = make_em_simulator(S, SC, resolution, stds, densities,
                                accelerating_voltage=300.0,
                                spherical_aberration=2.7,
                                amplitude_contrast=0.1)

    key = jax.random.PRNGKey(0)
    k1, k2, k3, k4, k5, k6 = jax.random.split(key, 6)
    conf = jax.random.normal(k1, (B, A, 3), dtype=jnp.float32) * 3.0

    # deterministic random rotations from Euler angles (glue)
    ang3 = jax.random.uniform(k2, (B, 3), minval=0.0, maxval=2.0 * np.pi)
    ca, cb, cc = jnp.cos(ang3[:, 0]), jnp.cos(ang3[:, 1]), jnp.cos(ang3[:, 2])
    sa, sb, sc_ = jnp.sin(ang3[:, 0]), jnp.sin(ang3[:, 1]), jnp.sin(ang3[:, 2])
    z0, o1 = jnp.zeros_like(ca), jnp.ones_like(ca)
    Rz = jnp.stack([jnp.stack([ca, -sa, z0], -1),
                    jnp.stack([sa, ca, z0], -1),
                    jnp.stack([z0, z0, o1], -1)], -2)
    Ry = jnp.stack([jnp.stack([cb, z0, sb], -1),
                    jnp.stack([z0, o1, z0], -1),
                    jnp.stack([-sb, z0, cb], -1)], -2)
    Rx = jnp.stack([jnp.stack([o1, z0, z0], -1),
                    jnp.stack([z0, cc, -sc_], -1),
                    jnp.stack([z0, sc_, cc], -1)], -2)
    pose = jnp.einsum('bij,bjk,bkl->bil', Rz, Ry, Rx)

    shift = jax.random.normal(k3, (B, 2), dtype=jnp.float32) * 1.5
    dv = 9000.0 + jax.random.uniform(k4, (B,), dtype=jnp.float32) * 2000.0
    du = dv + jax.random.uniform(k5, (B,), dtype=jnp.float32) * 3000.0  # du >= dv
    astigm = jax.random.uniform(k6, (B,), dtype=jnp.float32, maxval=np.pi)

    img_four, img_real = forward(conf, pose, shift, du, dv, astigm)
    jax.block_until_ready((img_four, img_real))

    # ---- pure-JAX reference (mirrors the torch forward) ----
    def reference(conf, pose, shift, du, dv, ang):
        lam = 12.2639 / math.sqrt(300000.0 + 9.7845e-07 * 300000.0 ** 2)
        cs = 2.7e7
        phase = math.atan(0.1 / math.sqrt(1.0 - 0.1 ** 2))
        freqs = np.fft.fftfreq(SC, d=resolution)
        fx = freqs[None, :]
        fy = freqs[:, None]
        r2 = jnp.asarray(fx ** 2 + fy ** 2, jnp.float32)
        polar = jnp.asarray(np.arctan2(fy, fx), jnp.float32)
        mol = jnp.einsum('bij,baj->bai', pose, conf)
        mxy = mol[:, :, :2] + shift[:, None, :]
        x_m = mxy[:, :, 0][:, :, None, None]
        y_m = mxy[:, :, 1][:, :, None, None]
        x_max = (S - 1) * resolution / 2.0
        coord = jnp.asarray(np.arange(S, dtype=np.float64) * resolution - x_max, jnp.float32)
        xg = coord.reshape(1, 1, 1, S)
        yg = coord.reshape(1, 1, S, 1)
        var = jnp.asarray(stds ** 2).reshape(1, -1, 1, 1)
        dens = jnp.asarray(densities).reshape(1, -1, 1, 1)
        proj = (jnp.exp(-0.5 / var * (xg - x_m) ** 2)
                * jnp.exp(-0.5 / var * (yg - y_m) ** 2)
                / (2.0 * np.pi * var) * dens).sum(axis=1)
        duB, dvB, angB = du[:, None, None], dv[:, None, None], ang[:, None, None]
        ld = 0.5 * (duB + dvB + (duB - dvB) * jnp.cos(2.0 * (polar[None] - angB)))
        ctf = -jnp.sin(np.pi * lam * r2[None] * ld
                       - 0.5 * np.pi * cs * lam ** 3 * r2[None] ** 2 + phase)
        PAD_ = (SC - S) // 2
        pp = jnp.pad(proj, ((0, 0), (PAD_, PAD_), (PAD_, PAD_)))
        fp = jnp.fft.fftshift(jnp.fft.fft2(jnp.fft.ifftshift(pp, axes=(-1, -2))) * ctf,
                              axes=(-1, -2))
        rp = jnp.fft.fftshift(jnp.fft.ifft2(jnp.fft.ifftshift(fp, axes=(-1, -2))),
                              axes=(-1, -2)).real
        return fp[:, PAD_:PAD_ + S, PAD_:PAD_ + S], rp[:, PAD_:PAD_ + S, PAD_:PAD_ + S]

    ref_four, ref_real = reference(conf, pose, shift, du, dv, astigm)
    np.testing.assert_allclose(np.asarray(img_four), np.asarray(ref_four),
                               rtol=2e-2, atol=1e-2)
    np.testing.assert_allclose(np.asarray(img_real), np.asarray(ref_real),
                               rtol=2e-2, atol=1e-2)
    print("KERNEL_OK")
</pallas_src>

<mosaic_0001>
module attributes {stable_mosaic.version = 11 : i64} {
  func.func @kernel(%arg0: i32, %arg1: memref<64x1xf32, #tpu.memory_space<vmem>>, %arg2: memref<64x1xf32, #tpu.memory_space<vmem>>, %arg3: memref<3x256xf32, #tpu.memory_space<vmem>>, %arg4: memref<1x16xf32, #tpu.memory_space<vmem>>, %arg5: memref<1x128xf32, #tpu.memory_space<vmem>>, %arg6: memref<64x1xf32, #tpu.memory_space<vmem>>, %arg7: memref<64x1xf32, #tpu.memory_space<vmem>>, %arg8: memref<64x128xf32, #tpu.memory_space<vmem>>, %arg9: memref<32x16xf32, #tpu.memory_space<vmem>>, %arg10: memref<32x16xf32, #tpu.memory_space<vmem>>, %arg11: memref<128x256xf32, #tpu.memory_space<vmem>>, %arg12: memref<128x256xf32, #tpu.memory_space<vmem>>, %arg13: memref<256x128xf32, #tpu.memory_space<vmem>>, %arg14: memref<16x32xf32, #tpu.memory_space<vmem>>, %arg15: memref<16x32xf32, #tpu.memory_space<vmem>>, %arg16: memref<256x128xf32, #tpu.memory_space<vmem>>, %arg17: memref<256x128xf32, #tpu.memory_space<vmem>>, %arg18: memref<32x256xf32, #tpu.memory_space<vmem>>, %arg19: memref<32x256xf32, #tpu.memory_space<vmem>>, %arg20: memref<32x256xf32, #tpu.memory_space<vmem>>, %arg21: memref<32x256xf32, #tpu.memory_space<vmem>>, %arg22: memref<16x128xf32, #tpu.memory_space<vmem>>, %arg23: memref<16x128xf32, #tpu.memory_space<vmem>>, %arg24: memref<16x128xf32, #tpu.memory_space<vmem>>) attributes {dimension_semantics = [#tpu.dimension_semantics<parallel>], iteration_bounds = array<i64: 2>, scalar_prefetch = 0 : i64, scratch_operands = 0 : i64, tpu.core_type = #tpu.core_type<tc>, window_params = [{transform_indices = @transform_0, window_bounds = array<i64: 64, 1>}, {transform_indices = @transform_1, window_bounds = array<i64: 64, 1>}, {transform_indices = @transform_2, window_bounds = array<i64: 3, 256>}, {pipeline_mode = #tpu.pipeline_mode<synchronous>, transform_indices = @transform_3, window_bounds = array<i64: 1, 16>}, {pipeline_mode = #tpu.pipeline_mode<synchronous>, transform_indices = @transform_4, window_bounds = array<i64: 1, 128>}, {pipeline_mode = #tpu.pipeline_mode<synchronous>, transform_indices = @transform_5, window_bounds = array<i64: 64, 1>}, {pipeline_mode = #tpu.pipeline_mode<synchronous>, transform_indices = @transform_6, window_bounds = array<i64: 64, 1>}, {pipeline_mode = #tpu.pipeline_mode<synchronous>, transform_indices = @transform_7, window_bounds = array<i64: 64, 128>}, {pipeline_mode = #tpu.pipeline_mode<synchronous>, transform_indices = @transform_8, window_bounds = array<i64: 32, 16>}, {pipeline_mode = #tpu.pipeline_mode<synchronous>, transform_indices = @transform_9, window_bounds = array<i64: 32, 16>}, {pipeline_mode = #tpu.pipeline_mode<synchronous>, transform_indices = @transform_10, window_bounds = array<i64: 128, 256>}, {pipeline_mode = #tpu.pipeline_mode<synchronous>, transform_indices = @transform_11, window_bounds = array<i64: 128, 256>}, {pipeline_mode = #tpu.pipeline_mode<synchronous>, transform_indices = @transform_12, window_bounds = array<i64: 256, 128>}, {pipeline_mode = #tpu.pipeline_mode<synchronous>, transform_indices = @transform_13, window_bounds = array<i64: 16, 32>}, {pipeline_mode = #tpu.pipeline_mode<synchronous>, transform_indices = @transform_14, window_bounds = array<i64: 16, 32>}, {pipeline_mode = #tpu.pipeline_mode<synchronous>, transform_indices = @transform_15, window_bounds = array<i64: 256, 128>}, {pipeline_mode = #tpu.pipeline_mode<synchronous>, transform_indices = @transform_16, window_bounds = array<i64: 256, 128>}, {pipeline_mode = #tpu.pipeline_mode<synchronous>, transform_indices = @transform_17, window_bounds = array<i64: 32, 256>}, {pipeline_mode = #tpu.pipeline_mode<synchronous>, transform_indices = @transform_18, window_bounds = array<i64: 32, 256>}, {pipeline_mode = #tpu.pipeline_mode<synchronous>, transform_indices = @transform_19, window_bounds = array<i64: 32, 256>}, {pipeline_mode = #tpu.pipeline_mode<synchronous>, transform_indices = @transform_20, window_bounds = array<i64: 32, 256>}, {transform_indices = @transform_21, window_bounds = array<i64: 16, 128>}, {transform_indices = @transform_22, window_bounds = array<i64: 16, 128>}, {transform_indices = @transform_23, window_bounds = array<i64: 16, 128>}]} {
    %c0 = arith.constant 0 : index
    %c0_0 = arith.constant 0 : index
    %0 = vector.load %arg6[%c0, %c0_0] : memref<64x1xf32, #tpu.memory_space<vmem>>, vector<64x1xf32>
    %c0_1 = arith.constant 0 : index
    %c0_2 = arith.constant 0 : index
    %1 = vector.load %arg5[%c0_1, %c0_2] : memref<1x128xf32, #tpu.memory_space<vmem>>, vector<1x128xf32>
    %c0_3 = arith.constant 0 : index
    %c0_4 = arith.constant 0 : index
    %2 = vector.load %arg1[%c0_3, %c0_4] : memref<64x1xf32, #tpu.memory_space<vmem>>, vector<64x1xf32>
    %3 = vector.broadcast %1 : vector<1x128xf32> to vector<64x128xf32>
    %4 = vector.broadcast %2 : vector<64x1xf32> to vector<64x128xf32>
    %5 = arith.subf %3, %4 : vector<64x128xf32>
    %6 = arith.mulf %5, %5 : vector<64x128xf32>
    %7 = vector.broadcast %0 : vector<64x1xf32> to vector<64x128xf32>
    %8 = arith.mulf %7, %6 : vector<64x128xf32>
    %9 = math.exp %8 : vector<64x128xf32>
    %c0_5 = arith.constant 0 : index
    %c0_6 = arith.constant 0 : index
    %10 = vector.load %arg8[%c0_5, %c0_6] : memref<64x128xf32, #tpu.memory_space<vmem>>, vector<64x128xf32>
    %11 = arith.mulf %10, %9 : vector<64x128xf32>
    %c0_7 = arith.constant 0 : index
    %c0_8 = arith.constant 0 : index
    %12 = vector.load %arg7[%c0_7, %c0_8] : memref<64x1xf32, #tpu.memory_space<vmem>>, vector<64x1xf32>
    %c0_9 = arith.constant 0 : index
    %c0_10 = arith.constant 0 : index
    %13 = vector.load %arg4[%c0_9, %c0_10] : memref<1x16xf32, #tpu.memory_space<vmem>>, vector<1x16xf32>
    %c0_11 = arith.constant 0 : index
    %c0_12 = arith.constant 0 : index
    %14 = vector.load %arg2[%c0_11, %c0_12] : memref<64x1xf32, #tpu.memory_space<vmem>>, vector<64x1xf32>
    %15 = vector.broadcast %13 : vector<1x16xf32> to vector<64x16xf32>
    %16 = vector.broadcast %14 : vector<64x1xf32> to vector<64x16xf32>
    %17 = arith.subf %15, %16 : vector<64x16xf32>
    %18 = arith.mulf %17, %17 : vector<64x16xf32>
    %19 = vector.broadcast %0 : vector<64x1xf32> to vector<64x16xf32>
    %20 = arith.mulf %19, %18 : vector<64x16xf32>
    %21 = math.exp %20 : vector<64x16xf32>
    %22 = vector.broadcast %12 : vector<64x1xf32> to vector<64x16xf32>
    %23 = arith.mulf %22, %21 : vector<64x16xf32>
    %cst = arith.constant dense<0.000000e+00> : vector<16x128xf32>
    %24 = tpu.matmul %23, %11, %cst {dimension_numbers = #tpu.dot_dimension_numbers<[0], [0], [1], [1], [0, 1, 1, 1], [], []>} : vector<64x16xf32>, vector<64x128xf32>, vector<16x128xf32> -> vector<16x128xf32>
    %c0_13 = arith.constant 0 : index
    %c0_14 = arith.constant 0 : index
    %25 = vector.load %arg11[%c0_13, %c0_14] : memref<128x256xf32, #tpu.memory_space<vmem>>, vector<128x256xf32>
    %cst_15 = arith.constant dense<0.000000e+00> : vector<16x256xf32>
    %26 = tpu.matmul %24, %25, %cst_15 {dimension_numbers = #tpu.dot_dimension_numbers<[1], [0], [0], [1], [0, 0, 1, 1], [], []>} : vector<16x128xf32>, vector<128x256xf32>, vector<16x256xf32> -> vector<16x256xf32>
    %c0_16 = arith.constant 0 : index
    %c0_17 = arith.constant 0 : index
    %27 = vector.load %arg12[%c0_16, %c0_17] : memref<128x256xf32, #tpu.memory_space<vmem>>, vector<128x256xf32>
    %cst_18 = arith.constant dense<0.000000e+00> : vector<16x256xf32>
    %28 = tpu.matmul %24, %27, %cst_18 {dimension_numbers = #tpu.dot_dimension_numbers<[1], [0], [0], [1], [0, 0, 1, 1], [], []>} : vector<16x128xf32>, vector<128x256xf32>, vector<16x256xf32> -> vector<16x256xf32>
    %c0_19 = arith.constant 0 : index
    %c0_20 = arith.constant 0 : index
    %29 = vector.load %arg9[%c0_19, %c0_20] : memref<32x16xf32, #tpu.memory_space<vmem>>, vector<32x16xf32>
    %c0_21 = arith.constant 0 : index
    %c0_22 = arith.constant 0 : index
    %30 = vector.load %arg10[%c0_21, %c0_22] : memref<32x16xf32, #tpu.memory_space<vmem>>, vector<32x16xf32>
    %cst_23 = arith.constant dense<0.000000e+00> : vector<32x256xf32>
    %31 = tpu.matmul %29, %26, %cst_23 {dimension_numbers = #tpu.dot_dimension_numbers<[1], [0], [0], [1], [0, 0, 1, 1], [], []>} : vector<32x16xf32>, vector<16x256xf32>, vector<32x256xf32> -> vector<32x256xf32>
    %cst_24 = arith.constant dense<0.000000e+00> : vector<32x256xf32>
    %32 = tpu.matmul %30, %28, %cst_24 {dimension_numbers = #tpu.dot_dimension_numbers<[1], [0], [0], [1], [0, 0, 1, 1], [], []>} : vector<32x16xf32>, vector<16x256xf32>, vector<32x256xf32> -> vector<32x256xf32>
    %33 = arith.subf %31, %32 : vector<32x256xf32>
    %cst_25 = arith.constant dense<0.000000e+00> : vector<32x256xf32>
    %34 = tpu.matmul %29, %28, %cst_25 {dimension_numbers = #tpu.dot_dimension_numbers<[1], [0], [0], [1], [0, 0, 1, 1], [], []>} : vector<32x16xf32>, vector<16x256xf32>, vector<32x256xf32> -> vector<32x256xf32>
    %cst_26 = arith.constant dense<0.000000e+00> : vector<32x256xf32>
    %35 = tpu.matmul %30, %26, %cst_26 {dimension_numbers = #tpu.dot_dimension_numbers<[1], [0], [0], [1], [0, 0, 1, 1], [], []>} : vector<32x16xf32>, vector<16x256xf32>, vector<32x256xf32> -> vector<32x256xf32>
    %36 = arith.addf %34, %35 : vector<32x256xf32>
    %c0_27 = arith.constant 0 : index
    %c0_28 = arith.constant 0 : index
    %37 = vector.load %arg3[%c0_27, %c0_28] : memref<3x256xf32, #tpu.memory_space<vmem>>, vector<1x256xf32>
    %c1 = arith.constant 1 : index
    %c0_29 = arith.constant 0 : index
    %38 = vector.load %arg3[%c1, %c0_29] : memref<3x256xf32, #tpu.memory_space<vmem>>, vector<1x256xf32>
    %c2 = arith.constant 2 : index
    %c0_30 = arith.constant 0 : index
    %39 = vector.load %arg3[%c2, %c0_30] : memref<3x256xf32, #tpu.memory_space<vmem>>, vector<1x256xf32>
    %c0_31 = arith.constant 0 : index
    %c0_32 = arith.constant 0 : index
    %40 = vector.load %arg18[%c0_31, %c0_32] : memref<32x256xf32, #tpu.memory_space<vmem>>, vector<32x256xf32>
    %41 = vector.broadcast %37 : vector<1x256xf32> to vector<32x256xf32>
    %42 = arith.mulf %41, %40 : vector<32x256xf32>
    %c0_33 = arith.constant 0 : index
    %c0_34 = arith.constant 0 : index
    %43 = vector.load %arg19[%c0_33, %c0_34] : memref<32x256xf32, #tpu.memory_space<vmem>>, vector<32x256xf32>
    %44 = vector.broadcast %38 : vector<1x256xf32> to vector<32x256xf32>
    %45 = arith.mulf %44, %43 : vector<32x256xf32>
    %46 = arith.addf %42, %45 : vector<32x256xf32>
    %c0_35 = arith.constant 0 : index
    %c0_36 = arith.constant 0 : index
    %47 = vector.load %arg20[%c0_35, %c0_36] : memref<32x256xf32, #tpu.memory_space<vmem>>, vector<32x256xf32>
    %48 = vector.broadcast %39 : vector<1x256xf32> to vector<32x256xf32>
    %49 = arith.mulf %48, %47 : vector<32x256xf32>
    %50 = arith.addf %46, %49 : vector<32x256xf32>
    %c0_37 = arith.constant 0 : index
    %c0_38 = arith.constant 0 : index
    %51 = vector.load %arg21[%c0_37, %c0_38] : memref<32x256xf32, #tpu.memory_space<vmem>>, vector<32x256xf32>
    %52 = arith.addf %50, %51 : vector<32x256xf32>
    %53 = math.sin %52 : vector<32x256xf32>
    %cst_39 = arith.constant 0.000000e+00 : f32
    %54 = vector.broadcast %cst_39 : f32 to vector<32x256xf32>
    %55 = arith.subf %54, %53 : vector<32x256xf32>
    %56 = arith.mulf %33, %55 : vector<32x256xf32>
    %57 = arith.mulf %36, %55 : vector<32x256xf32>
    %c0_40 = arith.constant 0 : index
    %c0_41 = arith.constant 0 : index
    %58 = vector.load %arg13[%c0_40, %c0_41] : memref<256x128xf32, #tpu.memory_space<vmem>>, vector<256x128xf32>
    %59 = vector.extract_strided_slice %56 {offsets = [8, 0], sizes = [16, 256], strides = [1, 1]} : vector<32x256xf32> to vector<16x256xf32>
    %cst_42 = arith.constant dense<0.000000e+00> : vector<16x128xf32>
    %60 = tpu.matmul %59, %58, %cst_42 {dimension_numbers = #tpu.dot_dimension_numbers<[1], [0], [0], [1], [0, 0, 1, 1], [], []>} : vector<16x256xf32>, vector<256x128xf32>, vector<16x128xf32> -> vector<16x128xf32>
    %c0_43 = arith.constant 0 : index
    %c0_44 = arith.constant 0 : index
    %61 = vector.load %arg22[%c0_43, %c0_44] : memref<16x128xf32, #tpu.memory_space<vmem>>, vector<16x128xf32>
    tpu.vector_store %arg22[%c0_43, %c0_44], %60 {strides = array<i32>} : memref<16x128xf32, #tpu.memory_space<vmem>>, vector<16x128xf32>,
    %62 = vector.extract_strided_slice %57 {offsets = [8, 0], sizes = [16, 256], strides = [1, 1]} : vector<32x256xf32> to vector<16x256xf32>
    %cst_45 = arith.constant dense<0.000000e+00> : vector<16x128xf32>
    %63 = tpu.matmul %62, %58, %cst_45 {dimension_numbers = #tpu.dot_dimension_numbers<[1], [0], [0], [1], [0, 0, 1, 1], [], []>} : vector<16x256xf32>, vector<256x128xf32>, vector<16x128xf32> -> vector<16x128xf32>
    %c0_46 = arith.constant 0 : index
    %c0_47 = arith.constant 0 : index
    %64 = vector.load %arg23[%c0_46, %c0_47] : memref<16x128xf32, #tpu.memory_space<vmem>>, vector<16x128xf32>
    tpu.vector_store %arg23[%c0_46, %c0_47], %63 {strides = array<i32>} : memref<16x128xf32, #tpu.memory_space<vmem>>, vector<16x128xf32>,
    %c0_48 = arith.constant 0 : index
    %c0_49 = arith.constant 0 : index
    %65 = vector.load %arg14[%c0_48, %c0_49] : memref<16x32xf32, #tpu.memory_space<vmem>>, vector<16x32xf32>
    %c0_50 = arith.constant 0 : index
    %c0_51 = arith.constant 0 : index
    %66 = vector.load %arg15[%c0_50, %c0_51] : memref<16x32xf32, #tpu.memory_space<vmem>>, vector<16x32xf32>
    %cst_52 = arith.constant dense<0.000000e+00> : vector<16x256xf32>
    %67 = tpu.matmul %65, %56, %cst_52 {dimension_numbers = #tpu.dot_dimension_numbers<[1], [0], [0], [1], [0, 0, 1, 1], [], []>} : vector<16x32xf32>, vector<32x256xf32>, vector<16x256xf32> -> vector<16x256xf32>
    %cst_53 = arith.constant dense<0.000000e+00> : vector<16x256xf32>
    %68 = tpu.matmul %66, %57, %cst_53 {dimension_numbers = #tpu.dot_dimension_numbers<[1], [0], [0], [1], [0, 0, 1, 1], [], []>} : vector<16x32xf32>, vector<32x256xf32>, vector<16x256xf32> -> vector<16x256xf32>
    %69 = arith.subf %67, %68 : vector<16x256xf32>
    %cst_54 = arith.constant dense<0.000000e+00> : vector<16x256xf32>
    %70 = tpu.matmul %65, %57, %cst_54 {dimension_numbers = #tpu.dot_dimension_numbers<[1], [0], [0], [1], [0, 0, 1, 1], [], []>} : vector<16x32xf32>, vector<32x256xf32>, vector<16x256xf32> -> vector<16x256xf32>
    %cst_55 = arith.constant dense<0.000000e+00> : vector<16x256xf32>
    %71 = tpu.matmul %66, %56, %cst_55 {dimension_numbers = #tpu.dot_dimension_numbers<[1], [0], [0], [1], [0, 0, 1, 1], [], []>} : vector<16x32xf32>, vector<32x256xf32>, vector<16x256xf32> -> vector<16x256xf32>
    %72 = arith.addf %70, %71 : vector<16x256xf32>
    %c0_56 = arith.constant 0 : index
    %c0_57 = arith.constant 0 : index
    %73 = vector.load %arg16[%c0_56, %c0_57] : memref<256x128xf32, #tpu.memory_space<vmem>>, vector<256x128xf32>
    %cst_58 = arith.constant dense<0.000000e+00> : vector<16x128xf32>
    %74 = tpu.matmul %69, %73, %cst_58 {dimension_numbers = #tpu.dot_dimension_numbers<[1], [0], [0], [1], [0, 0, 1, 1], [], []>} : vector<16x256xf32>, vector<256x128xf32>, vector<16x128xf32> -> vector<16x128xf32>
    %c0_59 = arith.constant 0 : index
    %c0_60 = arith.constant 0 : index
    %75 = vector.load %arg17[%c0_59, %c0_60] : memref<256x128xf32, #tpu.memory_space<vmem>>, vector<256x128xf32>
    %cst_61 = arith.constant dense<0.000000e+00> : vector<16x128xf32>
    %76 = tpu.matmul %72, %75, %cst_61 {dimension_numbers = #tpu.dot_dimension_numbers<[1], [0], [0], [1], [0, 0, 1, 1], [], []>} : vector<16x256xf32>, vector<256x128xf32>, vector<16x128xf32> -> vector<16x128xf32>
    %77 = arith.subf %74, %76 : vector<16x128xf32>
    %c0_62 = arith.constant 0 : index
    %c0_63 = arith.constant 0 : index
    %78 = vector.load %arg24[%c0_62, %c0_63] : memref<16x128xf32, #tpu.memory_space<vmem>>, vector<16x128xf32>
    tpu.vector_store %arg24[%c0_62, %c0_63], %77 {strides = array<i32>} : memref<16x128xf32, #tpu.memory_space<vmem>>, vector<16x128xf32>,
    return
  }
  func.func @transform_0(%arg0: i32) -> (i32, i32) {
    %c0_i32 = arith.constant 0 : i32
    %c0_i32_0 = arith.constant 0 : i32
    return %arg0, %c0_i32 : i32, i32
  }
  func.func @transform_1(%arg0: i32) -> (i32, i32) {
    %c0_i32 = arith.constant 0 : i32
    %c0_i32_0 = arith.constant 0 : i32
    return %arg0, %c0_i32 : i32, i32
  }
  func.func @transform_2(%arg0: i32) -> (i32, i32) {
    %c0_i32 = arith.constant 0 : i32
    %c0_i32_0 = arith.constant 0 : i32
    return %c0_i32, %arg0 : i32, i32
  }
  func.func @transform_3(%arg0: i32) -> (i32, i32) {
    %c0_i32 = arith.constant 0 : i32
    %c0_i32_0 = arith.constant 0 : i32
    %c0_i32_1 = arith.constant 0 : i32
    return %c0_i32, %c0_i32_0 : i32, i32
  }
  func.func @transform_4(%arg0: i32) -> (i32, i32) {
    %c0_i32 = arith.constant 0 : i32
    %c0_i32_0 = arith.constant 0 : i32
    %c0_i32_1 = arith.constant 0 : i32
    return %c0_i32, %c0_i32_0 : i32, i32
  }
  func.func @transform_5(%arg0: i32) -> (i32, i32) {
    %c0_i32 = arith.constant 0 : i32
    %c0_i32_0 = arith.constant 0 : i32
    %c0_i32_1 = arith.constant 0 : i32
    return %c0_i32, %c0_i32_0 : i32, i32
  }
  func.func @transform_6(%arg0: i32) -> (i32, i32) {
    %c0_i32 = arith.constant 0 : i32
    %c0_i32_0 = arith.constant 0 : i32
    %c0_i32_1 = arith.constant 0 : i32
    return %c0_i32, %c0_i32_0 : i32, i32
  }
  func.func @transform_7(%arg0: i32) -> (i32, i32) {
    %c0_i32 = arith.constant 0 : i32
    %c0_i32_0 = arith.constant 0 : i32
    %c0_i32_1 = arith.constant 0 : i32
    return %c0_i32, %c0_i32_0 : i32, i32
  }
  func.func @transform_8(%arg0: i32) -> (i32, i32) {
    %c0_i32 = arith.constant 0 : i32
    %c0_i32_0 = arith.constant 0 : i32
    %c0_i32_1 = arith.constant 0 : i32
    return %c0_i32, %c0_i32_0 : i32, i32
  }
  func.func @transform_9(%arg0: i32) -> (i32, i32) {
    %c0_i32 = arith.constant 0 : i32
    %c0_i32_0 = arith.constant 0 : i32
    %c0_i32_1 = arith.constant 0 : i32
    return %c0_i32, %c0_i32_0 : i32, i32
  }
  func.func @transform_10(%arg0: i32) -> (i32, i32) {
    %c0_i32 = arith.constant 0 : i32
    %c0_i32_0 = arith.constant 0 : i32
    %c0_i32_1 = arith.constant 0 : i32
    return %c0_i32, %c0_i32_0 : i32, i32
  }
  func.func @transform_11(%arg0: i32) -> (i32, i32) {
    %c0_i32 = arith.constant 0 : i32
    %c0_i32_0 = arith.constant 0 : i32
    %c0_i32_1 = arith.constant 0 : i32
    return %c0_i32, %c0_i32_0 : i32, i32
  }
  func.func @transform_12(%arg0: i32) -> (i32, i32) {
    %c0_i32 = arith.constant 0 : i32
    %c0_i32_0 = arith.constant 0 : i32
    %c0_i32_1 = arith.constant 0 : i32
    return %c0_i32, %c0_i32_0 : i32, i32
  }
  func.func @transform_13(%arg0: i32) -> (i32, i32) {
    %c0_i32 = arith.constant 0 : i32
    %c0_i32_0 = arith.constant 0 : i32
    %c0_i32_1 = arith.constant 0 : i32
    return %c0_i32, %c0_i32_0 : i32, i32
  }
  func.func @transform_14(%arg0: i32) -> (i32, i32) {
    %c0_i32 = arith.constant 0 : i32
    %c0_i32_0 = arith.constant 0 : i32
    %c0_i32_1 = arith.constant 0 : i32
    return %c0_i32, %c0_i32_0 : i32, i32
  }
  func.func @transform_15(%arg0: i32) -> (i32, i32) {
    %c0_i32 = arith.constant 0 : i32
    %c0_i32_0 = arith.constant 0 : i32
    %c0_i32_1 = arith.constant 0 : i32
    return %c0_i32, %c0_i32_0 : i32, i32
  }
  func.func @transform_16(%arg0: i32) -> (i32, i32) {
    %c0_i32 = arith.constant 0 : i32
    %c0_i32_0 = arith.constant 0 : i32
    %c0_i32_1 = arith.constant 0 : i32
    return %c0_i32, %c0_i32_0 : i32, i32
  }
  func.func @transform_17(%arg0: i32) -> (i32, i32) {
    %c0_i32 = arith.constant 0 : i32
    %c0_i32_0 = arith.constant 0 : i32
    %c0_i32_1 = arith.constant 0 : i32
    return %c0_i32, %c0_i32_0 : i32, i32
  }
  func.func @transform_18(%arg0: i32) -> (i32, i32) {
    %c0_i32 = arith.constant 0 : i32
    %c0_i32_0 = arith.constant 0 : i32
    %c0_i32_1 = arith.constant 0 : i32
    return %c0_i32, %c0_i32_0 : i32, i32
  }
  func.func @transform_19(%arg0: i32) -> (i32, i32) {
    %c0_i32 = arith.constant 0 : i32
    %c0_i32_0 = arith.constant 0 : i32
    %c0_i32_1 = arith.constant 0 : i32
    return %c0_i32, %c0_i32_0 : i32, i32
  }
  func.func @transform_20(%arg0: i32) -> (i32, i32) {
    %c0_i32 = arith.constant 0 : i32
    %c0_i32_0 = arith.constant 0 : i32
    %c0_i32_1 = arith.constant 0 : i32
    return %c0_i32, %c0_i32_0 : i32, i32
  }
  func.func @transform_21(%arg0: i32) -> (i32, i32) {
    %c0_i32 = arith.constant 0 : i32
    %c0_i32_0 = arith.constant 0 : i32
    return %c0_i32, %arg0 : i32, i32
  }
  func.func @transform_22(%arg0: i32) -> (i32, i32) {
    %c0_i32 = arith.constant 0 : i32
    %c0_i32_0 = arith.constant 0 : i32
    return %c0_i32, %arg0 : i32, i32
  }
  func.func @transform_23(%arg0: i32) -> (i32, i32) {
    %c0_i32 = arith.constant 0 : i32
    %c0_i32_0 = arith.constant 0 : i32
    return %c0_i32, %arg0 : i32, i32
  }
}

</mosaic_0001>

<llo_original>
// kernel: custom-call
$region0: #{custom-call}
  %s0 = inlined_call_operand.vmem [shape: f32[12,16,16], index: 0, kind: input, shape index: {}]
  %s1 = inlined_call_operand.vmem [shape: f32[12,16,16], index: 1, kind: input, shape index: {}]
  %s2 = inlined_call_operand.hbm [shape: c64[12,16,16], index: 2, kind: output, shape index: {}]
  %s3 = scalar_lea.hbm %s2, 192
  $region1: #{custom-call} parent=0
    #allocation0 [shape = 's32[1]{0}', space=sflag, size = 0x4, scoped, tag = 'scoped memory for custom-call']
    %4 = vsyncpa [#allocation0], 0
    %s6 = sshll.u32 %s0, 4
    %s7 = int_to_ptr.vmem [resolvable:$true] %s6
    %s8 = sshll.u32 %s2, 4
    %s9 = int_to_ptr.hbm [resolvable:$true] %s8
    %11 = dma.vmem_to_hbm [thread:$0]  %s7, 3072, %s9, [#allocation0]
    %13 = dma.done [#allocation0], 3072
    %14 = vsyncpa [#allocation0], 1
  $region2: #{custom-call} parent=0
    #allocation1 [shape = 's32[1]{0}', space=sflag, size = 0x4, scoped, tag = 'scoped memory for custom-call']
    %15 = vsyncpa [#allocation1], 0
    %s17 = sshll.u32 %s1, 4
    %s18 = int_to_ptr.vmem [resolvable:$true] %s17
    %s19 = sshll.u32 %s3, 4
    %s20 = int_to_ptr.hbm [resolvable:$true] %s19
    %22 = dma.vmem_to_hbm [thread:$0]  %s18, 3072, %s20, [#allocation1]
    %24 = dma.done [#allocation1], 3072
    %25 = vsyncpa [#allocation1], 1

// kernel: forward.1
$region0: #{forward.1}
  #allocation0 [shape = 'u32[]', space=smem, size = 0x4, offset = 0x4, fixed_abs, tag = 'smem constant byte address 0x4 - core index']
  #allocation1 [shape = 'u32[72,128]{1,0:T(1,128)}', space=vmem, size = 0x9000, scoped, tag = 'internal scratch']
  %s0 = inlined_call_operand.vmem [shape: f32[128,1], index: 0, kind: input, shape index: {}]
  %s1 = inlined_call_operand.vmem [shape: f32[128,1], index: 1, kind: input, shape index: {}]
  %s2 = inlined_call_operand.vmem [shape: f32[3,512], index: 2, kind: input, shape index: {}]
  %s3 = inlined_call_operand.vmem [shape: f32[1,16], index: 3, kind: input, shape index: {}]
  %s4 = inlined_call_operand.vmem [shape: f32[1,128], index: 4, kind: input, shape index: {}]
  %s5 = inlined_call_operand.hbm [shape: f32[64,1], index: 5, kind: input, shape index: {}]
  %s6 = inlined_call_operand.hbm [shape: f32[64,1], index: 6, kind: input, shape index: {}]
  %s7 = inlined_call_operand.hbm [shape: f32[64,128], index: 7, kind: input, shape index: {}]
  %s8 = inlined_call_operand.hbm [shape: f32[32,16], index: 8, kind: input, shape index: {}]
  %s9 = inlined_call_operand.hbm [shape: f32[32,16], index: 9, kind: input, shape index: {}]
  %s10 = inlined_call_operand.hbm [shape: f32[128,256], index: 10, kind: input, shape index: {}]
  %s11 = inlined_call_operand.hbm [shape: f32[128,256], index: 11, kind: input, shape index: {}]
  %s12 = inlined_call_operand.hbm [shape: f32[256,128], index: 12, kind: input, shape index: {}]
  %s13 = inlined_call_operand.vmem [shape: f32[16,32], index: 13, kind: input, shape index: {}]
  %s14 = inlined_call_operand.vmem [shape: f32[16,32], index: 14, kind: input, shape index: {}]
  %s15 = inlined_call_operand.vmem [shape: f32[256,128], index: 15, kind: input, shape index: {}]
  %s16 = inlined_call_operand.vmem [shape: f32[256,128], index: 16, kind: input, shape index: {}]
  %s17 = inlined_call_operand.hbm [shape: f32[32,256], index: 17, kind: input, shape index: {}]
  %s18 = inlined_call_operand.vmem [shape: f32[32,256], index: 18, kind: input, shape index: {}]
  %s19 = inlined_call_operand.vmem [shape: f32[32,256], index: 19, kind: input, shape index: {}]
  %s20 = inlined_call_operand.vmem [shape: f32[32,256], index: 20, kind: input, shape index: {}]
  %s21 = inlined_call_operand.vmem [shape: f32[16,256], index: 21, kind: output, shape index: {0}]
  %s22 = inlined_call_operand.vmem [shape: f32[16,256], index: 22, kind: output, shape index: {1}]
  %s23 = inlined_call_operand.vmem [shape: f32[16,256], index: 23, kind: output, shape index: {2}]
  %24 = xla_tuple %s21, %s22, %s23
  %s25 = sld [smem:[#allocation0]]
  $region271: #{forward.1} parent=0
    _
  %s27 = ssub.s32 1, %s25
  %s28 = scalar_select 0, %s27, %s25
  $region1: #{forward.1} parent=0
    #allocation2 [shape = 'u8[32768]{0}', space=vmem, size = 0x8000, scoped, tag = 'input window, operand 5, single buffered']
    #allocation3 [shape = 's32[2]{0}', space=sflag, size = 0x8, scoped, tag = 'scoped memory for forward.1']
    #allocation4 [shape = 'u8[32768]{0}', space=vmem, size = 0x8000, scoped, tag = 'input window, operand 6, single buffered']
    #allocation5 [shape = 's32[1]{0}', space=sflag, size = 0x4, scoped, tag = 'scoped memory for forward.1']
    #allocation6 [shape = 'u8[32768]{0}', space=vmem, size = 0x8000, scoped, tag = 'input window, operand 7, single buffered']
    #allocation7 [shape = 'u8[16384]{0}', space=vmem, size = 0x4000, scoped, tag = 'input window, operand 8, single buffered']
    #allocation8 [shape = 's32[1]{0}', space=sflag, size = 0x4, scoped, tag = 'scoped memory for forward.1']
    #allocation9 [shape = 'u8[16384]{0}', space=vmem, size = 0x4000, scoped, tag = 'input window, operand 9, single buffered']
    #allocation10 [shape = 'u8[131072]{0}', space=vmem, size = 0x20000, scoped, tag = 'input window, operand 10, single buffered']
    #allocation11 [shape = 's32[1]{0}', space=sflag, size = 0x4, scoped, tag = 'scoped memory for forward.1']
    #allocation12 [shape = 'u8[131072]{0}', space=vmem, size = 0x20000, scoped, tag = 'input window, operand 11, single buffered']
    #allocation13 [shape = 'u8[131072]{0}', space=vmem, size = 0x20000, scoped, tag = 'input window, operand 12, single buffered']
    #allocation14 [shape = 's32[1]{0}', space=sflag, size = 0x4, scoped, tag = 'scoped memory for forward.1']
    #allocation15 [shape = 'u8[32768]{0}', space=vmem, size = 0x8000, scoped, tag = 'input window, operand 17, single buffered']
    #allocation16 [shape = 'u8[16384]{0}', space=vmem, size = 0x4000, scoped, tag = 'output window, operand 0']
    #allocation17 [shape = 'u8[16384]{0}', space=vmem, size = 0x4000, scoped, tag = 'output window, operand 1']
    #allocation18 [shape = 'u8[16384]{0}', space=vmem, size = 0x4000, scoped, tag = 'output window, operand 2']
    %29 = vsyncpa [#allocation3], 0
    %30 = vsyncpa [#allocation5], 0
    %31 = vsyncpa [#allocation8], 0
    %32 = vsyncpa [#allocation11], 0
    %33 = vsyncpa [#allocation14], 0
    loop: start=0, step=1, limit=4
    $region2: #{forward.1} parent=1 // loop_pre_header
      _
    $region3: #{forward.1} parent=1 // loop_header
      %s35 = sphi 0, %s39
      %p36 = scmp.ge.s32.totalorder %s35, 4
      %s45 = sphi 0, %s47
      %s48 = sphi 0, %s45
      %s49 = sphi 0, %s48
      %s65 = sphi 0, %s49
      %s71 = sphi 0, %s73
      %s74 = sphi 0, %s71
      %s75 = sphi 0, %s74
      %s91 = sphi 0, %s75
      %s97 = sphi 0, %s99
      %s100 = sphi 0, %s97
      %s101 = sphi 0, %s100
      %s117 = sphi 0, %s101
      %s121 = sphi 0, %s121
      %s123 = sphi 0, %s121
      %s124 = sphi 0, %s123
      %s138 = sphi 0, %s124
      %s142 = sphi 0, %s142
      %s144 = sphi 0, %s142
      %s145 = sphi 0, %s144
      %s159 = sphi 0, %s145
      %s163 = sphi 0, %s163
      %s165 = sphi 0, %s163
      %s166 = sphi 0, %s165
      %s180 = sphi 0, %s166
      %s184 = sphi 0, %s184
      %s186 = sphi 0, %s184
      %s187 = sphi 0, %s186
      %s201 = sphi 0, %s187
      %s205 = sphi 0, %s205
      %s207 = sphi 0, %s205
      %s208 = sphi 0, %s207
      %s222 = sphi 0, %s208
      %s226 = sphi 0, %s226
      %s228 = sphi 0, %s226
      %s229 = sphi 0, %s228
      %s243 = sphi 0, %s229
      %s247 = sphi 0, %s247
      %s249 = sphi 0, %s247
      %s250 = sphi 0, %s249
      %s264 = sphi 0, %s250
      %s268 = sphi 0, %s268
      %s270 = sphi 0, %s268
      %s271 = sphi 0, %s270
      %s285 = sphi 0, %s271
      %s289 = sphi 0, %s289
      %s291 = sphi 0, %s289
      %s292 = sphi 0, %s291
      %s306 = sphi 0, %s292
      %s310 = sphi 0, %s310
      %s312 = sphi 0, %s310
      %s313 = sphi 0, %s312
      %s327 = sphi 0, %s313
      %s331 = sphi 0, %s331
      %s333 = sphi 0, %s331
      %s334 = sphi 0, %s333
      %s348 = sphi 0, %s334
      %s352 = sphi 0, %s352
      %s354 = sphi 0, %s352
      %s355 = sphi 0, %s354
      %s369 = sphi 0, %s355
      %s373 = sphi 0, %s373
      %s375 = sphi 0, %s373
      %s376 = sphi 0, %s375
      %s390 = sphi 0, %s376
      %s394 = sphi 0, %s394
      %s396 = sphi 0, %s394
      %s397 = sphi 0, %s396
      %s411 = sphi 0, %s397
      %s415 = sphi 0, %s415
      %s417 = sphi 0, %s415
      %s418 = sphi 0, %s417
      %s432 = sphi 0, %s418
      %s436 = sphi 0, %s436
      %s438 = sphi 0, %s436
      %s439 = sphi 0, %s438
      %s453 = sphi 0, %s439
      %s457 = sphi 0, %s457
      %s459 = sphi 0, %s457
      %s460 = sphi 0, %s459
      %s474 = sphi 0, %s460
      %s478 = sphi 0, %s478
      %s480 = sphi 0, %s478
      %s481 = sphi 0, %s480
      %s495 = sphi 0, %s481
      %s501 = sphi 0, %s503
      %s504 = sphi 0, %s501
      %s505 = sphi 0, %s504
      %s521 = sphi 0, %s505
      %s527 = sphi 0, %s529
      %s530 = sphi 0, %s527
      %s531 = sphi 0, %s530
      %s547 = sphi 0, %s531
      %s553 = sphi 0, %s555
      %s556 = sphi 0, %s553
      %s557 = sphi 0, %s556
      %s573 = sphi 0, %s557
    $region4: #{forward.1} parent=1 // loop_header_branch
      %38 = sbr.rel (%p36) target = $region8
    $region5: #{forward.1} parent=1 // loop_body
      %s40 = ssub.s32 %s35, 1
      %s41 = ssub.s32 %s35, 2
      %s42 = sadd.s32 %s35, 1
      %s43 = ssub.s32 %s35, %s42
      %p44 = scmp.eq.s32.totalorder %s43, 0
      %s46 = sadd.s32 %s45, 1
      %s47 = scalar_select %p44, %s45, %s46
      %p50 = pneg %p44
      %p51 = scmp.eq.s32.totalorder %s35, 1
      %p52 = por %p50, %p51
      %p53 = scmp.ne.s32.totalorder %s45, %s48
      %p54 = scmp.eq.s32.totalorder %s35, 0
      %p55 = por %p53, %p54
      %p56 = scmp.ne.s32.totalorder %s45, %s48
      %p57 = scmp.eq.s32.totalorder %s40, 1
      %p58 = por %p56, %p57
      %p59 = scmp.ne.s32.totalorder %s48, %s49
      %p60 = scmp.eq.s32.totalorder %s40, 0
      %p61 = por %p59, %p60
      %p62 = scmp.ne.s32.totalorder %s48, %s49
      %p63 = scmp.eq.s32.totalorder %s41, 1
      %p64 = por %p62, %p63
      %p66 = scmp.ne.s32.totalorder %s49, %s65
      %p67 = scmp.eq.s32.totalorder %s41, 0
      %p68 = por %p66, %p67
      %s69 = ssub.s32 %s35, %s42
      %p70 = scmp.eq.s32.totalorder %s69, 0
      %s72 = sadd.s32 %s71, 1
      %s73 = scalar_select %p70, %s71, %s72
      %p76 = pneg %p70
      %p77 = scmp.eq.s32.totalorder %s35, 1
      %p78 = por %p76, %p77
      %p79 = scmp.ne.s32.totalorder %s71, %s74
      %p80 = scmp.eq.s32.totalorder %s35, 0
      %p81 = por %p79, %p80
      %p82 = scmp.ne.s32.totalorder %s71, %s74
      %p83 = scmp.eq.s32.totalorder %s40, 1
      %p84 = por %p82, %p83
      %p85 = scmp.ne.s32.totalorder %s74, %s75
      %p86 = scmp.eq.s32.totalorder %s40, 0
      %p87 = por %p85, %p86
      %p88 = scmp.ne.s32.totalorder %s74, %s75
      %p89 = scmp.eq.s32.totalorder %s41, 1
      %p90 = por %p88, %p89
      %p92 = scmp.ne.s32.totalorder %s75, %s91
      %p93 = scmp.eq.s32.totalorder %s41, 0
      %p94 = por %p92, %p93
      %s95 = ssub.s32 %s35, %s42
      %p96 = scmp.eq.s32.totalorder %s95, 0
      %s98 = sadd.s32 %s97, 1
      %s99 = scalar_select %p96, %s97, %s98
      %p102 = pneg %p96
      %p103 = scmp.eq.s32.totalorder %s35, 1
      %p104 = por %p102, %p103
      %p105 = scmp.ne.s32.totalorder %s97, %s100
      %p106 = scmp.eq.s32.totalorder %s35, 0
      %p107 = por %p105, %p106
      %p108 = scmp.ne.s32.totalorder %s97, %s100
      %p109 = scmp.eq.s32.totalorder %s40, 1
      %p110 = por %p108, %p109
      %p111 = scmp.ne.s32.totalorder %s100, %s101
      %p112 = scmp.eq.s32.totalorder %s40, 0
      %p113 = por %p111, %p112
      %p114 = scmp.ne.s32.totalorder %s100, %s101
      %p115 = scmp.eq.s32.totalorder %s41, 1
      %p116 = por %p114, %p115
      %p118 = scmp.ne.s32.totalorder %s101, %s117
      %p119 = scmp.eq.s32.totalorder %s41, 0
      %p120 = por %p118, %p119
      %s122 = sadd.s32 %s121, 1
      %p125 = scmp.eq.s32.totalorder %s35, 1
      %p126 = scmp.ne.s32.totalorder %s121, %s123
      %p127 = scmp.eq.s32.totalorder %s35, 0
      %p128 = por %p126, %p127
      %p129 = scmp.ne.s32.totalorder %s121, %s123
      %p130 = scmp.eq.s32.totalorder %s40, 1
      %p131 = por %p129, %p130
      %p132 = scmp.ne.s32.totalorder %s123, %s124
      %p133 = scmp.eq.s32.totalorder %s40, 0
      %p134 = por %p132, %p133
      %p135 = scmp.ne.s32.totalorder %s123, %s124
      %p136 = scmp.eq.s32.totalorder %s41, 1
      %p137 = por %p135, %p136
      %p139 = scmp.ne.s32.totalorder %s124, %s138
      %p140 = scmp.eq.s32.totalorder %s41, 0
      %p141 = por %p139, %p140
      %s143 = sadd.s32 %s142, 1
      %p146 = scmp.eq.s32.totalorder %s35, 1
      %p147 = scmp.ne.s32.totalorder %s142, %s144
      %p148 = scmp.eq.s32.totalorder %s35, 0
      %p149 = por %p147, %p148
      %p150 = scmp.ne.s32.totalorder %s142, %s144
      %p151 = scmp.eq.s32.totalorder %s40, 1
      %p152 = por %p150, %p151
      %p153 = scmp.ne.s32.totalorder %s144, %s145
      %p154 = scmp.eq.s32.totalorder %s40, 0
      %p155 = por %p153, %p154
      %p156 = scmp.ne.s32.totalorder %s144, %s145
      %p157 = scmp.eq.s32.totalorder %s41, 1
      %p158 = por %p156, %p157
      %p160 = scmp.ne.s32.totalorder %s145, %s159
      %p161 = scmp.eq.s32.totalorder %s41, 0
      %p162 = por %p160, %p161
      %s164 = sadd.s32 %s163, 1
      %p167 = scmp.eq.s32.totalorder %s35, 1
      %p168 = scmp.ne.s32.totalorder %s163, %s165
      %p169 = scmp.eq.s32.totalorder %s35, 0
      %p170 = por %p168, %p169
      %p171 = scmp.ne.s32.totalorder %s163, %s165
      %p172 = scmp.eq.s32.totalorder %s40, 1
      %p173 = por %p171, %p172
      %p174 = scmp.ne.s32.totalorder %s165, %s166
      %p175 = scmp.eq.s32.totalorder %s40, 0
      %p176 = por %p174, %p175
      %p177 = scmp.ne.s32.totalorder %s165, %s166
      %p178 = scmp.eq.s32.totalorder %s41, 1
      %p179 = por %p177, %p178
      %p181 = scmp.ne.s32.totalorder %s166, %s180
      %p182 = scmp.eq.s32.totalorder %s41, 0
      %p183 = por %p181, %p182
      %s185 = sadd.s32 %s184, 1
      %p188 = scmp.eq.s32.totalorder %s35, 1
      %p189 = scmp.ne.s32.totalorder %s184, %s186
      %p190 = scmp.eq.s32.totalorder %s35, 0
      %p191 = por %p189, %p190
      %p192 = scmp.ne.s32.totalorder %s184, %s186
      %p193 = scmp.eq.s32.totalorder %s40, 1
      %p194 = por %p192, %p193
      %p195 = scmp.ne.s32.totalorder %s186, %s187
      %p196 = scmp.eq.s32.totalorder %s40, 0
      %p197 = por %p195, %p196
      %p198 = scmp.ne.s32.totalorder %s186, %s187
      %p199 = scmp.eq.s32.totalorder %s41, 1
      %p200 = por %p198, %p199
      %p202 = scmp.ne.s32.totalorder %s187, %s201
      %p203 = scmp.eq.s32.totalorder %s41, 0
      %p204 = por %p202, %p203
      %s206 = sadd.s32 %s205, 1
      %p209 = scmp.eq.s32.totalorder %s35, 1
      %p210 = scmp.ne.s32.totalorder %s205, %s207
      %p211 = scmp.eq.s32.totalorder %s35, 0
      %p212 = por %p210, %p211
      %p213 = scmp.ne.s32.totalorder %s205, %s207
      %p214 = scmp.eq.s32.totalorder %s40, 1
      %p215 = por %p213, %p214
      %p216 = scmp.ne.s32.totalorder %s207, %s208
      %p217 = scmp.eq.s32.totalorder %s40, 0
      %p218 = por %p216, %p217
      %p219 = scmp.ne.s32.totalorder %s207, %s208
      %p220 = scmp.eq.s32.totalorder %s41, 1
      %p221 = por %p219, %p220
      %p223 = scmp.ne.s32.totalorder %s208, %s222
      %p224 = scmp.eq.s32.totalorder %s41, 0
      %p225 = por %p223, %p224
      %s227 = sadd.s32 %s226, 1
      %p230 = scmp.eq.s32.totalorder %s35, 1
      %p231 = scmp.ne.s32.totalorder %s226, %s228
      %p232 = scmp.eq.s32.totalorder %s35, 0
      %p233 = por %p231, %p232
      %p234 = scmp.ne.s32.totalorder %s226, %s228
      %p235 = scmp.eq.s32.totalorder %s40, 1
      %p236 = por %p234, %p235
      %p237 = scmp.ne.s32.totalorder %s228, %s229
      %p238 = scmp.eq.s32.totalorder %s40, 0
      %p239 = por %p237, %p238
      %p240 = scmp.ne.s32.totalorder %s228, %s229
      %p241 = scmp.eq.s32.totalorder %s41, 1
      %p242 = por %p240, %p241
      %p244 = scmp.ne.s32.totalorder %s229, %s243
      %p245 = scmp.eq.s32.totalorder %s41, 0
      %p246 = por %p244, %p245
      %s248 = sadd.s32 %s247, 1
      %p251 = scmp.eq.s32.totalorder %s35, 1
      %p252 = scmp.ne.s32.totalorder %s247, %s249
      %p253 = scmp.eq.s32.totalorder %s35, 0
      %p254 = por %p252, %p253
      %p255 = scmp.ne.s32.totalorder %s247, %s249
      %p256 = scmp.eq.s32.totalorder %s40, 1
      %p257 = por %p255, %p256
      %p258 = scmp.ne.s32.totalorder %s249, %s250
      %p259 = scmp.eq.s32.totalorder %s40, 0
      %p260 = por %p258, %p259
      %p261 = scmp.ne.s32.totalorder %s249, %s250
      %p262 = scmp.eq.s32.totalorder %s41, 1
      %p263 = por %p261, %p262
      %p265 = scmp.ne.s32.totalorder %s250, %s264
      %p266 = scmp.eq.s32.totalorder %s41, 0
      %p267 = por %p265, %p266
      %s269 = sadd.s32 %s268, 1
      %p272 = scmp.eq.s32.totalorder %s35, 1
      %p273 = scmp.ne.s32.totalorder %s268, %s270
      %p274 = scmp.eq.s32.totalorder %s35, 0
      %p275 = por %p273, %p274
      %p276 = scmp.ne.s32.totalorder %s268, %s270
      %p277 = scmp.eq.s32.totalorder %s40, 1
      %p278 = por %p276, %p277
      %p279 = scmp.ne.s32.totalorder %s270, %s271
      %p280 = scmp.eq.s32.totalorder %s40, 0
      %p281 = por %p279, %p280
      %p282 = scmp.ne.s32.totalorder %s270, %s271
      %p283 = scmp.eq.s32.totalorder %s41, 1
      %p284 = por %p282, %p283
      %p286 = scmp.ne.s32.totalorder %s271, %s285
      %p287 = scmp.eq.s32.totalorder %s41, 0
      %p288 = por %p286, %p287
      %s290 = sadd.s32 %s289, 1
      %p293 = scmp.eq.s32.totalorder %s35, 1
      %p294 = scmp.ne.s32.totalorder %s289, %s291
      %p295 = scmp.eq.s32.totalorder %s35, 0
      %p296 = por %p294, %p295
      %p297 = scmp.ne.s32.totalorder %s289, %s291
      %p298 = scmp.eq.s32.totalorder %s40, 1
      %p299 = por %p297, %p298
      %p300 = scmp.ne.s32.totalorder %s291, %s292
      %p301 = scmp.eq.s32.totalorder %s40, 0
      %p302 = por %p300, %p301
      %p303 = scmp.ne.s32.totalorder %s291, %s292
      %p304 = scmp.eq.s32.totalorder %s41, 1
      %p305 = por %p303, %p304
      %p307 = scmp.ne.s32.totalorder %s292, %s306
      %p308 = scmp.eq.s32.totalorder %s41, 0
      %p309 = por %p307, %p308
      %s311 = sadd.s32 %s310, 1
      %p314 = scmp.eq.s32.totalorder %s35, 1
      %p315 = scmp.ne.s32.totalorder %s310, %s312
      %p316 = scmp.eq.s32.totalorder %s35, 0
      %p317 = por %p315, %p316
      %p318 = scmp.ne.s32.totalorder %s310, %s312
      %p319 = scmp.eq.s32.totalorder %s40, 1
      %p320 = por %p318, %p319
      %p321 = scmp.ne.s32.totalorder %s312, %s313
      %p322 = scmp.eq.s32.totalorder %s40, 0
      %p323 = por %p321, %p322
      %p324 = scmp.ne.s32.totalorder %s312, %s313
      %p325 = scmp.eq.s32.totalorder %s41, 1
      %p326 = por %p324, %p325
      %p328 = scmp.ne.s32.totalorder %s313, %s327
      %p329 = scmp.eq.s32.totalorder %s41, 0
      %p330 = por %p328, %p329
      %s332 = sadd.s32 %s331, 1
      %p335 = scmp.eq.s32.totalorder %s35, 1
      %p336 = scmp.ne.s32.totalorder %s331, %s333
      %p337 = scmp.eq.s32.totalorder %s35, 0
      %p338 = por %p336, %p337
      %p339 = scmp.ne.s32.totalorder %s331, %s333
      %p340 = scmp.eq.s32.totalorder %s40, 1
      %p341 = por %p339, %p340
      %p342 = scmp.ne.s32.totalorder %s333, %s334
      %p343 = scmp.eq.s32.totalorder %s40, 0
      %p344 = por %p342, %p343
      %p345 = scmp.ne.s32.totalorder %s333, %s334
      %p346 = scmp.eq.s32.totalorder %s41, 1
      %p347 = por %p345, %p346
      %p349 = scmp.ne.s32.totalorder %s334, %s348
      %p350 = scmp.eq.s32.totalorder %s41, 0
      %p351 = por %p349, %p350
      %s353 = sadd.s32 %s352, 1
      %p356 = scmp.eq.s32.totalorder %s35, 1
      %p357 = scmp.ne.s32.totalorder %s352, %s354
      %p358 = scmp.eq.s32.totalorder %s35, 0
      %p359 = por %p357, %p358
      %p360 = scmp.ne.s32.totalorder %s352, %s354
      %p361 = scmp.eq.s32.totalorder %s40, 1
      %p362 = por %p360, %p361
      %p363 = scmp.ne.s32.totalorder %s354, %s355
      %p364 = scmp.eq.s32.totalorder %s40, 0
      %p365 = por %p363, %p364
      %p366 = scmp.ne.s32.totalorder %s354, %s355
      %p367 = scmp.eq.s32.totalorder %s41, 1
      %p368 = por %p366, %p367
      %p370 = scmp.ne.s32.totalorder %s355, %s369
      %p371 = scmp.eq.s32.totalorder %s41, 0
      %p372 = por %p370, %p371
      %s374 = sadd.s32 %s373, 1
      %p377 = scmp.eq.s32.totalorder %s35, 1
      %p378 = scmp.ne.s32.totalorder %s373, %s375
      %p379 = scmp.eq.s32.totalorder %s35, 0
      %p380 = por %p378, %p379
      %p381 = scmp.ne.s32.totalorder %s373, %s375
      %p382 = scmp.eq.s32.totalorder %s40, 1
      %p383 = por %p381, %p382
      %p384 = scmp.ne.s32.totalorder %s375, %s376
      %p385 = scmp.eq.s32.totalorder %s40, 0
      %p386 = por %p384, %p385
      %p387 = scmp.ne.s32.totalorder %s375, %s376
      %p388 = scmp.eq.s32.totalorder %s41, 1
      %p389 = por %p387, %p388
      %p391 = scmp.ne.s32.totalorder %s376, %s390
      %p392 = scmp.eq.s32.totalorder %s41, 0
      %p393 = por %p391, %p392
      %s395 = sadd.s32 %s394, 1
      %p398 = scmp.eq.s32.totalorder %s35, 1
      %p399 = scmp.ne.s32.totalorder %s394, %s396
      %p400 = scmp.eq.s32.totalorder %s35, 0
      %p401 = por %p399, %p400
      %p402 = scmp.ne.s32.totalorder %s394, %s396
      %p403 = scmp.eq.s32.totalorder %s40, 1
      %p404 = por %p402, %p403
      %p405 = scmp.ne.s32.totalorder %s396, %s397
      %p406 = scmp.eq.s32.totalorder %s40, 0
      %p407 = por %p405, %p406
      %p408 = scmp.ne.s32.totalorder %s396, %s397
      %p409 = scmp.eq.s32.totalorder %s41, 1
      %p410 = por %p408, %p409
      %p412 = scmp.ne.s32.totalorder %s397, %s411
      %p413 = scmp.eq.s32.totalorder %s41, 0
      %p414 = por %p412, %p413
      %s416 = sadd.s32 %s415, 1
      %p419 = scmp.eq.s32.totalorder %s35, 1
      %p420 = scmp.ne.s32.totalorder %s415, %s417
      %p421 = scmp.eq.s32.totalorder %s35, 0
      %p422 = por %p420, %p421
      %p423 = scmp.ne.s32.totalorder %s415, %s417
      %p424 = scmp.eq.s32.totalorder %s40, 1
      %p425 = por %p423, %p424
      %p426 = scmp.ne.s32.totalorder %s417, %s418
      %p427 = scmp.eq.s32.totalorder %s40, 0
      %p428 = por %p426, %p427
      %p429 = scmp.ne.s32.totalorder %s417, %s418
      %p430 = scmp.eq.s32.totalorder %s41, 1
      %p431 = por %p429, %p430
      %p433 = scmp.ne.s32.totalorder %s418, %s432
      %p434 = scmp.eq.s32.totalorder %s41, 0
      %p435 = por %p433, %p434
      %s437 = sadd.s32 %s436, 1
      %p440 = scmp.eq.s32.totalorder %s35, 1
      %p441 = scmp.ne.s32.totalorder %s436, %s438
      %p442 = scmp.eq.s32.totalorder %s35, 0
      %p443 = por %p441, %p442
      %p444 = scmp.ne.s32.totalorder %s436, %s438
      %p445 = scmp.eq.s32.totalorder %s40, 1
      %p446 = por %p444, %p445
      %p447 = scmp.ne.s32.totalorder %s438, %s439
      %p448 = scmp.eq.s32.totalorder %s40, 0
      %p449 = por %p447, %p448
      %p450 = scmp.ne.s32.totalorder %s438, %s439
      %p451 = scmp.eq.s32.totalorder %s41, 1
      %p452 = por %p450, %p451
      %p454 = scmp.ne.s32.totalorder %s439, %s453
      %p455 = scmp.eq.s32.totalorder %s41, 0
      %p456 = por %p454, %p455
      %s458 = sadd.s32 %s457, 1
      %p461 = scmp.eq.s32.totalorder %s35, 1
      %p462 = scmp.ne.s32.totalorder %s457, %s459
      %p463 = scmp.eq.s32.totalorder %s35, 0
      %p464 = por %p462, %p463
      %p465 = scmp.ne.s32.totalorder %s457, %s459
      %p466 = scmp.eq.s32.totalorder %s40, 1
      %p467 = por %p465, %p466
      %p468 = scmp.ne.s32.totalorder %s459, %s460
      %p469 = scmp.eq.s32.totalorder %s40, 0
      %p470 = por %p468, %p469
      %p471 = scmp.ne.s32.totalorder %s459, %s460
      %p472 = scmp.eq.s32.totalorder %s41, 1
      %p473 = por %p471, %p472
      %p475 = scmp.ne.s32.totalorder %s460, %s474
      %p476 = scmp.eq.s32.totalorder %s41, 0
      %p477 = por %p475, %p476
      %s479 = sadd.s32 %s478, 1
      %p482 = scmp.eq.s32.totalorder %s35, 1
      %p483 = scmp.ne.s32.totalorder %s478, %s480
      %p484 = scmp.eq.s32.totalorder %s35, 0
      %p485 = por %p483, %p484
      %p486 = scmp.ne.s32.totalorder %s478, %s480
      %p487 = scmp.eq.s32.totalorder %s40, 1
      %p488 = por %p486, %p487
      %p489 = scmp.ne.s32.totalorder %s480, %s481
      %p490 = scmp.eq.s32.totalorder %s40, 0
      %p491 = por %p489, %p490
      %p492 = scmp.ne.s32.totalorder %s480, %s481
      %p493 = scmp.eq.s32.totalorder %s41, 1
      %p494 = por %p492, %p493
      %p496 = scmp.ne.s32.totalorder %s481, %s495
      %p497 = scmp.eq.s32.totalorder %s41, 0
      %p498 = por %p496, %p497
      %s499 = ssub.s32 %s35, %s42
      %p500 = scmp.eq.s32.totalorder %s499, 0
      %s502 = sadd.s32 %s501, 1
      %s503 = scalar_select %p500, %s501, %s502
      %p506 = pneg %p500
      %p507 = scmp.eq.s32.totalorder %s35, 1
      %p508 = por %p506, %p507
      %p509 = scmp.ne.s32.totalorder %s501, %s504
      %p510 = scmp.eq.s32.totalorder %s35, 0
      %p511 = por %p509, %p510
      %p512 = scmp.ne.s32.totalorder %s501, %s504
      %p513 = scmp.eq.s32.totalorder %s40, 1
      %p514 = por %p512, %p513
      %p515 = scmp.ne.s32.totalorder %s504, %s505
      %p516 = scmp.eq.s32.totalorder %s40, 0
      %p517 = por %p515, %p516
      %p518 = scmp.ne.s32.totalorder %s504, %s505
      %p519 = scmp.eq.s32.totalorder %s41, 1
      %p520 = por %p518, %p519
      %p522 = scmp.ne.s32.totalorder %s505, %s521
      %p523 = scmp.eq.s32.totalorder %s41, 0
      %p524 = por %p522, %p523
      %s525 = ssub.s32 %s35, %s42
      %p526 = scmp.eq.s32.totalorder %s525, 0
      %s528 = sadd.s32 %s527, 1
      %s529 = scalar_select %p526, %s527, %s528
      %p532 = pneg %p526
      %p533 = scmp.eq.s32.totalorder %s35, 1
      %p534 = por %p532, %p533
      %p535 = scmp.ne.s32.totalorder %s527, %s530
      %p536 = scmp.eq.s32.totalorder %s35, 0
      %p537 = por %p535, %p536
      %p538 = scmp.ne.s32.totalorder %s527, %s530
      %p539 = scmp.eq.s32.totalorder %s40, 1
      %p540 = por %p538, %p539
      %p541 = scmp.ne.s32.totalorder %s530, %s531
      %p542 = scmp.eq.s32.totalorder %s40, 0
      %p543 = por %p541, %p542
      %p544 = scmp.ne.s32.totalorder %s530, %s531
      %p545 = scmp.eq.s32.totalorder %s41, 1
      %p546 = por %p544, %p545
      %p548 = scmp.ne.s32.totalorder %s531, %s547
      %p549 = scmp.eq.s32.totalorder %s41, 0
      %p550 = por %p548, %p549
      %s551 = ssub.s32 %s35, %s42
      %p552 = scmp.eq.s32.totalorder %s551, 0
      %s554 = sadd.s32 %s553, 1
      %s555 = scalar_select %p552, %s553, %s554
      %p558 = pneg %p552
      %p559 = scmp.eq.s32.totalorder %s35, 1
      %p560 = por %p558, %p559
      %p561 = scmp.ne.s32.totalorder %s553, %s556
      %p562 = scmp.eq.s32.totalorder %s35, 0
      %p563 = por %p561, %p562
      %p564 = scmp.ne.s32.totalorder %s553, %s556
      %p565 = scmp.eq.s32.totalorder %s40, 1
      %p566 = por %p564, %p565
      %p567 = scmp.ne.s32.totalorder %s556, %s557
      %p568 = scmp.eq.s32.totalorder %s40, 0
      %p569 = por %p567, %p568
      %p570 = scmp.ne.s32.totalorder %s556, %s557
      %p571 = scmp.eq.s32.totalorder %s41, 1
      %p572 = por %p570, %p571
      %p574 = scmp.ne.s32.totalorder %s557, %s573
      %p575 = scmp.eq.s32.totalorder %s41, 0
      %p576 = por %p574, %p575
      %p577 = scmp.le.s32.totalorder 1, %s35
      %p578 = scmp.lt.s32.totalorder %s35, 3
      %p579 = pnand %p577, %p578
      %p580 = pneg %p579
      // Predicated region
      $region9: #{forward.1} parent=5 // pred_check
        _
      $region10: #{forward.1} parent=5 // pred_check_branch
        %582 = sbr.rel (%p579) target = $region12
      $region11: #{forward.1} parent=5 // pred_region
        %s583 = ssub.s32 %s35, 1
        // Predicated region
        $region13: #{forward.1} parent=11 // pred_check
          %p584 = pneg %p134
        $region14: #{forward.1} parent=11 // pred_check_branch
          %586 = sbr.rel (%p584) target = $region16
        $region15: #{forward.1} parent=11 // pred_region
          _
        $region16: #{forward.1} parent=11 // pred_fallthru
          _
        // Predicated region
        $region17: #{forward.1} parent=11 // pred_check
          %p587 = pneg %p155
        $region18: #{forward.1} parent=11 // pred_check_branch
          %589 = sbr.rel (%p587) target = $region20
        $region19: #{forward.1} parent=11 // pred_region
          _
        $region20: #{forward.1} parent=11 // pred_fallthru
          _
        // Predicated region
        $region21: #{forward.1} parent=11 // pred_check
          %p590 = pneg %p176
        $region22: #{forward.1} parent=11 // pred_check_branch
          %592 = sbr.rel (%p590) target = $region24
        $region23: #{forward.1} parent=11 // pred_region
          %594 = vsyncadd [#allocation3], 0
          %s595 = sshll.u32 %s5, 4
          %s596 = int_to_ptr.hbm [resolvable:$true] %s595
          %s597 = sshll.u32 [#allocation2], 4
          %s598 = int_to_ptr.vmem [resolvable:$true] %s597
          %603 = dma.hbm_to_vmem [thread:$0]  %s596, 1024, %s598, [#allocation3], 128, 128, 8
        $region24: #{forward.1} parent=11 // pred_fallthru
          _
        // Predicated region
        $region25: #{forward.1} parent=11 // pred_check
          %p604 = pneg %p197
        $region26: #{forward.1} parent=11 // pred_check_branch
          %606 = sbr.rel (%p604) target = $region28
        $region27: #{forward.1} parent=11 // pred_region
          %608 = vsyncadd [#allocation5], 0
          %s609 = sshll.u32 %s6, 4
          %s610 = int_to_ptr.hbm [resolvable:$true] %s609
          %s611 = sshll.u32 [#allocation4], 4
          %s612 = int_to_ptr.vmem [resolvable:$true] %s611
          %617 = dma.hbm_to_vmem [thread:$0]  %s610, 1024, %s612, [#allocation5], 128, 128, 8
        $region28: #{forward.1} parent=11 // pred_fallthru
          _
        // Predicated region
        $region29: #{forward.1} parent=11 // pred_check
          %p618 = pneg %p218
        $region30: #{forward.1} parent=11 // pred_check_branch
          %620 = sbr.rel (%p618) target = $region32
        $region31: #{forward.1} parent=11 // pred_region
          %622 = vsyncadd [#allocation5], 0
          %s623 = sshll.u32 %s7, 4
          %s624 = int_to_ptr.hbm [resolvable:$true] %s623
          %s625 = sshll.u32 [#allocation6], 4
          %s626 = int_to_ptr.vmem [resolvable:$true] %s625
          %631 = dma.hbm_to_vmem [thread:$0]  %s624, 1024, %s626, [#allocation5], 128, 128, 8
        $region32: #{forward.1} parent=11 // pred_fallthru
          _
        // Predicated region
        $region33: #{forward.1} parent=11 // pred_check
          %p632 = pneg %p239
        $region34: #{forward.1} parent=11 // pred_check_branch
          %634 = sbr.rel (%p632) target = $region36
        $region35: #{forward.1} parent=11 // pred_region
          %636 = vsyncadd [#allocation8], 0
          %s637 = sshll.u32 %s8, 4
          %s638 = int_to_ptr.hbm [resolvable:$true] %s637
          %s639 = sshll.u32 [#allocation7], 4
          %s640 = int_to_ptr.vmem [resolvable:$true] %s639
          %645 = dma.hbm_to_vmem [thread:$0]  %s638, 512, %s640, [#allocation8], 128, 128, 8
        $region36: #{forward.1} parent=11 // pred_fallthru
          _
        // Predicated region
        $region37: #{forward.1} parent=11 // pred_check
          %p646 = pneg %p260
        $region38: #{forward.1} parent=11 // pred_check_branch
          %648 = sbr.rel (%p646) target = $region40
        $region39: #{forward.1} parent=11 // pred_region
          %650 = vsyncadd [#allocation8], 0
          %s651 = sshll.u32 %s9, 4
          %s652 = int_to_ptr.hbm [resolvable:$true] %s651
          %s653 = sshll.u32 [#allocation9], 4
          %s654 = int_to_ptr.vmem [resolvable:$true] %s653
          %659 = dma.hbm_to_vmem [thread:$0]  %s652, 512, %s654, [#allocation8], 128, 128, 8
        $region40: #{forward.1} parent=11 // pred_fallthru
          _
        // Predicated region
        $region41: #{forward.1} parent=11 // pred_check
          %p660 = pneg %p281
        $region42: #{forward.1} parent=11 // pred_check_branch
          %662 = sbr.rel (%p660) target = $region44
        $region43: #{forward.1} parent=11 // pred_region
          %664 = vsyncadd [#allocation11], 0
          %s665 = sshll.u32 %s10, 4
          %s666 = int_to_ptr.hbm [resolvable:$true] %s665
          %s667 = sshll.u32 [#allocation10], 4
          %s668 = int_to_ptr.vmem [resolvable:$true] %s667
          %673 = dma.hbm_to_vmem [thread:$0]  %s666, 4096, %s668, [#allocation11], 256, 256, 16
        $region44: #{forward.1} parent=11 // pred_fallthru
          _
        // Predicated region
        $region45: #{forward.1} parent=11 // pred_check
          %p674 = pneg %p302
        $region46: #{forward.1} parent=11 // pred_check_branch
          %676 = sbr.rel (%p674) target = $region48
        $region47: #{forward.1} parent=11 // pred_region
          %678 = vsyncadd [#allocation11], 0
          %s679 = sshll.u32 %s11, 4
          %s680 = int_to_ptr.hbm [resolvable:$true] %s679
          %s681 = sshll.u32 [#allocation12], 4
          %s682 = int_to_ptr.vmem [resolvable:$true] %s681
          %687 = dma.hbm_to_vmem [thread:$0]  %s680, 4096, %s682, [#allocation11], 256, 256, 16
        $region48: #{forward.1} parent=11 // pred_fallthru
          _
        // Predicated region
        $region49: #{forward.1} parent=11 // pred_check
          %p688 = pneg %p323
        $region50: #{forward.1} parent=11 // pred_check_branch
          %690 = sbr.rel (%p688) target = $region52
        $region51: #{forward.1} parent=11 // pred_region
          %692 = vsyncadd [#allocation14], 0
          %s693 = sshll.u32 %s12, 4
          %s694 = int_to_ptr.hbm [resolvable:$true] %s693
          %s695 = sshll.u32 [#allocation13], 4
          %s696 = int_to_ptr.vmem [resolvable:$true] %s695
          %701 = dma.hbm_to_vmem [thread:$0]  %s694, 4096, %s696, [#allocation14], 128, 128, 8
        $region52: #{forward.1} parent=11 // pred_fallthru
          _
        // Predicated region
        $region53: #{forward.1} parent=11 // pred_check
          %p702 = pneg %p344
        $region54: #{forward.1} parent=11 // pred_check_branch
          %704 = sbr.rel (%p702) target = $region56
        $region55: #{forward.1} parent=11 // pred_region
          _
        $region56: #{forward.1} parent=11 // pred_fallthru
          _
        // Predicated region
        $region57: #{forward.1} parent=11 // pred_check
          %p705 = pneg %p365
        $region58: #{forward.1} parent=11 // pred_check_branch
          %707 = sbr.rel (%p705) target = $region60
        $region59: #{forward.1} parent=11 // pred_region
          _
        $region60: #{forward.1} parent=11 // pred_fallthru
          _
        // Predicated region
        $region61: #{forward.1} parent=11 // pred_check
          %p708 = pneg %p386
        $region62: #{forward.1} parent=11 // pred_check_branch
          %710 = sbr.rel (%p708) target = $region64
        $region63: #{forward.1} parent=11 // pred_region
          _
        $region64: #{forward.1} parent=11 // pred_fallthru
          _
        // Predicated region
        $region65: #{forward.1} parent=11 // pred_check
          %p711 = pneg %p407
        $region66: #{forward.1} parent=11 // pred_check_branch
          %713 = sbr.rel (%p711) target = $region68
        $region67: #{forward.1} parent=11 // pred_region
          _
        $region68: #{forward.1} parent=11 // pred_fallthru
          _
        // Predicated region
        $region69: #{forward.1} parent=11 // pred_check
          %p714 = pneg %p428
        $region70: #{forward.1} parent=11 // pred_check_branch
          %716 = sbr.rel (%p714) target = $region72
        $region71: #{forward.1} parent=11 // pred_region
          %718 = vsyncadd [#allocation14], 0
          %s719 = sshll.u32 %s17, 4
          %s720 = int_to_ptr.hbm [resolvable:$true] %s719
          %s721 = sshll.u32 [#allocation15], 4
          %s722 = int_to_ptr.vmem [resolvable:$true] %s721
          %727 = dma.hbm_to_vmem [thread:$0]  %s720, 1024, %s722, [#allocation14], 256, 256, 16
        $region72: #{forward.1} parent=11 // pred_fallthru
          _
        // Predicated region
        $region73: #{forward.1} parent=11 // pred_check
          %p728 = pneg %p449
        $region74: #{forward.1} parent=11 // pred_check_branch
          %730 = sbr.rel (%p728) target = $region76
        $region75: #{forward.1} parent=11 // pred_region
          _
        $region76: #{forward.1} parent=11 // pred_fallthru
          _
        // Predicated region
        $region77: #{forward.1} parent=11 // pred_check
          %p731 = pneg %p470
        $region78: #{forward.1} parent=11 // pred_check_branch
          %733 = sbr.rel (%p731) target = $region80
        $region79: #{forward.1} parent=11 // pred_region
          _
        $region80: #{forward.1} parent=11 // pred_fallthru
          _
        // Predicated region
        $region81: #{forward.1} parent=11 // pred_check
          %p734 = pneg %p491
        $region82: #{forward.1} parent=11 // pred_check_branch
          %736 = sbr.rel (%p734) target = $region84
        $region83: #{forward.1} parent=11 // pred_region
          _
        $region84: #{forward.1} parent=11 // pred_fallthru
          _
      $region12: #{forward.1} parent=5 // pred_fallthru
        _
      %p737 = scmp.lt.s32.totalorder %s35, 2
      // Predicated region
      $region85: #{forward.1} parent=5 // pred_check
        %p738 = pneg %p737
      $region86: #{forward.1} parent=5 // pred_check_branch
        %740 = sbr.rel (%p738) target = $region88
      $region87: #{forward.1} parent=5 // pred_region
        // Predicated region
        $region89: #{forward.1} parent=87 // pred_check
          %p741 = pneg %p55
        $region90: #{forward.1} parent=87 // pred_check_branch
          %743 = sbr.rel (%p741) target = $region92
        $region91: #{forward.1} parent=87 // pred_region
          %s744 = smul.u32 8, %s35
          %p745 = scmp.lt.s32.totalorder %s744, 15
          %s746 = scalar_select %p745, %s744, 15
          %s747 = smul.addr %s746, 8
          %s748 = scalar_lea.vmem %s0, %s747
          %s749 = smul.u32 8, %s35
        $region92: #{forward.1} parent=87 // pred_fallthru
          _
        // Predicated region
        $region93: #{forward.1} parent=87 // pred_check
          %p750 = pneg %p81
        $region94: #{forward.1} parent=87 // pred_check_branch
          %752 = sbr.rel (%p750) target = $region96
        $region95: #{forward.1} parent=87 // pred_region
          %s753 = smul.u32 8, %s35
          %p754 = scmp.lt.s32.totalorder %s753, 15
          %s755 = scalar_select %p754, %s753, 15
          %s756 = smul.addr %s755, 8
          %s757 = scalar_lea.vmem %s1, %s756
          %s758 = smul.u32 8, %s35
        $region96: #{forward.1} parent=87 // pred_fallthru
          _
        // Predicated region
        $region97: #{forward.1} parent=87 // pred_check
          %p759 = pneg %p107
        $region98: #{forward.1} parent=87 // pred_check_branch
          %761 = sbr.rel (%p759) target = $region100
        $region99: #{forward.1} parent=87 // pred_region
          %s762 = smul.u32 2, %s35
          %p763 = scmp.lt.s32.totalorder %s762, 3
          %s764 = scalar_select %p763, %s762, 3
          %s765 = smul.addr %s764, 4
          %s766 = scalar_lea.vmem %s2, %s765
          %s767 = smul.u32 2, %s35
        $region100: #{forward.1} parent=87 // pred_fallthru
          _
      $region88: #{forward.1} parent=5 // pred_fallthru
        _
      %p768 = scmp.le.s32.totalorder 1, %s35
      %p769 = scmp.lt.s32.totalorder %s35, 3
      %p770 = pnand %p768, %p769
      %p771 = pneg %p770
      // Predicated region
      $region101: #{forward.1} parent=5 // pred_check
        _
      $region102: #{forward.1} parent=5 // pred_check_branch
        %773 = sbr.rel (%p770) target = $region104
      $region103: #{forward.1} parent=5 // pred_region
        %s774 = ssub.s32 %s35, 1
        // Predicated region
        $region105: #{forward.1} parent=103 // pred_check
          %p775 = pneg %p176
        $region106: #{forward.1} parent=103 // pred_check_branch
          %777 = sbr.rel (%p775) target = $region108
        $region107: #{forward.1} parent=103 // pred_region
          %779 = dma.done [#allocation3], 1024
        $region108: #{forward.1} parent=103 // pred_fallthru
          _
        // Predicated region
        $region109: #{forward.1} parent=103 // pred_check
          %p780 = pneg %p197
        $region110: #{forward.1} parent=103 // pred_check_branch
          %782 = sbr.rel (%p780) target = $region112
        $region111: #{forward.1} parent=103 // pred_region
          %784 = dma.done [#allocation5], 1024
        $region112: #{forward.1} parent=103 // pred_fallthru
          _
        // Predicated region
        $region113: #{forward.1} parent=103 // pred_check
          %p785 = pneg %p218
        $region114: #{forward.1} parent=103 // pred_check_branch
          %787 = sbr.rel (%p785) target = $region116
        $region115: #{forward.1} parent=103 // pred_region
          %789 = dma.done [#allocation5], 1024
        $region116: #{forward.1} parent=103 // pred_fallthru
          _
        // Predicated region
        $region117: #{forward.1} parent=103 // pred_check
          %p790 = pneg %p239
        $region118: #{forward.1} parent=103 // pred_check_branch
          %792 = sbr.rel (%p790) target = $region120
        $region119: #{forward.1} parent=103 // pred_region
          %794 = dma.done [#allocation8], 512
        $region120: #{forward.1} parent=103 // pred_fallthru
          _
        // Predicated region
        $region121: #{forward.1} parent=103 // pred_check
          %p795 = pneg %p260
        $region122: #{forward.1} parent=103 // pred_check_branch
          %797 = sbr.rel (%p795) target = $region124
        $region123: #{forward.1} parent=103 // pred_region
          %799 = dma.done [#allocation8], 512
        $region124: #{forward.1} parent=103 // pred_fallthru
          _
        // Predicated region
        $region125: #{forward.1} parent=103 // pred_check
          %p800 = pneg %p281
        $region126: #{forward.1} parent=103 // pred_check_branch
          %802 = sbr.rel (%p800) target = $region128
        $region127: #{forward.1} parent=103 // pred_region
          %804 = dma.done [#allocation11], 4096
        $region128: #{forward.1} parent=103 // pred_fallthru
          _
        // Predicated region
        $region129: #{forward.1} parent=103 // pred_check
          %p805 = pneg %p302
        $region130: #{forward.1} parent=103 // pred_check_branch
          %807 = sbr.rel (%p805) target = $region132
        $region131: #{forward.1} parent=103 // pred_region
          %809 = dma.done [#allocation11], 4096
        $region132: #{forward.1} parent=103 // pred_fallthru
          _
        // Predicated region
        $region133: #{forward.1} parent=103 // pred_check
          %p810 = pneg %p323
        $region134: #{forward.1} parent=103 // pred_check_branch
          %812 = sbr.rel (%p810) target = $region136
        $region135: #{forward.1} parent=103 // pred_region
          %814 = dma.done [#allocation14], 4096
        $region136: #{forward.1} parent=103 // pred_fallthru
          _
        // Predicated region
        $region137: #{forward.1} parent=103 // pred_check
          %p815 = pneg %p428
        $region138: #{forward.1} parent=103 // pred_check_branch
          %817 = sbr.rel (%p815) target = $region140
        $region139: #{forward.1} parent=103 // pred_region
          %819 = dma.done [#allocation14], 1024
        $region140: #{forward.1} parent=103 // pred_fallthru
          _
        %s820 = smul.u32 8, %s40
        %p821 = scmp.lt.s32.totalorder %s820, 15
        %s822 = scalar_select %p821, %s820, 15
        %s823 = smul.addr %s822, 8
        %s824 = scalar_lea.vmem %s0, %s823
        %p825 = pneg %p61
        %p826 = pneg %p58
        %s827 = smul.u32 8, %s40
        %p828 = scmp.lt.s32.totalorder %s827, 15
        %s829 = scalar_select %p828, %s827, 15
        %s830 = smul.addr %s829, 8
        %s831 = scalar_lea.vmem %s1, %s830
        %p832 = pneg %p87
        %p833 = pneg %p84
        %s834 = smul.u32 2, %s40
        %p835 = scmp.lt.s32.totalorder %s834, 3
        %s836 = scalar_select %p835, %s834, 3
        %s837 = smul.addr %s836, 4
        %s838 = scalar_lea.vmem %s2, %s837
        %p839 = pneg %p113
        %p840 = pneg %p110
        %p841 = pneg %p134
        %p842 = pneg %p131
        %p843 = pneg %p155
        %p844 = pneg %p152
        %p845 = pneg %p176
        %p846 = pneg %p173
        %p847 = pneg %p197
        %p848 = pneg %p194
        %p849 = pneg %p218
        %p850 = pneg %p215
        %p851 = pneg %p239
        %p852 = pneg %p236
        %p853 = pneg %p260
        %p854 = pneg %p257
        %p855 = pneg %p281
        %p856 = pneg %p278
        %p857 = pneg %p302
        %p858 = pneg %p299
        %p859 = pneg %p323
        %p860 = pneg %p320
        %p861 = pneg %p344
        %p862 = pneg %p341
        %p863 = pneg %p365
        %p864 = pneg %p362
        %p865 = pneg %p386
        %p866 = pneg %p383
        %p867 = pneg %p407
        %p868 = pneg %p404
        %p869 = pneg %p428
        %p870 = pneg %p425
        %p871 = pneg %p449
        %p872 = pneg %p446
        %p873 = pneg %p470
        %p874 = pneg %p467
        %p875 = pneg %p491
        %p876 = pneg %p488
        %p877 = pneg %p517
        %p878 = pneg %p514
        %s879 = sand.u32 %s504, 1
        %s880 = sand.u32 %s504, 1
        %s881 = smul.addr %s880, 16
        %s882 = scalar_lea.vmem [#allocation16], %s881
        %p883 = pneg %p543
        %p884 = pneg %p540
        %s885 = sand.u32 %s530, 1
        %s886 = sand.u32 %s530, 1
        %s887 = smul.addr %s886, 16
        %s888 = scalar_lea.vmem [#allocation17], %s887
        %p889 = pneg %p569
        %p890 = pneg %p566
        %s891 = sand.u32 %s556, 1
        %s892 = sand.u32 %s556, 1
        %s893 = smul.addr %s892, 16
        %s894 = scalar_lea.vmem [#allocation18], %s893
        %s895 = smul.u32 8, %s40
        %p896 = scmp.lt.s32.totalorder %s895, 15
        %s897 = scalar_select %p896, %s895, 15
        %s898 = smul.addr %s897, 8
        %s899 = scalar_lea.vmem %s0, %s898
        %s900 = smul.u32 8, %s40
        %s901 = smul.u32 8, %s40
        %p902 = scmp.lt.s32.totalorder %s901, 15
        %s903 = scalar_select %p902, %s901, 15
        %s904 = smul.addr %s903, 8
        %s905 = scalar_lea.vmem %s1, %s904
        %s906 = smul.u32 8, %s40
        %s907 = smul.u32 2, %s40
        %p908 = scmp.lt.s32.totalorder %s907, 3
        %s909 = scalar_select %p908, %s907, 3
        %s910 = smul.addr %s909, 4
        %s911 = scalar_lea.vmem %s2, %s910
        %s912 = smul.u32 2, %s40
        %v913 = vld [vmem:[#allocation2] sm:$0xff]
        %v914 = vld [vmem:[#allocation2 + $0x8] sm:$0xff]
        %v915 = vld [vmem:[#allocation2 + $0x10] sm:$0xff]
        %v916 = vld [vmem:[#allocation2 + $0x18] sm:$0xff]
        %v917 = vld [vmem:[#allocation2 + $0x20] sm:$0xff]
        %v918 = vld [vmem:[#allocation2 + $0x28] sm:$0xff]
        %v919 = vld [vmem:[#allocation2 + $0x30] sm:$0xff]
        %v920 = vld [vmem:[#allocation2 + $0x38] sm:$0xff]
        %v921 = vld [vmem:[%s4] sm:$0x1]
        %v922 = vld [vmem:[%s899] sm:$0xff]
        %v923 = vld [vmem:[%s899 + $0x8] sm:$0xff]
        %v924 = vld [vmem:[%s899 + $0x10] sm:$0xff]
        %v925 = vld [vmem:[%s899 + $0x18] sm:$0xff]
        %v926 = vld [vmem:[%s899 + $0x20] sm:$0xff]
        %v927 = vld [vmem:[%s899 + $0x28] sm:$0xff]
        %v928 = vld [vmem:[%s899 + $0x30] sm:$0xff]
        %v929 = vld [vmem:[%s899 + $0x38] sm:$0xff]
        %v931 = vperm.slane %v921, 0
        %934 = vset.pattern.permute.xlu0 0
        %935 = vperm.xlu0 %934, %v922
        %v936 = vpop.permute.xlu0 %935
        %939 = vset.pattern.permute.xlu0 0
        %940 = vperm.xlu0 %939, %v923
        %v941 = vpop.permute.xlu0 %940
        %944 = vset.pattern.permute.xlu0 0
        %945 = vperm.xlu0 %944, %v924
        %v946 = vpop.permute.xlu0 %945
        %949 = vset.pattern.permute.xlu0 0
        %950 = vperm.xlu0 %949, %v925
        %v951 = vpop.permute.xlu0 %950
        %954 = vset.pattern.permute.xlu0 0
        %955 = vperm.xlu0 %954, %v926
        %v956 = vpop.permute.xlu0 %955
        %959 = vset.pattern.permute.xlu0 0
        %960 = vperm.xlu0 %959, %v927
        %v961 = vpop.permute.xlu0 %960
        %964 = vset.pattern.permute.xlu0 0
        %965 = vperm.xlu0 %964, %v928
        %v966 = vpop.permute.xlu0 %965
        %969 = vset.pattern.permute.xlu0 0
        %970 = vperm.xlu0 %969, %v929
        %v971 = vpop.permute.xlu0 %970
        %v973 = vsub.f32 %v931, %v936
        %v974 = vsub.f32 %v931, %v941
        %v975 = vsub.f32 %v931, %v946
        %v976 = vsub.f32 %v931, %v951
        %v977 = vsub.f32 %v931, %v956
        %v978 = vsub.f32 %v931, %v961
        %v979 = vsub.f32 %v931, %v966
        %v980 = vsub.f32 %v931, %v971
        %v981 = vmul.f32 %v973, %v973
        %v982 = vmul.f32 %v974, %v974
        %v983 = vmul.f32 %v975, %v975
        %v984 = vmul.f32 %v976, %v976
        %v985 = vmul.f32 %v977, %v977
        %v986 = vmul.f32 %v978, %v978
        %v987 = vmul.f32 %v979, %v979
        %v988 = vmul.f32 %v980, %v980
        %990 = vset.pattern.permute.xlu0 0
        %991 = vperm.xlu0 %990, %v913
        %v992 = vpop.permute.xlu0 %991
        %995 = vset.pattern.permute.xlu0 0
        %996 = vperm.xlu0 %995, %v914
        %v997 = vpop.permute.xlu0 %996
        %1000 = vset.pattern.permute.xlu0 0
        %1001 = vperm.xlu0 %1000, %v915
        %v1002 = vpop.permute.xlu0 %1001
        %1005 = vset.pattern.permute.xlu0 0
        %1006 = vperm.xlu0 %1005, %v916
        %v1007 = vpop.permute.xlu0 %1006
        %1010 = vset.pattern.permute.xlu0 0
        %1011 = vperm.xlu0 %1010, %v917
        %v1012 = vpop.permute.xlu0 %1011
        %1015 = vset.pattern.permute.xlu0 0
        %1016 = vperm.xlu0 %1015, %v918
        %v1017 = vpop.permute.xlu0 %1016
        %1020 = vset.pattern.permute.xlu0 0
        %1021 = vperm.xlu0 %1020, %v919
        %v1022 = vpop.permute.xlu0 %1021
        %1025 = vset.pattern.permute.xlu0 0
        %1026 = vperm.xlu0 %1025, %v920
        %v1027 = vpop.permute.xlu0 %1026
        %v1029 = vmul.f32 %v992, %v981
        %v1030 = vmul.f32 %v997, %v982
        %v1031 = vmul.f32 %v1002, %v983
        %v1032 = vmul.f32 %v1007, %v984
        %v1033 = vmul.f32 %v1012, %v985
        %v1034 = vmul.f32 %v1017, %v986
        %v1035 = vmul.f32 %v1022, %v987
        %v1036 = vmul.f32 %v1027, %v988
        %v1037 = vmul.f32 %v1029, 1.442695
        %v1038 = vpow.pop %v1037
        %v1039 = vmul.f32 %v1030, 1.442695
        %v1040 = vpow.pop %v1039
        %v1041 = vmul.f32 %v1031, 1.442695
        %v1042 = vpow.pop %v1041
        %v1043 = vmul.f32 %v1032, 1.442695
        %v1044 = vpow.pop %v1043
        %v1045 = vmul.f32 %v1033, 1.442695
        %v1046 = vpow.pop %v1045
        %v1047 = vmul.f32 %v1034, 1.442695
        %v1048 = vpow.pop %v1047
        %v1049 = vmul.f32 %v1035, 1.442695
        %v1050 = vpow.pop %v1049
        %v1051 = vmul.f32 %v1036, 1.442695
        %v1052 = vpow.pop %v1051
        %v1053 = vld [vmem:[#allocation6] sm:$0xff]
        %v1054 = vld [vmem:[#allocation6 + $0x8] sm:$0xff]
        %v1055 = vld [vmem:[#allocation6 + $0x10] sm:$0xff]
        %v1056 = vld [vmem:[#allocation6 + $0x18] sm:$0xff]
        %v1057 = vld [vmem:[#allocation6 + $0x20] sm:$0xff]
        %v1058 = vld [vmem:[#allocation6 + $0x28] sm:$0xff]
        %v1059 = vld [vmem:[#allocation6 + $0x30] sm:$0xff]
        %v1060 = vld [vmem:[#allocation6 + $0x38] sm:$0xff]
        %v1061 = vmul.f32 %v1053, %v1038
        %v1062 = vmul.f32 %v1054, %v1040
        %v1063 = vmul.f32 %v1055, %v1042
        %v1064 = vmul.f32 %v1056, %v1044
        %v1065 = vmul.f32 %v1057, %v1046
        %v1066 = vmul.f32 %v1058, %v1048
        %v1067 = vmul.f32 %v1059, %v1050
        %v1068 = vmul.f32 %v1060, %v1052
        %v1069 = vld [vmem:[#allocation4] sm:$0xff]
        %v1070 = vld [vmem:[#allocation4 + $0x8] sm:$0xff]
        %v1071 = vld [vmem:[#allocation4 + $0x10] sm:$0xff]
        %v1072 = vld [vmem:[#allocation4 + $0x18] sm:$0xff]
        %v1073 = vld [vmem:[#allocation4 + $0x20] sm:$0xff]
        %v1074 = vld [vmem:[#allocation4 + $0x28] sm:$0xff]
        %v1075 = vld [vmem:[#allocation4 + $0x30] sm:$0xff]
        %v1076 = vld [vmem:[#allocation4 + $0x38] sm:$0xff]
        %v1077 = vld [vmem:[%s3] sm:$0x1]
        %v1078 = vld [vmem:[%s905] sm:$0xff]
        %v1079 = vld [vmem:[%s905 + $0x8] sm:$0xff]
        %v1080 = vld [vmem:[%s905 + $0x10] sm:$0xff]
        %v1081 = vld [vmem:[%s905 + $0x18] sm:$0xff]
        %v1082 = vld [vmem:[%s905 + $0x20] sm:$0xff]
        %v1083 = vld [vmem:[%s905 + $0x28] sm:$0xff]
        %v1084 = vld [vmem:[%s905 + $0x30] sm:$0xff]
        %v1085 = vld [vmem:[%s905 + $0x38] sm:$0xff]
        %v1087 = vperm.slane %v1077, 0
        %1090 = vset.pattern.permute.xlu0 0
        %1091 = vperm.xlu0 %1090, %v1078
        %v1092 = vpop.permute.xlu0 %1091
        %1095 = vset.pattern.permute.xlu0 0
        %1096 = vperm.xlu0 %1095, %v1079
        %v1097 = vpop.permute.xlu0 %1096
        %1100 = vset.pattern.permute.xlu0 0
        %1101 = vperm.xlu0 %1100, %v1080
        %v1102 = vpop.permute.xlu0 %1101
        %1105 = vset.pattern.permute.xlu0 0
        %1106 = vperm.xlu0 %1105, %v1081
        %v1107 = vpop.permute.xlu0 %1106
        %1110 = vset.pattern.permute.xlu0 0
        %1111 = vperm.xlu0 %1110, %v1082
        %v1112 = vpop.permute.xlu0 %1111
        %1115 = vset.pattern.permute.xlu0 0
        %1116 = vperm.xlu0 %1115, %v1083
        %v1117 = vpop.permute.xlu0 %1116
        %1120 = vset.pattern.permute.xlu0 0
        %1121 = vperm.xlu0 %1120, %v1084
        %v1122 = vpop.permute.xlu0 %1121
        %1125 = vset.pattern.permute.xlu0 0
        %1126 = vperm.xlu0 %1125, %v1085
        %v1127 = vpop.permute.xlu0 %1126
        %v1129 = vsub.f32 %v1087, %v1092
        %v1130 = vsub.f32 %v1087, %v1097
        %v1131 = vsub.f32 %v1087, %v1102
        %v1132 = vsub.f32 %v1087, %v1107
        %v1133 = vsub.f32 %v1087, %v1112
        %v1134 = vsub.f32 %v1087, %v1117
        %v1135 = vsub.f32 %v1087, %v1122
        %v1136 = vsub.f32 %v1087, %v1127
        %v1137 = vmul.f32 %v1129, %v1129
        %v1138 = vmul.f32 %v1130, %v1130
        %v1139 = vmul.f32 %v1131, %v1131
        %v1140 = vmul.f32 %v1132, %v1132
        %v1141 = vmul.f32 %v1133, %v1133
        %v1142 = vmul.f32 %v1134, %v1134
        %v1143 = vmul.f32 %v1135, %v1135
        %v1144 = vmul.f32 %v1136, %v1136
        %v1145 = vmul.f32 %v992, %v1137
        %v1146 = vmul.f32 %v997, %v1138
        %v1147 = vmul.f32 %v1002, %v1139
        %v1148 = vmul.f32 %v1007, %v1140
        %v1149 = vmul.f32 %v1012, %v1141
        %v1150 = vmul.f32 %v1017, %v1142
        %v1151 = vmul.f32 %v1022, %v1143
        %v1152 = vmul.f32 %v1027, %v1144
        %v1153 = vmul.f32 %v1145, 1.442695
        %v1154 = vpow.pop %v1153
        %v1155 = vmul.f32 %v1146, 1.442695
        %v1156 = vpow.pop %v1155
        %v1157 = vmul.f32 %v1147, 1.442695
        %v1158 = vpow.pop %v1157
        %v1159 = vmul.f32 %v1148, 1.442695
        %v1160 = vpow.pop %v1159
        %v1161 = vmul.f32 %v1149, 1.442695
        %v1162 = vpow.pop %v1161
        %v1163 = vmul.f32 %v1150, 1.442695
        %v1164 = vpow.pop %v1163
        %v1165 = vmul.f32 %v1151, 1.442695
        %v1166 = vpow.pop %v1165
        %v1167 = vmul.f32 %v1152, 1.442695
        %v1168 = vpow.pop %v1167
        %1170 = vset.pattern.permute.xlu0 0
        %1171 = vperm.xlu0 %1170, %v1069
        %v1172 = vpop.permute.xlu0 %1171
        %1175 = vset.pattern.permute.xlu0 0
        %1176 = vperm.xlu0 %1175, %v1070
        %v1177 = vpop.permute.xlu0 %1176
        %1180 = vset.pattern.permute.xlu0 0
        %1181 = vperm.xlu0 %1180, %v1071
        %v1182 = vpop.permute.xlu0 %1181
        %1185 = vset.pattern.permute.xlu0 0
        %1186 = vperm.xlu0 %1185, %v1072
        %v1187 = vpop.permute.xlu0 %1186
        %1190 = vset.pattern.permute.xlu0 0
        %1191 = vperm.xlu0 %1190, %v1073
        %v1192 = vpop.permute.xlu0 %1191
        %1195 = vset.pattern.permute.xlu0 0
        %1196 = vperm.xlu0 %1195, %v1074
        %v1197 = vpop.permute.xlu0 %1196
        %1200 = vset.pattern.permute.xlu0 0
        %1201 = vperm.xlu0 %1200, %v1075
        %v1202 = vpop.permute.xlu0 %1201
        %1205 = vset.pattern.permute.xlu0 0
        %1206 = vperm.xlu0 %1205, %v1076
        %v1207 = vpop.permute.xlu0 %1206
        %v1209 = vmul.f32 %v1172, %v1154
        %v1210 = vmul.f32 %v1177, %v1156
        %v1211 = vmul.f32 %v1182, %v1158
        %v1212 = vmul.f32 %v1187, %v1160
        %v1213 = vmul.f32 %v1192, %v1162
        %v1214 = vmul.f32 %v1197, %v1164
        %v1215 = vmul.f32 %v1202, %v1166
        %v1216 = vmul.f32 %v1207, %v1168
        %1217 = vxpose.xlu0.b32.start [1/16] %v1209, 128
        %1218 = vxpose.xlu0.b32.cont [2/16] %v1210, 128
        %1219 = vxpose.xlu0.b32.cont [3/16] %v1211, 128
        %1220 = vxpose.xlu0.b32.cont [4/16] %v1212, 128
        %1221 = vxpose.xlu0.b32.cont [5/16] %v1213, 128
        %1222 = vxpose.xlu0.b32.cont [6/16] %v1214, 128
        %1223 = vxpose.xlu0.b32.cont [7/16] %v1215, 128
        %1224 = vxpose.xlu0.b32.cont [8/16] %v1216, 128
        %1225 = vxpose.xlu0.b32.cont [9/16] 0.0, 128
        %1226 = vxpose.xlu0.b32.cont [10/16] 0.0, 128
        %1227 = vxpose.xlu0.b32.cont [11/16] 0.0, 128
        %1228 = vxpose.xlu0.b32.cont [12/16] 0.0, 128
        %1229 = vxpose.xlu0.b32.cont [13/16] 0.0, 128
        %1230 = vxpose.xlu0.b32.cont [14/16] 0.0, 128
        %1231 = vxpose.xlu0.b32.cont [15/16] 0.0, 128
        %1232 = vxpose.xlu0.b32.end [16/16] 0.0, 128
        %v1233 = vpop.trf.xlu0
        %v1234 = vpop.trf.xlu0
        %v1235 = vpop.trf.xlu0
        %v1236 = vpop.trf.xlu0
        %v1237 = vpop.trf.xlu0
        %v1238 = vpop.trf.xlu0
        %v1239 = vpop.trf.xlu0
        %v1240 = vpop.trf.xlu0
        %v1241 = vpop.trf.xlu0
        %v1242 = vpop.trf.xlu0
        %v1243 = vpop.trf.xlu0
        %v1244 = vpop.trf.xlu0
        %v1245 = vpop.trf.xlu0
        %v1246 = vpop.trf.xlu0
        %v1247 = vpop.trf.xlu0
        %v1248 = vpop.trf.xlu0
        %vm1249 = vcmask 523264
        %v1251 = vsel %vm1249, %v1233, 0
        %v1254 = vsel %vm1249, %v1234, 0
        %1256 = vmatpush.msra.mxu0 0.0
        %1257 = vmatpush.msra.mxu0 0.0
        %1258 = vmatpush.msra.mxu0 0.0
        %1259 = vmatpush.msra.mxu0 0.0
        %1260 = vmatpush.msra.mxu0 0.0
        %1261 = vmatpush.msra.mxu0 0.0
        %1262 = vmatpush.msra.mxu0 0.0
        %1263 = vmatpush.msra.mxu0 0.0
        %1264 = vmatpush.msra.mxu0 %v1068
        %1265 = vmatpush.msra.mxu0 %v1067
        %1266 = vmatpush.msra.mxu0 %v1066
        %1267 = vmatpush.msra.mxu0 %v1065
        %1268 = vmatpush.msra.mxu0 %v1064
        %1269 = vmatpush.msra.mxu0 %v1063
        %1270 = vmatpush.msra.mxu0 %v1062
        %1271 = vmatpush.msra.mxu0 %v1061
        %1272 = vmatmul.f32.gmra.mxu0 %v1251
        %v1273 = vpop.f32.mrf.mxu0
        %v1274 = vadd.f32 0.0, %v1273
        %1275 = vmatmul.f32.gmra.mxu0 %v1254
        %v1276 = vpop.f32.mrf.mxu0
        %v1277 = vadd.f32 0.0, %v1276
        %1278 = vdwg.mxu0
        %v1279 = vld [vmem:[#allocation10] sm:$0xff]
        %v1280 = vld [vmem:[#allocation10 + $0x8] sm:$0xff]
        %v1281 = vld [vmem:[#allocation10 + $0x10] sm:$0xff]
        %v1282 = vld [vmem:[#allocation10 + $0x18] sm:$0xff]
        %v1283 = vld [vmem:[#allocation10 + $0x20] sm:$0xff]
        %v1284 = vld [vmem:[#allocation10 + $0x28] sm:$0xff]
        %v1285 = vld [vmem:[#allocation10 + $0x30] sm:$0xff]
        %v1286 = vld [vmem:[#allocation10 + $0x38] sm:$0xff]
        %v1287 = vld [vmem:[#allocation10 + $0x40] sm:$0xff]
        %v1288 = vld [vmem:[#allocation10 + $0x48] sm:$0xff]
        %v1289 = vld [vmem:[#allocation10 + $0x50] sm:$0xff]
        %v1290 = vld [vmem:[#allocation10 + $0x58] sm:$0xff]
        %v1291 = vld [vmem:[#allocation10 + $0x60] sm:$0xff]
        %v1292 = vld [vmem:[#allocation10 + $0x68] sm:$0xff]
        %v1293 = vld [vmem:[#allocation10 + $0x70] sm:$0xff]
        %v1294 = vld [vmem:[#allocation10 + $0x78] sm:$0xff]
        %v1295 = vld [vmem:[#allocation10 + $0x80] sm:$0xff]
        %v1296 = vld [vmem:[#allocation10 + $0x88] sm:$0xff]
        %v1297 = vld [vmem:[#allocation10 + $0x90] sm:$0xff]
        %v1298 = vld [vmem:[#allocation10 + $0x98] sm:$0xff]
        %v1299 = vld [vmem:[#allocation10 + $0xa0] sm:$0xff]
        %v1300 = vld [vmem:[#allocation10 + $0xa8] sm:$0xff]
        %v1301 = vld [vmem:[#allocation10 + $0xb0] sm:$0xff]
        %v1302 = vld [vmem:[#allocation10 + $0xb8] sm:$0xff]
        %v1303 = vld [vmem:[#allocation10 + $0xc0] sm:$0xff]
        %v1304 = vld [vmem:[#allocation10 + $0xc8] sm:$0xff]
        %v1305 = vld [vmem:[#allocation10 + $0xd0] sm:$0xff]
        %v1306 = vld [vmem:[#allocation10 + $0xd8] sm:$0xff]
        %v1307 = vld [vmem:[#allocation10 + $0xe0] sm:$0xff]
        %v1308 = vld [vmem:[#allocation10 + $0xe8] sm:$0xff]
        %v1309 = vld [vmem:[#allocation10 + $0xf0] sm:$0xff]
        %v1310 = vld [vmem:[#allocation10 + $0xf8] sm:$0xff]
        %1311 = vmatpush.msra.mxu0 %v1309
        %1312 = vmatpush.msra.mxu0 %v1307
        %1313 = vmatpush.msra.mxu0 %v1305
        %1314 = vmatpush.msra.mxu0 %v1303
        %1315 = vmatpush.msra.mxu0 %v1301
        %1316 = vmatpush.msra.mxu0 %v1299
        %1317 = vmatpush.msra.mxu0 %v1297
        %1318 = vmatpush.msra.mxu0 %v1295
        %1319 = vmatpush.msra.mxu0 %v1293
        %1320 = vmatpush.msra.mxu0 %v1291
        %1321 = vmatpush.msra.mxu0 %v1289
        %1322 = vmatpush.msra.mxu0 %v1287
        %1323 = vmatpush.msra.mxu0 %v1285
        %1324 = vmatpush.msra.mxu0 %v1283
        %1325 = vmatpush.msra.mxu0 %v1281
        %1326 = vmatpush.msra.mxu0 %v1279
        %1327 = vmatmul.f32.gmra.mxu0 %v1274
        %v1328 = vpop.f32.mrf.mxu0
        %v1329 = vadd.f32 0.0, %v1328
        %1330 = vmatmul.f32.gmra.mxu0 %v1277
        %v1331 = vpop.f32.mrf.mxu0
        %v1332 = vadd.f32 0.0, %v1331
        %1333 = vdwg.mxu0
        %1334 = vmatpush.msra.mxu0 %v1310
        %1335 = vmatpush.msra.mxu0 %v1308
        %1336 = vmatpush.msra.mxu0 %v1306
        %1337 = vmatpush.msra.mxu0 %v1304
        %1338 = vmatpush.msra.mxu0 %v1302
        %1339 = vmatpush.msra.mxu0 %v1300
        %1340 = vmatpush.msra.mxu0 %v1298
        %1341 = vmatpush.msra.mxu0 %v1296
        %1342 = vmatpush.msra.mxu0 %v1294
        %1343 = vmatpush.msra.mxu0 %v1292
        %1344 = vmatpush.msra.mxu0 %v1290
        %1345 = vmatpush.msra.mxu0 %v1288
        %1346 = vmatpush.msra.mxu0 %v1286
        %1347 = vmatpush.msra.mxu0 %v1284
        %1348 = vmatpush.msra.mxu0 %v1282
        %1349 = vmatpush.msra.mxu0 %v1280
        %1350 = vmatmul.f32.gmra.mxu0 %v1274
        %v1351 = vpop.f32.mrf.mxu0
        %v1352 = vadd.f32 0.0, %v1351
        %1353 = vmatmul.f32.gmra.mxu0 %v1277
        %v1354 = vpop.f32.mrf.mxu0
        %v1355 = vadd.f32 0.0, %v1354
        %1356 = vdwg.mxu0
        %v1357 = vld [vmem:[#allocation12] sm:$0xff]
        %v1358 = vld [vmem:[#allocation12 + $0x8] sm:$0xff]
        %v1359 = vld [vmem:[#allocation12 + $0x10] sm:$0xff]
        %v1360 = vld [vmem:[#allocation12 + $0x18] sm:$0xff]
        %v1361 = vld [vmem:[#allocation12 + $0x20] sm:$0xff]
        %v1362 = vld [vmem:[#allocation12 + $0x28] sm:$0xff]
        %v1363 = vld [vmem:[#allocation12 + $0x30] sm:$0xff]
        %v1364 = vld [vmem:[#allocation12 + $0x38] sm:$0xff]
        %v1365 = vld [vmem:[#allocation12 + $0x40] sm:$0xff]
        %v1366 = vld [vmem:[#allocation12 + $0x48] sm:$0xff]
        %v1367 = vld [vmem:[#allocation12 + $0x50] sm:$0xff]
        %v1368 = vld [vmem:[#allocation12 + $0x58] sm:$0xff]
        %v1369 = vld [vmem:[#allocation12 + $0x60] sm:$0xff]
        %v1370 = vld [vmem:[#allocation12 + $0x68] sm:$0xff]
        %v1371 = vld [vmem:[#allocation12 + $0x70] sm:$0xff]
        %v1372 = vld [vmem:[#allocation12 + $0x78] sm:$0xff]
        %v1373 = vld [vmem:[#allocation12 + $0x80] sm:$0xff]
        %v1374 = vld [vmem:[#allocation12 + $0x88] sm:$0xff]
        %v1375 = vld [vmem:[#allocation12 + $0x90] sm:$0xff]
        %v1376 = vld [vmem:[#allocation12 + $0x98] sm:$0xff]
        %v1377 = vld [vmem:[#allocation12 + $0xa0] sm:$0xff]
        %v1378 = vld [vmem:[#allocation12 + $0xa8] sm:$0xff]
        %v1379 = vld [vmem:[#allocation12 + $0xb0] sm:$0xff]
        %v1380 = vld [vmem:[#allocation12 + $0xb8] sm:$0xff]
        %v1381 = vld [vmem:[#allocation12 + $0xc0] sm:$0xff]
        %v1382 = vld [vmem:[#allocation12 + $0xc8] sm:$0xff]
        %v1383 = vld [vmem:[#allocation12 + $0xd0] sm:$0xff]
        %v1384 = vld [vmem:[#allocation12 + $0xd8] sm:$0xff]
        %v1385 = vld [vmem:[#allocation12 + $0xe0] sm:$0xff]
        %v1386 = vld [vmem:[#allocation12 + $0xe8] sm:$0xff]
        %v1387 = vld [vmem:[#allocation12 + $0xf0] sm:$0xff]
        %v1388 = vld [vmem:[#allocation12 + $0xf8] sm:$0xff]
        %1389 = vmatpush.msra.mxu0 %v1387
        %1390 = vmatpush.msra.mxu0 %v1385
        %1391 = vmatpush.msra.mxu0 %v1383
        %1392 = vmatpush.msra.mxu0 %v1381
        %1393 = vmatpush.msra.mxu0 %v1379
        %1394 = vmatpush.msra.mxu0 %v1377
        %1395 = vmatpush.msra.mxu0 %v1375
        %1396 = vmatpush.msra.mxu0 %v1373
        %1397 = vmatpush.msra.mxu0 %v1371
        %1398 = vmatpush.msra.mxu0 %v1369
        %1399 = vmatpush.msra.mxu0 %v1367
        %1400 = vmatpush.msra.mxu0 %v1365
        %1401 = vmatpush.msra.mxu0 %v1363
        %1402 = vmatpush.msra.mxu0 %v1361
        %1403 = vmatpush.msra.mxu0 %v1359
        %1404 = vmatpush.msra.mxu0 %v1357
        %1405 = vmatmul.f32.gmra.mxu0 %v1274
        %v1406 = vpop.f32.mrf.mxu0
        %v1407 = vadd.f32 0.0, %v1406
        %1408 = vmatmul.f32.gmra.mxu0 %v1277
        %v1409 = vpop.f32.mrf.mxu0
        %v1410 = vadd.f32 0.0, %v1409
        %1411 = vdwg.mxu0
        %1412 = vmatpush.msra.mxu0 %v1388
        %1413 = vmatpush.msra.mxu0 %v1386
        %1414 = vmatpush.msra.mxu0 %v1384
        %1415 = vmatpush.msra.mxu0 %v1382
        %1416 = vmatpush.msra.mxu0 %v1380
        %1417 = vmatpush.msra.mxu0 %v1378
        %1418 = vmatpush.msra.mxu0 %v1376
        %1419 = vmatpush.msra.mxu0 %v1374
        %1420 = vmatpush.msra.mxu0 %v1372
        %1421 = vmatpush.msra.mxu0 %v1370
        %1422 = vmatpush.msra.mxu0 %v1368
        %1423 = vmatpush.msra.mxu0 %v1366
        %1424 = vmatpush.msra.mxu0 %v1364
        %1425 = vmatpush.msra.mxu0 %v1362
        %1426 = vmatpush.msra.mxu0 %v1360
        %1427 = vmatpush.msra.mxu0 %v1358
        %1428 = vmatmul.f32.gmra.mxu0 %v1274
        %v1429 = vpop.f32.mrf.mxu0
        %v1430 = vadd.f32 0.0, %v1429
        %1431 = vmatmul.f32.gmra.mxu0 %v1277
        %v1432 = vpop.f32.mrf.mxu0
        %v1433 = vadd.f32 0.0, %v1432
        %1434 = vdwg.mxu0
        %v1435 = vld [vmem:[#allocation7] sm:$0xff]
        %v1436 = vld [vmem:[#allocation7 + $0x8] sm:$0xff]
        %v1437 = vld [vmem:[#allocation7 + $0x10] sm:$0xff]
        %v1438 = vld [vmem:[#allocation7 + $0x18] sm:$0xff]
        %v1439 = vld [vmem:[#allocation9] sm:$0xff]
        %v1440 = vld [vmem:[#allocation9 + $0x8] sm:$0xff]
        %v1441 = vld [vmem:[#allocation9 + $0x10] sm:$0xff]
        %v1442 = vld [vmem:[#allocation9 + $0x18] sm:$0xff]
        %vm1443 = vcmask 130048
        %v1445 = vsel %vm1443, %v1435, 0
        %v1448 = vsel %vm1443, %v1436, 0
        %v1451 = vsel %vm1443, %v1437, 0
        %v1454 = vsel %vm1443, %v1438, 0
        %1456 = vmatpush.msra.mxu0 0.0
        %1457 = vmatpush.msra.mxu0 0.0
        %1458 = vmatpush.msra.mxu0 0.0
        %1459 = vmatpush.msra.mxu0 0.0
        %1460 = vmatpush.msra.mxu0 0.0
        %1461 = vmatpush.msra.mxu0 0.0
        %1462 = vmatpush.msra.mxu0 0.0
        %1463 = vmatpush.msra.mxu0 0.0
        %1464 = vmatpush.msra.mxu0 0.0
        %1465 = vmatpush.msra.mxu0 0.0
        %1466 = vmatpush.msra.mxu0 0.0
        %1467 = vmatpush.msra.mxu0 0.0
        %1468 = vmatpush.msra.mxu0 0.0
        %1469 = vmatpush.msra.mxu0 0.0
        %1470 = vmatpush.msra.mxu0 %v1332
        %1471 = vmatpush.msra.mxu0 %v1329
        %1472 = vmatmul.f32.gmra.mxu0 %v1445
        %v1473 = vpop.f32.mrf.mxu0
        %v1474 = vadd.f32 0.0, %v1473
        %1475 = vmatmul.f32.gmra.mxu0 %v1448
        %v1476 = vpop.f32.mrf.mxu0
        %v1477 = vadd.f32 0.0, %v1476
        %1478 = vmatmul.f32.gmra.mxu0 %v1451
        %v1479 = vpop.f32.mrf.mxu0
        %v1480 = vadd.f32 0.0, %v1479
        %1481 = vmatmul.f32.gmra.mxu0 %v1454
        %v1482 = vpop.f32.mrf.mxu0
        %v1483 = vadd.f32 0.0, %v1482
        %1484 = vdwg.mxu0
        %1485 = vmatpush.msra.mxu0 0.0
        %1486 = vmatpush.msra.mxu0 0.0
        %1487 = vmatpush.msra.mxu0 0.0
        %1488 = vmatpush.msra.mxu0 0.0
        %1489 = vmatpush.msra.mxu0 0.0
        %1490 = vmatpush.msra.mxu0 0.0
        %1491 = vmatpush.msra.mxu0 0.0
        %1492 = vmatpush.msra.mxu0 0.0
        %1493 = vmatpush.msra.mxu0 0.0
        %1494 = vmatpush.msra.mxu0 0.0
        %1495 = vmatpush.msra.mxu0 0.0
        %1496 = vmatpush.msra.mxu0 0.0
        %1497 = vmatpush.msra.mxu0 0.0
        %1498 = vmatpush.msra.mxu0 0.0
        %1499 = vmatpush.msra.mxu0 %v1355
        %1500 = vmatpush.msra.mxu0 %v1352
        %1501 = vmatmul.f32.gmra.mxu0 %v1445
        %v1502 = vpop.f32.mrf.mxu0
        %v1503 = vadd.f32 0.0, %v1502
        %1504 = vmatmul.f32.gmra.mxu0 %v1448
        %v1505 = vpop.f32.mrf.mxu0
        %v1506 = vadd.f32 0.0, %v1505
        %1507 = vmatmul.f32.gmra.mxu0 %v1451
        %v1508 = vpop.f32.mrf.mxu0
        %v1509 = vadd.f32 0.0, %v1508
        %1510 = vmatmul.f32.gmra.mxu0 %v1454
        %v1511 = vpop.f32.mrf.mxu0
        %v1512 = vadd.f32 0.0, %v1511
        %1513 = vdwg.mxu0
        %v1515 = vsel %vm1443, %v1439, 0
        %v1518 = vsel %vm1443, %v1440, 0
        %v1521 = vsel %vm1443, %v1441, 0
        %v1524 = vsel %vm1443, %v1442, 0
        %1526 = vmatpush.msra.mxu0 0.0
        %1527 = vmatpush.msra.mxu0 0.0
        %1528 = vmatpush.msra.mxu0 0.0
        %1529 = vmatpush.msra.mxu0 0.0
        %1530 = vmatpush.msra.mxu0 0.0
        %1531 = vmatpush.msra.mxu0 0.0
        %1532 = vmatpush.msra.mxu0 0.0
        %1533 = vmatpush.msra.mxu0 0.0
        %1534 = vmatpush.msra.mxu0 0.0
        %1535 = vmatpush.msra.mxu0 0.0
        %1536 = vmatpush.msra.mxu0 0.0
        %1537 = vmatpush.msra.mxu0 0.0
        %1538 = vmatpush.msra.mxu0 0.0
        %1539 = vmatpush.msra.mxu0 0.0
        %1540 = vmatpush.msra.mxu0 %v1410
        %1541 = vmatpush.msra.mxu0 %v1407
        %1542 = vmatmul.f32.gmra.mxu0 %v1515
        %v1543 = vpop.f32.mrf.mxu0
        %v1544 = vadd.f32 0.0, %v1543
        %1545 = vmatmul.f32.gmra.mxu0 %v1518
        %v1546 = vpop.f32.mrf.mxu0
        %v1547 = vadd.f32 0.0, %v1546
        %1548 = vmatmul.f32.gmra.mxu0 %v1521
        %v1549 = vpop.f32.mrf.mxu0
        %v1550 = vadd.f32 0.0, %v1549
        %1551 = vmatmul.f32.gmra.mxu0 %v1524
        %v1552 = vpop.f32.mrf.mxu0
        %v1553 = vadd.f32 0.0, %v1552
        %1554 = vdwg.mxu0
        %1555 = vmatpush.msra.mxu0 0.0
        %1556 = vmatpush.msra.mxu0 0.0
        %1557 = vmatpush.msra.mxu0 0.0
        %1558 = vmatpush.msra.mxu0 0.0
        %1559 = vmatpush.msra.mxu0 0.0
        %1560 = vmatpush.msra.mxu0 0.0
        %1561 = vmatpush.msra.mxu0 0.0
        %1562 = vmatpush.msra.mxu0 0.0
        %1563 = vmatpush.msra.mxu0 0.0
        %1564 = vmatpush.msra.mxu0 0.0
        %1565 = vmatpush.msra.mxu0 0.0
        %1566 = vmatpush.msra.mxu0 0.0
        %1567 = vmatpush.msra.mxu0 0.0
        %1568 = vmatpush.msra.mxu0 0.0
        %1569 = vmatpush.msra.mxu0 %v1433
        %1570 = vmatpush.msra.mxu0 %v1430
        %1571 = vmatmul.f32.gmra.mxu0 %v1515
        %v1572 = vpop.f32.mrf.mxu0
        %v1573 = vadd.f32 0.0, %v1572
        %1574 = vmatmul.f32.gmra.mxu0 %v1518
        %v1575 = vpop.f32.mrf.mxu0
        %v1576 = vadd.f32 0.0, %v1575
        %1577 = vmatmul.f32.gmra.mxu0 %v1521
        %v1578 = vpop.f32.mrf.mxu0
        %v1579 = vadd.f32 0.0, %v1578
        %1580 = vmatmul.f32.gmra.mxu0 %v1524
        %v1581 = vpop.f32.mrf.mxu0
        %v1582 = vadd.f32 0.0, %v1581
        %1583 = vdwg.mxu0
        %v1584 = vsub.f32 %v1474, %v1544
        %v1585 = vsub.f32 %v1503, %v1573
        %v1586 = vsub.f32 %v1477, %v1547
        %v1587 = vsub.f32 %v1506, %v1576
        %v1588 = vsub.f32 %v1480, %v1550
        %v1589 = vsub.f32 %v1509, %v1579
        %v1590 = vsub.f32 %v1483, %v1553
        %v1591 = vsub.f32 %v1512, %v1582
        %1592 = vmatpush.msra.mxu0 0.0
        %1593 = vmatpush.msra.mxu0 0.0
        %1594 = vmatpush.msra.mxu0 0.0
        %1595 = vmatpush.msra.mxu0 0.0
        %1596 = vmatpush.msra.mxu0 0.0
        %1597 = vmatpush.msra.mxu0 0.0
        %1598 = vmatpush.msra.mxu0 0.0
        %1599 = vmatpush.msra.mxu0 0.0
        %1600 = vmatpush.msra.mxu0 0.0
        %1601 = vmatpush.msra.mxu0 0.0
        %1602 = vmatpush.msra.mxu0 0.0
        %1603 = vmatpush.msra.mxu0 0.0
        %1604 = vmatpush.msra.mxu0 0.0
        %1605 = vmatpush.msra.mxu0 0.0
        %1606 = vmatpush.msra.mxu0 %v1332
        %1607 = vmatpush.msra.mxu0 %v1329
        %1608 = vmatmul.f32.gmra.mxu0 %v1515
        %v1609 = vpop.f32.mrf.mxu0
        %v1610 = vadd.f32 0.0, %v1609
        %1611 = vmatmul.f32.gmra.mxu0 %v1518
        %v1612 = vpop.f32.mrf.mxu0
        %v1613 = vadd.f32 0.0, %v1612
        %1614 = vmatmul.f32.gmra.mxu0 %v1521
        %v1615 = vpop.f32.mrf.mxu0
        %v1616 = vadd.f32 0.0, %v1615
        %1617 = vmatmul.f32.gmra.mxu0 %v1524
        %v1618 = vpop.f32.mrf.mxu0
        %v1619 = vadd.f32 0.0, %v1618
        %1620 = vdwg.mxu0
        %1621 = vmatpush.msra.mxu0 0.0
        %1622 = vmatpush.msra.mxu0 0.0
        %1623 = vmatpush.msra.mxu0 0.0
        %1624 = vmatpush.msra.mxu0 0.0
        %1625 = vmatpush.msra.mxu0 0.0
        %1626 = vmatpush.msra.mxu0 0.0
        %1627 = vmatpush.msra.mxu0 0.0
        %1628 = vmatpush.msra.mxu0 0.0
        %1629 = vmatpush.msra.mxu0 0.0
        %1630 = vmatpush.msra.mxu0 0.0
        %1631 = vmatpush.msra.mxu0 0.0
        %1632 = vmatpush.msra.mxu0 0.0
        %1633 = vmatpush.msra.mxu0 0.0
        %1634 = vmatpush.msra.mxu0 0.0
        %1635 = vmatpush.msra.mxu0 %v1355
        %1636 = vmatpush.msra.mxu0 %v1352
        %1637 = vmatmul.f32.gmra.mxu0 %v1515
        %v1638 = vpop.f32.mrf.mxu0
        %v1639 = vadd.f32 0.0, %v1638
        %1640 = vmatmul.f32.gmra.mxu0 %v1518
        %v1641 = vpop.f32.mrf.mxu0
        %v1642 = vadd.f32 0.0, %v1641
        %1643 = vmatmul.f32.gmra.mxu0 %v1521
        %v1644 = vpop.f32.mrf.mxu0
        %v1645 = vadd.f32 0.0, %v1644
        %1646 = vmatmul.f32.gmra.mxu0 %v1524
        %v1647 = vpop.f32.mrf.mxu0
        %v1648 = vadd.f32 0.0, %v1647
        %1649 = vdwg.mxu0
        %1650 = vmatpush.msra.mxu0 0.0
        %1651 = vmatpush.msra.mxu0 0.0
        %1652 = vmatpush.msra.mxu0 0.0
        %1653 = vmatpush.msra.mxu0 0.0
        %1654 = vmatpush.msra.mxu0 0.0
        %1655 = vmatpush.msra.mxu0 0.0
        %1656 = vmatpush.msra.mxu0 0.0
        %1657 = vmatpush.msra.mxu0 0.0
        %1658 = vmatpush.msra.mxu0 0.0
        %1659 = vmatpush.msra.mxu0 0.0
        %1660 = vmatpush.msra.mxu0 0.0
        %1661 = vmatpush.msra.mxu0 0.0
        %1662 = vmatpush.msra.mxu0 0.0
        %1663 = vmatpush.msra.mxu0 0.0
        %1664 = vmatpush.msra.mxu0 %v1410
        %1665 = vmatpush.msra.mxu0 %v1407
        %1666 = vmatmul.f32.gmra.mxu0 %v1445
        %v1667 = vpop.f32.mrf.mxu0
        %v1668 = vadd.f32 %v1610, %v1667
        %1669 = vmatmul.f32.gmra.mxu0 %v1448
        %v1670 = vpop.f32.mrf.mxu0
        %v1671 = vadd.f32 %v1613, %v1670
        %1672 = vmatmul.f32.gmra.mxu0 %v1451
        %v1673 = vpop.f32.mrf.mxu0
        %v1674 = vadd.f32 %v1616, %v1673
        %1675 = vmatmul.f32.gmra.mxu0 %v1454
        %v1676 = vpop.f32.mrf.mxu0
        %v1677 = vadd.f32 %v1619, %v1676
        %1678 = vdwg.mxu0
        %1679 = vmatpush.msra.mxu0 0.0
        %1680 = vmatpush.msra.mxu0 0.0
        %1681 = vmatpush.msra.mxu0 0.0
        %1682 = vmatpush.msra.mxu0 0.0
        %1683 = vmatpush.msra.mxu0 0.0
        %1684 = vmatpush.msra.mxu0 0.0
        %1685 = vmatpush.msra.mxu0 0.0
        %1686 = vmatpush.msra.mxu0 0.0
        %1687 = vmatpush.msra.mxu0 0.0
        %1688 = vmatpush.msra.mxu0 0.0
        %1689 = vmatpush.msra.mxu0 0.0
        %1690 = vmatpush.msra.mxu0 0.0
        %1691 = vmatpush.msra.mxu0 0.0
        %1692 = vmatpush.msra.mxu0 0.0
        %1693 = vmatpush.msra.mxu0 %v1433
        %1694 = vmatpush.msra.mxu0 %v1430
        %1695 = vmatmul.f32.gmra.mxu0 %v1445
        %v1696 = vpop.f32.mrf.mxu0
        %v1697 = vadd.f32 %v1639, %v1696
        %1698 = vmatmul.f32.gmra.mxu0 %v1448
        %v1699 = vpop.f32.mrf.mxu0
        %v1700 = vadd.f32 %v1642, %v1699
        %1701 = vmatmul.f32.gmra.mxu0 %v1451
        %v1702 = vpop.f32.mrf.mxu0
        %v1703 = vadd.f32 %v1645, %v1702
        %1704 = vmatmul.f32.gmra.mxu0 %v1454
        %v1705 = vpop.f32.mrf.mxu0
        %v1706 = vadd.f32 %v1648, %v1705
        %1707 = vdwg.mxu0
        %v1708 = vld [vmem:[%s911] ss:$4 sm:$0x3]
        %s1709 = scalar_lea.vmem %s911, 1
        %v1710 = vld [vmem:[%s1709] ss:$4 sm:$0x3]
        %s1711 = scalar_lea.vmem %s911, 2
        %v1712 = vld [vmem:[%s1711] ss:$4 sm:$0x3]
        %v1713 = vld [vmem:[#allocation15] sm:$0xff]
        %v1714 = vld [vmem:[#allocation15 + $0x8] sm:$0xff]
        %v1715 = vld [vmem:[#allocation15 + $0x10] sm:$0xff]
        %v1716 = vld [vmem:[#allocation15 + $0x18] sm:$0xff]
        %v1717 = vld [vmem:[#allocation15 + $0x20] sm:$0xff]
        %v1718 = vld [vmem:[#allocation15 + $0x28] sm:$0xff]
        %v1719 = vld [vmem:[#allocation15 + $0x30] sm:$0xff]
        %v1720 = vld [vmem:[#allocation15 + $0x38] sm:$0xff]
        %v1722 = vperm.slane %v1708, 0
        %v1723 = vperm.slane %v1708, 1
        %v1726 = vmul.f32 %v1722, %v1713
        %v1727 = vmul.f32 %v1723, %v1714
        %v1728 = vmul.f32 %v1722, %v1715
        %v1729 = vmul.f32 %v1723, %v1716
        %v1730 = vmul.f32 %v1722, %v1717
        %v1731 = vmul.f32 %v1723, %v1718
        %v1732 = vmul.f32 %v1722, %v1719
        %v1733 = vmul.f32 %v1723, %v1720
        %v1734 = vld [vmem:[%s18] sm:$0xff]
        %v1735 = vld [vmem:[%s18 + $0x8] sm:$0xff]
        %v1736 = vld [vmem:[%s18 + $0x10] sm:$0xff]
        %v1737 = vld [vmem:[%s18 + $0x18] sm:$0xff]
        %v1738 = vld [vmem:[%s18 + $0x20] sm:$0xff]
        %v1739 = vld [vmem:[%s18 + $0x28] sm:$0xff]
        %v1740 = vld [vmem:[%s18 + $0x30] sm:$0xff]
        %v1741 = vld [vmem:[%s18 + $0x38] sm:$0xff]
        %v1743 = vperm.slane %v1710, 0
        %v1744 = vperm.slane %v1710, 1
        %v1747 = vmul.f32 %v1743, %v1734
        %v1748 = vmul.f32 %v1744, %v1735
        %v1749 = vmul.f32 %v1743, %v1736
        %v1750 = vmul.f32 %v1744, %v1737
        %v1751 = vmul.f32 %v1743, %v1738
        %v1752 = vmul.f32 %v1744, %v1739
        %v1753 = vmul.f32 %v1743, %v1740
        %v1754 = vmul.f32 %v1744, %v1741
        %v1755 = vadd.f32 %v1726, %v1747
        %v1756 = vadd.f32 %v1727, %v1748
        %v1757 = vadd.f32 %v1728, %v1749
        %v1758 = vadd.f32 %v1729, %v1750
        %v1759 = vadd.f32 %v1730, %v1751
        %v1760 = vadd.f32 %v1731, %v1752
        %v1761 = vadd.f32 %v1732, %v1753
        %v1762 = vadd.f32 %v1733, %v1754
        %v1763 = vld [vmem:[%s19] sm:$0xff]
        %v1764 = vld [vmem:[%s19 + $0x8] sm:$0xff]
        %v1765 = vld [vmem:[%s19 + $0x10] sm:$0xff]
        %v1766 = vld [vmem:[%s19 + $0x18] sm:$0xff]
        %v1767 = vld [vmem:[%s19 + $0x20] sm:$0xff]
        %v1768 = vld [vmem:[%s19 + $0x28] sm:$0xff]
        %v1769 = vld [vmem:[%s19 + $0x30] sm:$0xff]
        %v1770 = vld [vmem:[%s19 + $0x38] sm:$0xff]
        %v1772 = vperm.slane %v1712, 0
        %v1773 = vperm.slane %v1712, 1
        %v1776 = vmul.f32 %v1772, %v1763
        %v1777 = vmul.f32 %v1773, %v1764
        %v1778 = vmul.f32 %v1772, %v1765
        %v1779 = vmul.f32 %v1773, %v1766
        %v1780 = vmul.f32 %v1772, %v1767
        %v1781 = vmul.f32 %v1773, %v1768
        %v1782 = vmul.f32 %v1772, %v1769
        %v1783 = vmul.f32 %v1773, %v1770
        %v1784 = vadd.f32 %v1755, %v1776
        %v1785 = vadd.f32 %v1756, %v1777
        %v1786 = vadd.f32 %v1757, %v1778
        %v1787 = vadd.f32 %v1758, %v1779
        %v1788 = vadd.f32 %v1759, %v1780
        %v1789 = vadd.f32 %v1760, %v1781
        %v1790 = vadd.f32 %v1761, %v1782
        %v1791 = vadd.f32 %v1762, %v1783
        %v1792 = vld [vmem:[%s20] sm:$0xff]
        %v1793 = vld [vmem:[%s20 + $0x8] sm:$0xff]
        %v1794 = vld [vmem:[%s20 + $0x10] sm:$0xff]
        %v1795 = vld [vmem:[%s20 + $0x18] sm:$0xff]
        %v1796 = vld [vmem:[%s20 + $0x20] sm:$0xff]
        %v1797 = vld [vmem:[%s20 + $0x28] sm:$0xff]
        %v1798 = vld [vmem:[%s20 + $0x30] sm:$0xff]
        %v1799 = vld [vmem:[%s20 + $0x38] sm:$0xff]
        %v1800 = vadd.f32 %v1784, %v1792
        %v1801 = vadd.f32 %v1785, %v1793
        %v1802 = vadd.f32 %v1786, %v1794
        %v1803 = vadd.f32 %v1787, %v1795
        %v1804 = vadd.f32 %v1788, %v1796
        %v1805 = vadd.f32 %v1789, %v1797
        %v1806 = vadd.f32 %v1790, %v1798
        %v1807 = vadd.f32 %v1791, %v1799
        %v1808 = vand.u32 2147483647, %v1800
        %vm1809 = vcmp.le.f32.partialorder %v1808, 0.7853982
        %vm1810 = vcmp.lt.s32.totalorder %v1800, 0
        %v1811 = vand.u32 %v1800, 2139095040
        %v1812 = vshrl.u32 %v1811, 23
        %v1813 = vsub.s32 %v1812, 127
        %v1814 = vand.u32 2147483647, %v1800
        %v1815 = vand.u32 %v1814, 8388607
        %v1816 = vor.u32 %v1815, 8388608
        %v1817 = vsub.s32 0, %v1816
        %v1818 = vadd.s32 %v1813, 1
        %vm1819 = vcmp.gt.s32.totalorder %v1818, 0
        %v1820 = vsel %vm1819, %v1818, 0
        %v1821 = vshrl.u32 %v1820, 5
        %v1822 = vand.u32 %v1820, 31
        %v1823 = vsub.s32 32, %v1822
        %v1824 = vshrl.u32 683565275, %v1823
        %v1825 = vshll.u32 683565275, %v1822
        %v1826 = vshrl.u32 2475754826, %v1823
        %v1827 = vor.u32 %v1825, %v1826
        %v1828 = vshll.u32 2475754826, %v1822
        %v1829 = vshrl.u32 2131351028, %v1823
        %v1830 = vor.u32 %v1828, %v1829
        %v1831 = vshll.u32 2131351028, %v1822
        %v1832 = vshrl.u32 2102212464, %v1823
        %v1833 = vor.u32 %v1831, %v1832
        %v1834 = vshll.u32 2102212464, %v1822
        %v1835 = vshrl.u32 920167782, %v1823
        %v1836 = vor.u32 %v1834, %v1835
        %v1837 = vshll.u32 920167782, %v1822
        %v1838 = vshrl.u32 1326507024, %v1823
        %v1839 = vor.u32 %v1837, %v1838
        %vm1840 = vcmp.lt.s32.totalorder %v1821, 1
        %vm1841 = vcmp.lt.s32.totalorder %v1821, 2
        %vm1842 = vcmp.lt.s32.totalorder %v1821, 3
        %vm1843 = vcmp.lt.s32.totalorder %v1821, 4
        %v1844 = vsel %vm1840, %v1824, %v1827
        %v1845 = vsel %vm1843, %v1833, 2102212464
        %v1846 = vsel %vm1842, %v1830, %v1845
        %v1847 = vsel %vm1841, %v1844, %v1846
        %v1848 = vsel %vm1840, %v1827, %v1830
        %v1849 = vsel %vm1843, %v1836, 920167782
        %v1850 = vsel %vm1842, %v1833, %v1849
        %v1851 = vsel %vm1841, %v1848, %v1850
        %v1852 = vsel %vm1840, %v1830, %v1833
        %v1853 = vsel %vm1843, %v1839, 1326507024
        %v1854 = vsel %vm1842, %v1836, %v1853
        %v1855 = vsel %vm1841, %v1852, %v1854
        %v1856 = vshll.u32 %v1816, 8
        %v1857 = vand.u32 %v1856, 65535
        %v1858 = vshrl.u32 %v1856, 16
        %v1859 = vand.u32 %v1855, 65535
        %v1860 = vshrl.u32 %v1855, 16
        %v1861 = vmul.u32 %v1857, %v1859
        %v1862 = vmul.u32 %v1857, %v1860
        %v1863 = vmul.u32 %v1858, %v1859
        %v1864 = vmul.u32 %v1858, %v1860
        %v1865 = vshll.u32 %v1862, 16
        %v1866 = vshrl.u32 %v1862, 16
        %v1867 = vshll.u32 %v1863, 16
        %v1868 = vshrl.u32 %v1863, 16
        %vm1869 = vc.u32 %v1861, %v1865
        %v1870 = vsel %vm1869, 1, 0
        %v1871 = vadd.s32 %v1861, %v1865
        %v1872 = vadd.s32 %v1864, %v1870
        %vm1873 = vc.u32 %v1871, %v1867
        %v1874 = vsel %vm1873, 1, 0
        %v1875 = vadd.s32 %v1871, %v1867
        %v1876 = vadd.s32 %v1872, %v1874
        %v1877 = vadd.s32 %v1876, %v1866
        %v1878 = vadd.s32 %v1877, %v1868
        %v1879 = vand.u32 %v1856, 65535
        %v1880 = vshrl.u32 %v1856, 16
        %v1881 = vand.u32 %v1851, 65535
        %v1882 = vshrl.u32 %v1851, 16
        %v1883 = vmul.u32 %v1879, %v1881
        %v1884 = vmul.u32 %v1879, %v1882
        %v1885 = vmul.u32 %v1880, %v1881
        %v1886 = vmul.u32 %v1880, %v1882
        %v1887 = vshll.u32 %v1884, 16
        %v1888 = vshrl.u32 %v1884, 16
        %v1889 = vshll.u32 %v1885, 16
        %v1890 = vshrl.u32 %v1885, 16
        %vm1891 = vc.u32 %v1883, %v1887
        %v1892 = vsel %vm1891, 1, 0
        %v1893 = vadd.s32 %v1883, %v1887
        %v1894 = vadd.s32 %v1886, %v1892
        %vm1895 = vc.u32 %v1893, %v1889
        %v1896 = vsel %vm1895, 1, 0
        %v1897 = vadd.s32 %v1893, %v1889
        %v1898 = vadd.s32 %v1894, %v1896
        %v1899 = vadd.s32 %v1898, %v1888
        %v1900 = vadd.s32 %v1899, %v1890
        %v1901 = vmul.u32 %v1856, %v1847
        %v1902 = vadd.s32 %v1878, %v1897
        %vm1903 = vc.u32 %v1878, %v1897
        %v1904 = vadd.s32 %v1900, 1
        %v1905 = vsel %vm1903, %v1904, %v1900
        %v1906 = vadd.s32 %v1901, %v1905
        %v1907 = vadd.s32 %v1906, 536870912
        %v1908 = vshrl.u32 %v1907, 30
        %v1909 = vshll.u32 %v1908, 30
        %v1910 = vsub.s32 %v1906, %v1909
        %vm1911 = vcmp.lt.s32.totalorder %v1910, 0
        %v1912 = vsub.s32 0, %v1910
        %v1913 = vsel %vm1911, %v1912, %v1910
        %v1914 = vclz %v1913
        %v1915 = vsub.s32 %v1914, 2
        %vm1916 = vcmp.gt.s32.totalorder 0, %v1915
        %v1917 = vsel %vm1916, 0, %v1915
        %v1918 = vsub.s32 32, %v1917
        %v1919 = vshll.u32 %v1910, %v1917
        %v1920 = vshrl.u32 %v1902, %v1918
        %v1921 = vor.u32 %v1919, %v1920
        %v1922 = vsub.s32 4294967266, %v1917
        %v1923 = vadd.s32 %v1922, 127
        %v1924 = vshll.u32 %v1923, 23
        %v1925 = vor.u32 4788187, %v1924
        %v1926 = vand.u32 2147483647, %v1925
        %v1928 = vcvt.s32.f32 %v1921
        %v1929 = vmul.f32 %v1928, %v1926
        %v1930 = vxor.u32 %v1929, 2147483648
        %v1931 = vsel %vm1810, %v1930, %v1929
        %v1932 = vsub.s32 4, %v1908
        %v1933 = vsel %vm1810, %v1932, %v1908
        %v1934 = vsel %vm1809, %v1800, %v1931
        %v1935 = vsel %vm1809, 0, %v1933
        %v1936 = vmul.f32 %v1934, %v1934
        %v1937 = vmul.f32 %v1936, -0.001358992
        %v1938 = vadd.f32 %v1937, 0.041655596
        %v1939 = vmul.f32 %v1936, %v1938
        %v1940 = vadd.f32 %v1939, -0.4999988
        %v1941 = vmul.f32 %v1936, %v1940
        %v1942 = vadd.f32 1.0, %v1941
        %v1943 = vmul.f32 %v1934, %v1934
        %v1944 = vmul.f32 %v1943, -0.00019511016
        %v1945 = vadd.f32 %v1944, 0.008332121
        %v1946 = vmul.f32 %v1943, %v1945
        %v1947 = vadd.f32 %v1946, -0.16666654
        %v1948 = vmul.f32 %v1943, %v1947
        %v1949 = vadd.f32 %v1948, 1.0
        %v1950 = vmul.f32 %v1949, %v1934
        %vm1951 = vweird.f32 %v1800
        %v1952 = vadd.s32 %v1935, 3
        %v1953 = vand.u32 %v1952, 3
        %vm1954 = vcmp.lt.s32.totalorder %v1953, 2
        %vm1955 = vcmp.eq.s32.totalorder %v1953, 0
        %v1956 = vxor.u32 %v1950, 2147483648
        %v1957 = vsel %vm1955, %v1942, %v1956
        %vm1958 = vcmp.eq.s32.totalorder %v1953, 2
        %v1959 = vxor.u32 %v1942, 2147483648
        %v1960 = vsel %vm1958, %v1959, %v1950
        %v1961 = vsel %vm1954, %v1957, %v1960
        %v1962 = vsel %vm1951, nan, %v1961
        %v1963 = vand.u32 2147483647, %v1801
        %vm1964 = vcmp.le.f32.partialorder %v1963, 0.7853982
        %vm1965 = vcmp.lt.s32.totalorder %v1801, 0
        %v1966 = vand.u32 %v1801, 2139095040
        %v1967 = vshrl.u32 %v1966, 23
        %v1968 = vsub.s32 %v1967, 127
        %v1969 = vand.u32 2147483647, %v1801
        %v1970 = vand.u32 %v1969, 8388607
        %v1971 = vor.u32 %v1970, 8388608
        %v1972 = vsub.s32 0, %v1971
        %v1973 = vadd.s32 %v1968, 1
        %vm1974 = vcmp.gt.s32.totalorder %v1973, 0
        %v1975 = vsel %vm1974, %v1973, 0
        %v1976 = vshrl.u32 %v1975, 5
        %v1977 = vand.u32 %v1975, 31
        %v1978 = vsub.s32 32, %v1977
        %v1979 = vshrl.u32 683565275, %v1978
        %v1980 = vshll.u32 683565275, %v1977
        %v1981 = vshrl.u32 2475754826, %v1978
        %v1982 = vor.u32 %v1980, %v1981
        %v1983 = vshll.u32 2475754826, %v1977
        %v1984 = vshrl.u32 2131351028, %v1978
        %v1985 = vor.u32 %v1983, %v1984
        %v1986 = vshll.u32 2131351028, %v1977
        %v1987 = vshrl.u32 2102212464, %v1978
        %v1988 = vor.u32 %v1986, %v1987
        %v1989 = vshll.u32 2102212464, %v1977
        %v1990 = vshrl.u32 920167782, %v1978
        %v1991 = vor.u32 %v1989, %v1990
        %v1992 = vshll.u32 920167782, %v1977
        %v1993 = vshrl.u32 1326507024, %v1978
        %v1994 = vor.u32 %v1992, %v1993
        %vm1995 = vcmp.lt.s32.totalorder %v1976, 1
        %vm1996 = vcmp.lt.s32.totalorder %v1976, 2
        %vm1997 = vcmp.lt.s32.totalorder %v1976, 3
        %vm1998 = vcmp.lt.s32.totalorder %v1976, 4
        %v1999 = vsel %vm1995, %v1979, %v1982
        %v2000 = vsel %vm1998, %v1988, 2102212464
        %v2001 = vsel %vm1997, %v1985, %v2000
        %v2002 = vsel %vm1996, %v1999, %v2001
        %v2003 = vsel %vm1995, %v1982, %v1985
        %v2004 = vsel %vm1998, %v1991, 920167782
        %v2005 = vsel %vm1997, %v1988, %v2004
        %v2006 = vsel %vm1996, %v2003, %v2005
        %v2007 = vsel %vm1995, %v1985, %v1988
        %v2008 = vsel %vm1998, %v1994, 1326507024
        %v2009 = vsel %vm1997, %v1991, %v2008
        %v2010 = vsel %vm1996, %v2007, %v2009
        %v2011 = vshll.u32 %v1971, 8
        %v2012 = vand.u32 %v2011, 65535
        %v2013 = vshrl.u32 %v2011, 16
        %v2014 = vand.u32 %v2010, 65535
        %v2015 = vshrl.u32 %v2010, 16
        %v2016 = vmul.u32 %v2012, %v2014
        %v2017 = vmul.u32 %v2012, %v2015
        %v2018 = vmul.u32 %v2013, %v2014
        %v2019 = vmul.u32 %v2013, %v2015
        %v2020 = vshll.u32 %v2017, 16
        %v2021 = vshrl.u32 %v2017, 16
        %v2022 = vshll.u32 %v2018, 16
        %v2023 = vshrl.u32 %v2018, 16
        %vm2024 = vc.u32 %v2016, %v2020
        %v2025 = vsel %vm2024, 1, 0
        %v2026 = vadd.s32 %v2016, %v2020
        %v2027 = vadd.s32 %v2019, %v2025
        %vm2028 = vc.u32 %v2026, %v2022
        %v2029 = vsel %vm2028, 1, 0
        %v2030 = vadd.s32 %v2026, %v2022
        %v2031 = vadd.s32 %v2027, %v2029
        %v2032 = vadd.s32 %v2031, %v2021
        %v2033 = vadd.s32 %v2032, %v2023
        %v2034 = vand.u32 %v2011, 65535
        %v2035 = vshrl.u32 %v2011, 16
        %v2036 = vand.u32 %v2006, 65535
        %v2037 = vshrl.u32 %v2006, 16
        %v2038 = vmul.u32 %v2034, %v2036
        %v2039 = vmul.u32 %v2034, %v2037
        %v2040 = vmul.u32 %v2035, %v2036
        %v2041 = vmul.u32 %v2035, %v2037
        %v2042 = vshll.u32 %v2039, 16
        %v2043 = vshrl.u32 %v2039, 16
        %v2044 = vshll.u32 %v2040, 16
        %v2045 = vshrl.u32 %v2040, 16
        %vm2046 = vc.u32 %v2038, %v2042
        %v2047 = vsel %vm2046, 1, 0
        %v2048 = vadd.s32 %v2038, %v2042
        %v2049 = vadd.s32 %v2041, %v2047
        %vm2050 = vc.u32 %v2048, %v2044
        %v2051 = vsel %vm2050, 1, 0
        %v2052 = vadd.s32 %v2048, %v2044
        %v2053 = vadd.s32 %v2049, %v2051
        %v2054 = vadd.s32 %v2053, %v2043
        %v2055 = vadd.s32 %v2054, %v2045
        %v2056 = vmul.u32 %v2011, %v2002
        %v2057 = vadd.s32 %v2033, %v2052
        %vm2058 = vc.u32 %v2033, %v2052
        %v2059 = vadd.s32 %v2055, 1
        %v2060 = vsel %vm2058, %v2059, %v2055
        %v2061 = vadd.s32 %v2056, %v2060
        %v2062 = vadd.s32 %v2061, 536870912
        %v2063 = vshrl.u32 %v2062, 30
        %v2064 = vshll.u32 %v2063, 30
        %v2065 = vsub.s32 %v2061, %v2064
        %vm2066 = vcmp.lt.s32.totalorder %v2065, 0
        %v2067 = vsub.s32 0, %v2065
        %v2068 = vsel %vm2066, %v2067, %v2065
        %v2069 = vclz %v2068
        %v2070 = vsub.s32 %v2069, 2
        %vm2071 = vcmp.gt.s32.totalorder 0, %v2070
        %v2072 = vsel %vm2071, 0, %v2070
        %v2073 = vsub.s32 32, %v2072
        %v2074 = vshll.u32 %v2065, %v2072
        %v2075 = vshrl.u32 %v2057, %v2073
        %v2076 = vor.u32 %v2074, %v2075
        %v2077 = vsub.s32 4294967266, %v2072
        %v2078 = vadd.s32 %v2077, 127
        %v2079 = vshll.u32 %v2078, 23
        %v2080 = vor.u32 4788187, %v2079
        %v2081 = vand.u32 2147483647, %v2080
        %v2083 = vcvt.s32.f32 %v2076
        %v2084 = vmul.f32 %v2083, %v2081
        %v2085 = vxor.u32 %v2084, 2147483648
        %v2086 = vsel %vm1965, %v2085, %v2084
        %v2087 = vsub.s32 4, %v2063
        %v2088 = vsel %vm1965, %v2087, %v2063
        %v2089 = vsel %vm1964, %v1801, %v2086
        %v2090 = vsel %vm1964, 0, %v2088
        %v2091 = vmul.f32 %v2089, %v2089
        %v2092 = vmul.f32 %v2091, -0.001358992
        %v2093 = vadd.f32 %v2092, 0.041655596
        %v2094 = vmul.f32 %v2091, %v2093
        %v2095 = vadd.f32 %v2094, -0.4999988
        %v2096 = vmul.f32 %v2091, %v2095
        %v2097 = vadd.f32 1.0, %v2096
        %v2098 = vmul.f32 %v2089, %v2089
        %v2099 = vmul.f32 %v2098, -0.00019511016
        %v2100 = vadd.f32 %v2099, 0.008332121
        %v2101 = vmul.f32 %v2098, %v2100
        %v2102 = vadd.f32 %v2101, -0.16666654
        %v2103 = vmul.f32 %v2098, %v2102
        %v2104 = vadd.f32 %v2103, 1.0
        %v2105 = vmul.f32 %v2104, %v2089
        %vm2106 = vweird.f32 %v1801
        %v2107 = vadd.s32 %v2090, 3
        %v2108 = vand.u32 %v2107, 3
        %vm2109 = vcmp.lt.s32.totalorder %v2108, 2
        %vm2110 = vcmp.eq.s32.totalorder %v2108, 0
        %v2111 = vxor.u32 %v2105, 2147483648
        %v2112 = vsel %vm2110, %v2097, %v2111
        %vm2113 = vcmp.eq.s32.totalorder %v2108, 2
        %v2114 = vxor.u32 %v2097, 2147483648
        %v2115 = vsel %vm2113, %v2114, %v2105
        %v2116 = vsel %vm2109, %v2112, %v2115
        %v2117 = vsel %vm2106, nan, %v2116
        %v2118 = vand.u32 2147483647, %v1802
        %vm2119 = vcmp.le.f32.partialorder %v2118, 0.7853982
        %vm2120 = vcmp.lt.s32.totalorder %v1802, 0
        %v2121 = vand.u32 %v1802, 2139095040
        %v2122 = vshrl.u32 %v2121, 23
        %v2123 = vsub.s32 %v2122, 127
        %v2124 = vand.u32 2147483647, %v1802
        %v2125 = vand.u32 %v2124, 8388607
        %v2126 = vor.u32 %v2125, 8388608
        %v2127 = vsub.s32 0, %v2126
        %v2128 = vadd.s32 %v2123, 1
        %vm2129 = vcmp.gt.s32.totalorder %v2128, 0
        %v2130 = vsel %vm2129, %v2128, 0
        %v2131 = vshrl.u32 %v2130, 5
        %v2132 = vand.u32 %v2130, 31
        %v2133 = vsub.s32 32, %v2132
        %v2134 = vshrl.u32 683565275, %v2133
        %v2135 = vshll.u32 683565275, %v2132
        %v2136 = vshrl.u32 2475754826, %v2133
        %v2137 = vor.u32 %v2135, %v2136
        %v2138 = vshll.u32 2475754826, %v2132
        %v2139 = vshrl.u32 2131351028, %v2133
        %v2140 = vor.u32 %v2138, %v2139
        %v2141 = vshll.u32 2131351028, %v2132
        %v2142 = vshrl.u32 2102212464, %v2133
        %v2143 = vor.u32 %v2141, %v2142
        %v2144 = vshll.u32 2102212464, %v2132
        %v2145 = vshrl.u32 920167782, %v2133
        %v2146 = vor.u32 %v2144, %v2145
        %v2147 = vshll.u32 920167782, %v2132
        %v2148 = vshrl.u32 1326507024, %v2133
        %v2149 = vor.u32 %v2147, %v2148
        %vm2150 = vcmp.lt.s32.totalorder %v2131, 1
        %vm2151 = vcmp.lt.s32.totalorder %v2131, 2
        %vm2152 = vcmp.lt.s32.totalorder %v2131, 3
        %vm2153 = vcmp.lt.s32.totalorder %v2131, 4
        %v2154 = vsel %vm2150, %v2134, %v2137
        %v2155 = vsel %vm2153, %v2143, 2102212464
        %v2156 = vsel %vm2152, %v2140, %v2155
        %v2157 = vsel %vm2151, %v2154, %v2156
        %v2158 = vsel %vm2150, %v2137, %v2140
        %v2159 = vsel %vm2153, %v2146, 920167782
        %v2160 = vsel %vm2152, %v2143, %v2159
        %v2161 = vsel %vm2151, %v2158, %v2160
        %v2162 = vsel %vm2150, %v2140, %v2143
        %v2163 = vsel %vm2153, %v2149, 1326507024
        %v2164 = vsel %vm2152, %v2146, %v2163
        %v2165 = vsel %vm2151, %v2162, %v2164
        %v2166 = vshll.u32 %v2126, 8
        %v2167 = vand.u32 %v2166, 65535
        %v2168 = vshrl.u32 %v2166, 16
        %v2169 = vand.u32 %v2165, 65535
        %v2170 = vshrl.u32 %v2165, 16
        %v2171 = vmul.u32 %v2167, %v2169
        %v2172 = vmul.u32 %v2167, %v2170
        %v2173 = vmul.u32 %v2168, %v2169
        %v2174 = vmul.u32 %v2168, %v2170
        %v2175 = vshll.u32 %v2172, 16
        %v2176 = vshrl.u32 %v2172, 16
        %v2177 = vshll.u32 %v2173, 16
        %v2178 = vshrl.u32 %v2173, 16
        %vm2179 = vc.u32 %v2171, %v2175
        %v2180 = vsel %vm2179, 1, 0
        %v2181 = vadd.s32 %v2171, %v2175
        %v2182 = vadd.s32 %v2174, %v2180
        %vm2183 = vc.u32 %v2181, %v2177
        %v2184 = vsel %vm2183, 1, 0
        %v2185 = vadd.s32 %v2181, %v2177
        %v2186 = vadd.s32 %v2182, %v2184
        %v2187 = vadd.s32 %v2186, %v2176
        %v2188 = vadd.s32 %v2187, %v2178
        %v2189 = vand.u32 %v2166, 65535
        %v2190 = vshrl.u32 %v2166, 16
        %v2191 = vand.u32 %v2161, 65535
        %v2192 = vshrl.u32 %v2161, 16
        %v2193 = vmul.u32 %v2189, %v2191
        %v2194 = vmul.u32 %v2189, %v2192
        %v2195 = vmul.u32 %v2190, %v2191
        %v2196 = vmul.u32 %v2190, %v2192
        %v2197 = vshll.u32 %v2194, 16
        %v2198 = vshrl.u32 %v2194, 16
        %v2199 = vshll.u32 %v2195, 16
        %v2200 = vshrl.u32 %v2195, 16
        %vm2201 = vc.u32 %v2193, %v2197
        %v2202 = vsel %vm2201, 1, 0
        %v2203 = vadd.s32 %v2193, %v2197
        %v2204 = vadd.s32 %v2196, %v2202
        %vm2205 = vc.u32 %v2203, %v2199
        %v2206 = vsel %vm2205, 1, 0
        %v2207 = vadd.s32 %v2203, %v2199
        %v2208 = vadd.s32 %v2204, %v2206
        %v2209 = vadd.s32 %v2208, %v2198
        %v2210 = vadd.s32 %v2209, %v2200
        %v2211 = vmul.u32 %v2166, %v2157
        %v2212 = vadd.s32 %v2188, %v2207
        %vm2213 = vc.u32 %v2188, %v2207
        %v2214 = vadd.s32 %v2210, 1
        %v2215 = vsel %vm2213, %v2214, %v2210
        %v2216 = vadd.s32 %v2211, %v2215
        %v2217 = vadd.s32 %v2216, 536870912
        %v2218 = vshrl.u32 %v2217, 30
        %v2219 = vshll.u32 %v2218, 30
        %v2220 = vsub.s32 %v2216, %v2219
        %vm2221 = vcmp.lt.s32.totalorder %v2220, 0
        %v2222 = vsub.s32 0, %v2220
        %v2223 = vsel %vm2221, %v2222, %v2220
        %v2224 = vclz %v2223
        %v2225 = vsub.s32 %v2224, 2
        %vm2226 = vcmp.gt.s32.totalorder 0, %v2225
        %v2227 = vsel %vm2226, 0, %v2225
        %v2228 = vsub.s32 32, %v2227
        %v2229 = vshll.u32 %v2220, %v2227
        %v2230 = vshrl.u32 %v2212, %v2228
        %v2231 = vor.u32 %v2229, %v2230
        %v2232 = vsub.s32 4294967266, %v2227
        %v2233 = vadd.s32 %v2232, 127
        %v2234 = vshll.u32 %v2233, 23
        %v2235 = vor.u32 4788187, %v2234
        %v2236 = vand.u32 2147483647, %v2235
        %v2238 = vcvt.s32.f32 %v2231
        %v2239 = vmul.f32 %v2238, %v2236
        %v2240 = vxor.u32 %v2239, 2147483648
        %v2241 = vsel %vm2120, %v2240, %v2239
        %v2242 = vsub.s32 4, %v2218
        %v2243 = vsel %vm2120, %v2242, %v2218
        %v2244 = vsel %vm2119, %v1802, %v2241
        %v2245 = vsel %vm2119, 0, %v2243
        %v2246 = vmul.f32 %v2244, %v2244
        %v2247 = vmul.f32 %v2246, -0.001358992
        %v2248 = vadd.f32 %v2247, 0.041655596
        %v2249 = vmul.f32 %v2246, %v2248
        %v2250 = vadd.f32 %v2249, -0.4999988
        %v2251 = vmul.f32 %v2246, %v2250
        %v2252 = vadd.f32 1.0, %v2251
        %v2253 = vmul.f32 %v2244, %v2244
        %v2254 = vmul.f32 %v2253, -0.00019511016
        %v2255 = vadd.f32 %v2254, 0.008332121
        %v2256 = vmul.f32 %v2253, %v2255
        %v2257 = vadd.f32 %v2256, -0.16666654
        %v2258 = vmul.f32 %v2253, %v2257
        %v2259 = vadd.f32 %v2258, 1.0
        %v2260 = vmul.f32 %v2259, %v2244
        %vm2261 = vweird.f32 %v1802
        %v2262 = vadd.s32 %v2245, 3
        %v2263 = vand.u32 %v2262, 3
        %vm2264 = vcmp.lt.s32.totalorder %v2263, 2
        %vm2265 = vcmp.eq.s32.totalorder %v2263, 0
        %v2266 = vxor.u32 %v2260, 2147483648
        %v2267 = vsel %vm2265, %v2252, %v2266
        %vm2268 = vcmp.eq.s32.totalorder %v2263, 2
        %v2269 = vxor.u32 %v2252, 2147483648
        %v2270 = vsel %vm2268, %v2269, %v2260
        %v2271 = vsel %vm2264, %v2267, %v2270
        %v2272 = vsel %vm2261, nan, %v2271
        %v2273 = vand.u32 2147483647, %v1803
        %vm2274 = vcmp.le.f32.partialorder %v2273, 0.7853982
        %vm2275 = vcmp.lt.s32.totalorder %v1803, 0
        %v2276 = vand.u32 %v1803, 2139095040
        %v2277 = vshrl.u32 %v2276, 23
        %v2278 = vsub.s32 %v2277, 127
        %v2279 = vand.u32 2147483647, %v1803
        %v2280 = vand.u32 %v2279, 8388607
        %v2281 = vor.u32 %v2280, 8388608
        %v2282 = vsub.s32 0, %v2281
        %v2283 = vadd.s32 %v2278, 1
        %vm2284 = vcmp.gt.s32.totalorder %v2283, 0
        %v2285 = vsel %vm2284, %v2283, 0
        %v2286 = vshrl.u32 %v2285, 5
        %v2287 = vand.u32 %v2285, 31
        %v2288 = vsub.s32 32, %v2287
        %v2289 = vshrl.u32 683565275, %v2288
        %v2290 = vshll.u32 683565275, %v2287
        %v2291 = vshrl.u32 2475754826, %v2288
        %v2292 = vor.u32 %v2290, %v2291
        %v2293 = vshll.u32 2475754826, %v2287
        %v2294 = vshrl.u32 2131351028, %v2288
        %v2295 = vor.u32 %v2293, %v2294
        %v2296 = vshll.u32 2131351028, %v2287
        %v2297 = vshrl.u32 2102212464, %v2288
        %v2298 = vor.u32 %v2296, %v2297
        %v2299 = vshll.u32 2102212464, %v2287
        %v2300 = vshrl.u32 920167782, %v2288
        %v2301 = vor.u32 %v2299, %v2300
        %v2302 = vshll.u32 920167782, %v2287
        %v2303 = vshrl.u32 1326507024, %v2288
        %v2304 = vor.u32 %v2302, %v2303
        %vm2305 = vcmp.lt.s32.totalorder %v2286, 1
        %vm2306 = vcmp.lt.s32.totalorder %v2286, 2
        %vm2307 = vcmp.lt.s32.totalorder %v2286, 3
        %vm2308 = vcmp.lt.s32.totalorder %v2286, 4
        %v2309 = vsel %vm2305, %v2289, %v2292
        %v2310 = vsel %vm2308, %v2298, 2102212464
        %v2311 = vsel %vm2307, %v2295, %v2310
        %v2312 = vsel %vm2306, %v2309, %v2311
        %v2313 = vsel %vm2305, %v2292, %v2295
        %v2314 = vsel %vm2308, %v2301, 920167782
        %v2315 = vsel %vm2307, %v2298, %v2314
        %v2316 = vsel %vm2306, %v2313, %v2315
        %v2317 = vsel %vm2305, %v2295, %v2298
        %v2318 = vsel %vm2308, %v2304, 1326507024
        %v2319 = vsel %vm2307, %v2301, %v2318
        %v2320 = vsel %vm2306, %v2317, %v2319
        %v2321 = vshll.u32 %v2281, 8
        %v2322 = vand.u32 %v2321, 65535
        %v2323 = vshrl.u32 %v2321, 16
        %v2324 = vand.u32 %v2320, 65535
        %v2325 = vshrl.u32 %v2320, 16
        %v2326 = vmul.u32 %v2322, %v2324
        %v2327 = vmul.u32 %v2322, %v2325
        %v2328 = vmul.u32 %v2323, %v2324
        %v2329 = vmul.u32 %v2323, %v2325
        %v2330 = vshll.u32 %v2327, 16
        %v2331 = vshrl.u32 %v2327, 16
        %v2332 = vshll.u32 %v2328, 16
        %v2333 = vshrl.u32 %v2328, 16
        %vm2334 = vc.u32 %v2326, %v2330
        %v2335 = vsel %vm2334, 1, 0
        %v2336 = vadd.s32 %v2326, %v2330
        %v2337 = vadd.s32 %v2329, %v2335
        %vm2338 = vc.u32 %v2336, %v2332
        %v2339 = vsel %vm2338, 1, 0
        %v2340 = vadd.s32 %v2336, %v2332
        %v2341 = vadd.s32 %v2337, %v2339
        %v2342 = vadd.s32 %v2341, %v2331
        %v2343 = vadd.s32 %v2342, %v2333
        %v2344 = vand.u32 %v2321, 65535
        %v2345 = vshrl.u32 %v2321, 16
        %v2346 = vand.u32 %v2316, 65535
        %v2347 = vshrl.u32 %v2316, 16
        %v2348 = vmul.u32 %v2344, %v2346
        %v2349 = vmul.u32 %v2344, %v2347
        %v2350 = vmul.u32 %v2345, %v2346
        %v2351 = vmul.u32 %v2345, %v2347
        %v2352 = vshll.u32 %v2349, 16
        %v2353 = vshrl.u32 %v2349, 16
        %v2354 = vshll.u32 %v2350, 16
        %v2355 = vshrl.u32 %v2350, 16
        %vm2356 = vc.u32 %v2348, %v2352
        %v2357 = vsel %vm2356, 1, 0
        %v2358 = vadd.s32 %v2348, %v2352
        %v2359 = vadd.s32 %v2351, %v2357
        %vm2360 = vc.u32 %v2358, %v2354
        %v2361 = vsel %vm2360, 1, 0
        %v2362 = vadd.s32 %v2358, %v2354
        %v2363 = vadd.s32 %v2359, %v2361
        %v2364 = vadd.s32 %v2363, %v2353
        %v2365 = vadd.s32 %v2364, %v2355
        %v2366 = vmul.u32 %v2321, %v2312
        %v2367 = vadd.s32 %v2343, %v2362
        %vm2368 = vc.u32 %v2343, %v2362
        %v2369 = vadd.s32 %v2365, 1
        %v2370 = vsel %vm2368, %v2369, %v2365
        %v2371 = vadd.s32 %v2366, %v2370
        %v2372 = vadd.s32 %v2371, 536870912
        %v2373 = vshrl.u32 %v2372, 30
        %v2374 = vshll.u32 %v2373, 30
        %v2375 = vsub.s32 %v2371, %v2374
        %vm2376 = vcmp.lt.s32.totalorder %v2375, 0
        %v2377 = vsub.s32 0, %v2375
        %v2378 = vsel %vm2376, %v2377, %v2375
        %v2379 = vclz %v2378
        %v2380 = vsub.s32 %v2379, 2
        %vm2381 = vcmp.gt.s32.totalorder 0, %v2380
        %v2382 = vsel %vm2381, 0, %v2380
        %v2383 = vsub.s32 32, %v2382
        %v2384 = vshll.u32 %v2375, %v2382
        %v2385 = vshrl.u32 %v2367, %v2383
        %v2386 = vor.u32 %v2384, %v2385
        %v2387 = vsub.s32 4294967266, %v2382
        %v2388 = vadd.s32 %v2387, 127
        %v2389 = vshll.u32 %v2388, 23
        %v2390 = vor.u32 4788187, %v2389
        %v2391 = vand.u32 2147483647, %v2390
        %v2393 = vcvt.s32.f32 %v2386
        %v2394 = vmul.f32 %v2393, %v2391
        %v2395 = vxor.u32 %v2394, 2147483648
        %v2396 = vsel %vm2275, %v2395, %v2394
        %v2397 = vsub.s32 4, %v2373
        %v2398 = vsel %vm2275, %v2397, %v2373
        %v2399 = vsel %vm2274, %v1803, %v2396
        %v2400 = vsel %vm2274, 0, %v2398
        %v2401 = vmul.f32 %v2399, %v2399
        %v2402 = vmul.f32 %v2401, -0.001358992
        %v2403 = vadd.f32 %v2402, 0.041655596
        %v2404 = vmul.f32 %v2401, %v2403
        %v2405 = vadd.f32 %v2404, -0.4999988
        %v2406 = vmul.f32 %v2401, %v2405
        %v2407 = vadd.f32 1.0, %v2406
        %v2408 = vmul.f32 %v2399, %v2399
        %v2409 = vmul.f32 %v2408, -0.00019511016
        %v2410 = vadd.f32 %v2409, 0.008332121
        %v2411 = vmul.f32 %v2408, %v2410
        %v2412 = vadd.f32 %v2411, -0.16666654
        %v2413 = vmul.f32 %v2408, %v2412
        %v2414 = vadd.f32 %v2413, 1.0
        %v2415 = vmul.f32 %v2414, %v2399
        %vm2416 = vweird.f32 %v1803
        %v2417 = vadd.s32 %v2400, 3
        %v2418 = vand.u32 %v2417, 3
        %vm2419 = vcmp.lt.s32.totalorder %v2418, 2
        %vm2420 = vcmp.eq.s32.totalorder %v2418, 0
        %v2421 = vxor.u32 %v2415, 2147483648
        %v2422 = vsel %vm2420, %v2407, %v2421
        %vm2423 = vcmp.eq.s32.totalorder %v2418, 2
        %v2424 = vxor.u32 %v2407, 2147483648
        %v2425 = vsel %vm2423, %v2424, %v2415
        %v2426 = vsel %vm2419, %v2422, %v2425
        %v2427 = vsel %vm2416, nan, %v2426
        %v2428 = vand.u32 2147483647, %v1804
        %vm2429 = vcmp.le.f32.partialorder %v2428, 0.7853982
        %vm2430 = vcmp.lt.s32.totalorder %v1804, 0
        %v2431 = vand.u32 %v1804, 2139095040
        %v2432 = vshrl.u32 %v2431, 23
        %v2433 = vsub.s32 %v2432, 127
        %v2434 = vand.u32 2147483647, %v1804
        %v2435 = vand.u32 %v2434, 8388607
        %v2436 = vor.u32 %v2435, 8388608
        %v2437 = vsub.s32 0, %v2436
        %v2438 = vadd.s32 %v2433, 1
        %vm2439 = vcmp.gt.s32.totalorder %v2438, 0
        %v2440 = vsel %vm2439, %v2438, 0
        %v2441 = vshrl.u32 %v2440, 5
        %v2442 = vand.u32 %v2440, 31
        %v2443 = vsub.s32 32, %v2442
        %v2444 = vshrl.u32 683565275, %v2443
        %v2445 = vshll.u32 683565275, %v2442
        %v2446 = vshrl.u32 2475754826, %v2443
        %v2447 = vor.u32 %v2445, %v2446
        %v2448 = vshll.u32 2475754826, %v2442
        %v2449 = vshrl.u32 2131351028, %v2443
        %v2450 = vor.u32 %v2448, %v2449
        %v2451 = vshll.u32 2131351028, %v2442
        %v2452 = vshrl.u32 2102212464, %v2443
        %v2453 = vor.u32 %v2451, %v2452
        %v2454 = vshll.u32 2102212464, %v2442
        %v2455 = vshrl.u32 920167782, %v2443
        %v2456 = vor.u32 %v2454, %v2455
        %v2457 = vshll.u32 920167782, %v2442
        %v2458 = vshrl.u32 1326507024, %v2443
        %v2459 = vor.u32 %v2457, %v2458
        %vm2460 = vcmp.lt.s32.totalorder %v2441, 1
        %vm2461 = vcmp.lt.s32.totalorder %v2441, 2
        %vm2462 = vcmp.lt.s32.totalorder %v2441, 3
        %vm2463 = vcmp.lt.s32.totalorder %v2441, 4
        %v2464 = vsel %vm2460, %v2444, %v2447
        %v2465 = vsel %vm2463, %v2453, 2102212464
        %v2466 = vsel %vm2462, %v2450, %v2465
        %v2467 = vsel %vm2461, %v2464, %v2466
        %v2468 = vsel %vm2460, %v2447, %v2450
        %v2469 = vsel %vm2463, %v2456, 920167782
        %v2470 = vsel %vm2462, %v2453, %v2469
        %v2471 = vsel %vm2461, %v2468, %v2470
        %v2472 = vsel %vm2460, %v2450, %v2453
        %v2473 = vsel %vm2463, %v2459, 1326507024
        %v2474 = vsel %vm2462, %v2456, %v2473
        %v2475 = vsel %vm2461, %v2472, %v2474
        %v2476 = vshll.u32 %v2436, 8
        %v2477 = vand.u32 %v2476, 65535
        %v2478 = vshrl.u32 %v2476, 16
        %v2479 = vand.u32 %v2475, 65535
        %v2480 = vshrl.u32 %v2475, 16
        %v2481 = vmul.u32 %v2477, %v2479
        %v2482 = vmul.u32 %v2477, %v2480
        %v2483 = vmul.u32 %v2478, %v2479
        %v2484 = vmul.u32 %v2478, %v2480
        %v2485 = vshll.u32 %v2482, 16
        %v2486 = vshrl.u32 %v2482, 16
        %v2487 = vshll.u32 %v2483, 16
        %v2488 = vshrl.u32 %v2483, 16
        %vm2489 = vc.u32 %v2481, %v2485
        %v2490 = vsel %vm2489, 1, 0
        %v2491 = vadd.s32 %v2481, %v2485
        %v2492 = vadd.s32 %v2484, %v2490
        %vm2493 = vc.u32 %v2491, %v2487
        %v2494 = vsel %vm2493, 1, 0
        %v2495 = vadd.s32 %v2491, %v2487
        %v2496 = vadd.s32 %v2492, %v2494
        %v2497 = vadd.s32 %v2496, %v2486
        %v2498 = vadd.s32 %v2497, %v2488
        %v2499 = vand.u32 %v2476, 65535
        %v2500 = vshrl.u32 %v2476, 16
        %v2501 = vand.u32 %v2471, 65535
        %v2502 = vshrl.u32 %v2471, 16
        %v2503 = vmul.u32 %v2499, %v2501
        %v2504 = vmul.u32 %v2499, %v2502
        %v2505 = vmul.u32 %v2500, %v2501
        %v2506 = vmul.u32 %v2500, %v2502
        %v2507 = vshll.u32 %v2504, 16
        %v2508 = vshrl.u32 %v2504, 16
        %v2509 = vshll.u32 %v2505, 16
        %v2510 = vshrl.u32 %v2505, 16
        %vm2511 = vc.u32 %v2503, %v2507
        %v2512 = vsel %vm2511, 1, 0
        %v2513 = vadd.s32 %v2503, %v2507
        %v2514 = vadd.s32 %v2506, %v2512
        %vm2515 = vc.u32 %v2513, %v2509
        %v2516 = vsel %vm2515, 1, 0
        %v2517 = vadd.s32 %v2513, %v2509
        %v2518 = vadd.s32 %v2514, %v2516
        %v2519 = vadd.s32 %v2518, %v2508
        %v2520 = vadd.s32 %v2519, %v2510
        %v2521 = vmul.u32 %v2476, %v2467
        %v2522 = vadd.s32 %v2498, %v2517
        %vm2523 = vc.u32 %v2498, %v2517
        %v2524 = vadd.s32 %v2520, 1
        %v2525 = vsel %vm2523, %v2524, %v2520
        %v2526 = vadd.s32 %v2521, %v2525
        %v2527 = vadd.s32 %v2526, 536870912
        %v2528 = vshrl.u32 %v2527, 30
        %v2529 = vshll.u32 %v2528, 30
        %v2530 = vsub.s32 %v2526, %v2529
        %vm2531 = vcmp.lt.s32.totalorder %v2530, 0
        %v2532 = vsub.s32 0, %v2530
        %v2533 = vsel %vm2531, %v2532, %v2530
        %v2534 = vclz %v2533
        %v2535 = vsub.s32 %v2534, 2
        %vm2536 = vcmp.gt.s32.totalorder 0, %v2535
        %v2537 = vsel %vm2536, 0, %v2535
        %v2538 = vsub.s32 32, %v2537
        %v2539 = vshll.u32 %v2530, %v2537
        %v2540 = vshrl.u32 %v2522, %v2538
        %v2541 = vor.u32 %v2539, %v2540
        %v2542 = vsub.s32 4294967266, %v2537
        %v2543 = vadd.s32 %v2542, 127
        %v2544 = vshll.u32 %v2543, 23
        %v2545 = vor.u32 4788187, %v2544
        %v2546 = vand.u32 2147483647, %v2545
        %v2548 = vcvt.s32.f32 %v2541
        %v2549 = vmul.f32 %v2548, %v2546
        %v2550 = vxor.u32 %v2549, 2147483648
        %v2551 = vsel %vm2430, %v2550, %v2549
        %v2552 = vsub.s32 4, %v2528
        %v2553 = vsel %vm2430, %v2552, %v2528
        %v2554 = vsel %vm2429, %v1804, %v2551
        %v2555 = vsel %vm2429, 0, %v2553
        %v2556 = vmul.f32 %v2554, %v2554
        %v2557 = vmul.f32 %v2556, -0.001358992
        %v2558 = vadd.f32 %v2557, 0.041655596
        %v2559 = vmul.f32 %v2556, %v2558
        %v2560 = vadd.f32 %v2559, -0.4999988
        %v2561 = vmul.f32 %v2556, %v2560
        %v2562 = vadd.f32 1.0, %v2561
        %v2563 = vmul.f32 %v2554, %v2554
        %v2564 = vmul.f32 %v2563, -0.00019511016
        %v2565 = vadd.f32 %v2564, 0.008332121
        %v2566 = vmul.f32 %v2563, %v2565
        %v2567 = vadd.f32 %v2566, -0.16666654
        %v2568 = vmul.f32 %v2563, %v2567
        %v2569 = vadd.f32 %v2568, 1.0
        %v2570 = vmul.f32 %v2569, %v2554
        %vm2571 = vweird.f32 %v1804
        %v2572 = vadd.s32 %v2555, 3
        %v2573 = vand.u32 %v2572, 3
        %vm2574 = vcmp.lt.s32.totalorder %v2573, 2
        %vm2575 = vcmp.eq.s32.totalorder %v2573, 0
        %v2576 = vxor.u32 %v2570, 2147483648
        %v2577 = vsel %vm2575, %v2562, %v2576
        %vm2578 = vcmp.eq.s32.totalorder %v2573, 2
        %v2579 = vxor.u32 %v2562, 2147483648
        %v2580 = vsel %vm2578, %v2579, %v2570
        %v2581 = vsel %vm2574, %v2577, %v2580
        %v2582 = vsel %vm2571, nan, %v2581
        %v2583 = vand.u32 2147483647, %v1805
        %vm2584 = vcmp.le.f32.partialorder %v2583, 0.7853982
        %vm2585 = vcmp.lt.s32.totalorder %v1805, 0
        %v2586 = vand.u32 %v1805, 2139095040
        %v2587 = vshrl.u32 %v2586, 23
        %v2588 = vsub.s32 %v2587, 127
        %v2589 = vand.u32 2147483647, %v1805
        %v2590 = vand.u32 %v2589, 8388607
        %v2591 = vor.u32 %v2590, 8388608
        %v2592 = vsub.s32 0, %v2591
        %v2593 = vadd.s32 %v2588, 1
        %vm2594 = vcmp.gt.s32.totalorder %v2593, 0
        %v2595 = vsel %vm2594, %v2593, 0
        %v2596 = vshrl.u32 %v2595, 5
        %v2597 = vand.u32 %v2595, 31
        %v2598 = vsub.s32 32, %v2597
        %v2599 = vshrl.u32 683565275, %v2598
        %v2600 = vshll.u32 683565275, %v2597
        %v2601 = vshrl.u32 2475754826, %v2598
        %v2602 = vor.u32 %v2600, %v2601
        %v2603 = vshll.u32 2475754826, %v2597
        %v2604 = vshrl.u32 2131351028, %v2598
        %v2605 = vor.u32 %v2603, %v2604
        %v2606 = vshll.u32 2131351028, %v2597
        %v2607 = vshrl.u32 2102212464, %v2598
        %v2608 = vor.u32 %v2606, %v2607
        %v2609 = vshll.u32 2102212464, %v2597
        %v2610 = vshrl.u32 920167782, %v2598
        %v2611 = vor.u32 %v2609, %v2610
        %v2612 = vshll.u32 920167782, %v2597
        %v2613 = vshrl.u32 1326507024, %v2598
        %v2614 = vor.u32 %v2612, %v2613
        %vm2615 = vcmp.lt.s32.totalorder %v2596, 1
        %vm2616 = vcmp.lt.s32.totalorder %v2596, 2
        %vm2617 = vcmp.lt.s32.totalorder %v2596, 3
        %vm2618 = vcmp.lt.s32.totalorder %v2596, 4
        %v2619 = vsel %vm2615, %v2599, %v2602
        %v2620 = vsel %vm2618, %v2608, 2102212464
        %v2621 = vsel %vm2617, %v2605, %v2620
        %v2622 = vsel %vm2616, %v2619, %v2621
        %v2623 = vsel %vm2615, %v2602, %v2605
        %v2624 = vsel %vm2618, %v2611, 920167782
        %v2625 = vsel %vm2617, %v2608, %v2624
        %v2626 = vsel %vm2616, %v2623, %v2625
        %v2627 = vsel %vm2615, %v2605, %v2608
        %v2628 = vsel %vm2618, %v2614, 1326507024
        %v2629 = vsel %vm2617, %v2611, %v2628
        %v2630 = vsel %vm2616, %v2627, %v2629
        %v2631 = vshll.u32 %v2591, 8
        %v2632 = vand.u32 %v2631, 65535
        %v2633 = vshrl.u32 %v2631, 16
        %v2634 = vand.u32 %v2630, 65535
        %v2635 = vshrl.u32 %v2630, 16
        %v2636 = vmul.u32 %v2632, %v2634
        %v2637 = vmul.u32 %v2632, %v2635
        %v2638 = vmul.u32 %v2633, %v2634
        %v2639 = vmul.u32 %v2633, %v2635
        %v2640 = vshll.u32 %v2637, 16
        %v2641 = vshrl.u32 %v2637, 16
        %v2642 = vshll.u32 %v2638, 16
        %v2643 = vshrl.u32 %v2638, 16
        %vm2644 = vc.u32 %v2636, %v2640
        %v2645 = vsel %vm2644, 1, 0
        %v2646 = vadd.s32 %v2636, %v2640
        %v2647 = vadd.s32 %v2639, %v2645
        %vm2648 = vc.u32 %v2646, %v2642
        %v2649 = vsel %vm2648, 1, 0
        %v2650 = vadd.s32 %v2646, %v2642
        %v2651 = vadd.s32 %v2647, %v2649
        %v2652 = vadd.s32 %v2651, %v2641
        %v2653 = vadd.s32 %v2652, %v2643
        %v2654 = vand.u32 %v2631, 65535
        %v2655 = vshrl.u32 %v2631, 16
        %v2656 = vand.u32 %v2626, 65535
        %v2657 = vshrl.u32 %v2626, 16
        %v2658 = vmul.u32 %v2654, %v2656
        %v2659 = vmul.u32 %v2654, %v2657
        %v2660 = vmul.u32 %v2655, %v2656
        %v2661 = vmul.u32 %v2655, %v2657
        %v2662 = vshll.u32 %v2659, 16
        %v2663 = vshrl.u32 %v2659, 16
        %v2664 = vshll.u32 %v2660, 16
        %v2665 = vshrl.u32 %v2660, 16
        %vm2666 = vc.u32 %v2658, %v2662
        %v2667 = vsel %vm2666, 1, 0
        %v2668 = vadd.s32 %v2658, %v2662
        %v2669 = vadd.s32 %v2661, %v2667
        %vm2670 = vc.u32 %v2668, %v2664
        %v2671 = vsel %vm2670, 1, 0
        %v2672 = vadd.s32 %v2668, %v2664
        %v2673 = vadd.s32 %v2669, %v2671
        %v2674 = vadd.s32 %v2673, %v2663
        %v2675 = vadd.s32 %v2674, %v2665
        %v2676 = vmul.u32 %v2631, %v2622
        %v2677 = vadd.s32 %v2653, %v2672
        %vm2678 = vc.u32 %v2653, %v2672
        %v2679 = vadd.s32 %v2675, 1
        %v2680 = vsel %vm2678, %v2679, %v2675
        %v2681 = vadd.s32 %v2676, %v2680
        %v2682 = vadd.s32 %v2681, 536870912
        %v2683 = vshrl.u32 %v2682, 30
        %v2684 = vshll.u32 %v2683, 30
        %v2685 = vsub.s32 %v2681, %v2684
        %vm2686 = vcmp.lt.s32.totalorder %v2685, 0
        %v2687 = vsub.s32 0, %v2685
        %v2688 = vsel %vm2686, %v2687, %v2685
        %v2689 = vclz %v2688
        %v2690 = vsub.s32 %v2689, 2
        %vm2691 = vcmp.gt.s32.totalorder 0, %v2690
        %v2692 = vsel %vm2691, 0, %v2690
        %v2693 = vsub.s32 32, %v2692
        %v2694 = vshll.u32 %v2685, %v2692
        %v2695 = vshrl.u32 %v2677, %v2693
        %v2696 = vor.u32 %v2694, %v2695
        %v2697 = vsub.s32 4294967266, %v2692
        %v2698 = vadd.s32 %v2697, 127
        %v2699 = vshll.u32 %v2698, 23
        %v2700 = vor.u32 4788187, %v2699
        %v2701 = vand.u32 2147483647, %v2700
        %v2703 = vcvt.s32.f32 %v2696
        %v2704 = vmul.f32 %v2703, %v2701
        %v2705 = vxor.u32 %v2704, 2147483648
        %v2706 = vsel %vm2585, %v2705, %v2704
        %v2707 = vsub.s32 4, %v2683
        %v2708 = vsel %vm2585, %v2707, %v2683
        %v2709 = vsel %vm2584, %v1805, %v2706
        %v2710 = vsel %vm2584, 0, %v2708
        %v2711 = vmul.f32 %v2709, %v2709
        %v2712 = vmul.f32 %v2711, -0.001358992
        %v2713 = vadd.f32 %v2712, 0.041655596
        %v2714 = vmul.f32 %v2711, %v2713
        %v2715 = vadd.f32 %v2714, -0.4999988
        %v2716 = vmul.f32 %v2711, %v2715
        %v2717 = vadd.f32 1.0, %v2716
        %v2718 = vmul.f32 %v2709, %v2709
        %v2719 = vmul.f32 %v2718, -0.00019511016
        %v2720 = vadd.f32 %v2719, 0.008332121
        %v2721 = vmul.f32 %v2718, %v2720
        %v2722 = vadd.f32 %v2721, -0.16666654
        %v2723 = vmul.f32 %v2718, %v2722
        %v2724 = vadd.f32 %v2723, 1.0
        %v2725 = vmul.f32 %v2724, %v2709
        %vm2726 = vweird.f32 %v1805
        %v2727 = vadd.s32 %v2710, 3
        %v2728 = vand.u32 %v2727, 3
        %vm2729 = vcmp.lt.s32.totalorder %v2728, 2
        %vm2730 = vcmp.eq.s32.totalorder %v2728, 0
        %v2731 = vxor.u32 %v2725, 2147483648
        %v2732 = vsel %vm2730, %v2717, %v2731
        %vm2733 = vcmp.eq.s32.totalorder %v2728, 2
        %v2734 = vxor.u32 %v2717, 2147483648
        %v2735 = vsel %vm2733, %v2734, %v2725
        %v2736 = vsel %vm2729, %v2732, %v2735
        %v2737 = vsel %vm2726, nan, %v2736
        %v2738 = vand.u32 2147483647, %v1806
        %vm2739 = vcmp.le.f32.partialorder %v2738, 0.7853982
        %vm2740 = vcmp.lt.s32.totalorder %v1806, 0
        %v2741 = vand.u32 %v1806, 2139095040
        %v2742 = vshrl.u32 %v2741, 23
        %v2743 = vsub.s32 %v2742, 127
        %v2744 = vand.u32 2147483647, %v1806
        %v2745 = vand.u32 %v2744, 8388607
        %v2746 = vor.u32 %v2745, 8388608
        %v2747 = vsub.s32 0, %v2746
        %v2748 = vadd.s32 %v2743, 1
        %vm2749 = vcmp.gt.s32.totalorder %v2748, 0
        %v2750 = vsel %vm2749, %v2748, 0
        %v2751 = vshrl.u32 %v2750, 5
        %v2752 = vand.u32 %v2750, 31
        %v2753 = vsub.s32 32, %v2752
        %v2754 = vshrl.u32 683565275, %v2753
        %v2755 = vshll.u32 683565275, %v2752
        %v2756 = vshrl.u32 2475754826, %v2753
        %v2757 = vor.u32 %v2755, %v2756
        %v2758 = vshll.u32 2475754826, %v2752
        %v2759 = vshrl.u32 2131351028, %v2753
        %v2760 = vor.u32 %v2758, %v2759
        %v2761 = vshll.u32 2131351028, %v2752
        %v2762 = vshrl.u32 2102212464, %v2753
        %v2763 = vor.u32 %v2761, %v2762
        %v2764 = vshll.u32 2102212464, %v2752
        %v2765 = vshrl.u32 920167782, %v2753
        %v2766 = vor.u32 %v2764, %v2765
        %v2767 = vshll.u32 920167782, %v2752
        %v2768 = vshrl.u32 1326507024, %v2753
        %v2769 = vor.u32 %v2767, %v2768
        %vm2770 = vcmp.lt.s32.totalorder %v2751, 1
        %vm2771 = vcmp.lt.s32.totalorder %v2751, 2
        %vm2772 = vcmp.lt.s32.totalorder %v2751, 3
        %vm2773 = vcmp.lt.s32.totalorder %v2751, 4
        %v2774 = vsel %vm2770, %v2754, %v2757
        %v2775 = vsel %vm2773, %v2763, 2102212464
        %v2776 = vsel %vm2772, %v2760, %v2775
        %v2777 = vsel %vm2771, %v2774, %v2776
        %v2778 = vsel %vm2770, %v2757, %v2760
        %v2779 = vsel %vm2773, %v2766, 920167782
        %v2780 = vsel %vm2772, %v2763, %v2779
        %v2781 = vsel %vm2771, %v2778, %v2780
        %v2782 = vsel %vm2770, %v2760, %v2763
        %v2783 = vsel %vm2773, %v2769, 1326507024
        %v2784 = vsel %vm2772, %v2766, %v2783
        %v2785 = vsel %vm2771, %v2782, %v2784
        %v2786 = vshll.u32 %v2746, 8
        %v2787 = vand.u32 %v2786, 65535
        %v2788 = vshrl.u32 %v2786, 16
        %v2789 = vand.u32 %v2785, 65535
        %v2790 = vshrl.u32 %v2785, 16
        %v2791 = vmul.u32 %v2787, %v2789
        %v2792 = vmul.u32 %v2787, %v2790
        %v2793 = vmul.u32 %v2788, %v2789
        %v2794 = vmul.u32 %v2788, %v2790
        %v2795 = vshll.u32 %v2792, 16
        %v2796 = vshrl.u32 %v2792, 16
        %v2797 = vshll.u32 %v2793, 16
        %v2798 = vshrl.u32 %v2793, 16
        %vm2799 = vc.u32 %v2791, %v2795
        %v2800 = vsel %vm2799, 1, 0
        %v2801 = vadd.s32 %v2791, %v2795
        %v2802 = vadd.s32 %v2794, %v2800
        %vm2803 = vc.u32 %v2801, %v2797
        %v2804 = vsel %vm2803, 1, 0
        %v2805 = vadd.s32 %v2801, %v2797
        %v2806 = vadd.s32 %v2802, %v2804
        %v2807 = vadd.s32 %v2806, %v2796
        %v2808 = vadd.s32 %v2807, %v2798
        %v2809 = vand.u32 %v2786, 65535
        %v2810 = vshrl.u32 %v2786, 16
        %v2811 = vand.u32 %v2781, 65535
        %v2812 = vshrl.u32 %v2781, 16
        %v2813 = vmul.u32 %v2809, %v2811
        %v2814 = vmul.u32 %v2809, %v2812
        %v2815 = vmul.u32 %v2810, %v2811
        %v2816 = vmul.u32 %v2810, %v2812
        %v2817 = vshll.u32 %v2814, 16
        %v2818 = vshrl.u32 %v2814, 16
        %v2819 = vshll.u32 %v2815, 16
        %v2820 = vshrl.u32 %v2815, 16
        %vm2821 = vc.u32 %v2813, %v2817
        %v2822 = vsel %vm2821, 1, 0
        %v2823 = vadd.s32 %v2813, %v2817
        %v2824 = vadd.s32 %v2816, %v2822
        %vm2825 = vc.u32 %v2823, %v2819
        %v2826 = vsel %vm2825, 1, 0
        %v2827 = vadd.s32 %v2823, %v2819
        %v2828 = vadd.s32 %v2824, %v2826
        %v2829 = vadd.s32 %v2828, %v2818
        %v2830 = vadd.s32 %v2829, %v2820
        %v2831 = vmul.u32 %v2786, %v2777
        %v2832 = vadd.s32 %v2808, %v2827
        %vm2833 = vc.u32 %v2808, %v2827
        %v2834 = vadd.s32 %v2830, 1
        %v2835 = vsel %vm2833, %v2834, %v2830
        %v2836 = vadd.s32 %v2831, %v2835
        %v2837 = vadd.s32 %v2836, 536870912
        %v2838 = vshrl.u32 %v2837, 30
        %v2839 = vshll.u32 %v2838, 30
        %v2840 = vsub.s32 %v2836, %v2839
        %vm2841 = vcmp.lt.s32.totalorder %v2840, 0
        %v2842 = vsub.s32 0, %v2840
        %v2843 = vsel %vm2841, %v2842, %v2840
        %v2844 = vclz %v2843
        %v2845 = vsub.s32 %v2844, 2
        %vm2846 = vcmp.gt.s32.totalorder 0, %v2845
        %v2847 = vsel %vm2846, 0, %v2845
        %v2848 = vsub.s32 32, %v2847
        %v2849 = vshll.u32 %v2840, %v2847
        %v2850 = vshrl.u32 %v2832, %v2848
        %v2851 = vor.u32 %v2849, %v2850
        %v2852 = vsub.s32 4294967266, %v2847
        %v2853 = vadd.s32 %v2852, 127
        %v2854 = vshll.u32 %v2853, 23
        %v2855 = vor.u32 4788187, %v2854
        %v2856 = vand.u32 2147483647, %v2855
        %v2858 = vcvt.s32.f32 %v2851
        %v2859 = vmul.f32 %v2858, %v2856
        %v2860 = vxor.u32 %v2859, 2147483648
        %v2861 = vsel %vm2740, %v2860, %v2859
        %v2862 = vsub.s32 4, %v2838
        %v2863 = vsel %vm2740, %v2862, %v2838
        %v2864 = vsel %vm2739, %v1806, %v2861
        %v2865 = vsel %vm2739, 0, %v2863
        %v2866 = vmul.f32 %v2864, %v2864
        %v2867 = vmul.f32 %v2866, -0.001358992
        %v2868 = vadd.f32 %v2867, 0.041655596
        %v2869 = vmul.f32 %v2866, %v2868
        %v2870 = vadd.f32 %v2869, -0.4999988
        %v2871 = vmul.f32 %v2866, %v2870
        %v2872 = vadd.f32 1.0, %v2871
        %v2873 = vmul.f32 %v2864, %v2864
        %v2874 = vmul.f32 %v2873, -0.00019511016
        %v2875 = vadd.f32 %v2874, 0.008332121
        %v2876 = vmul.f32 %v2873, %v2875
        %v2877 = vadd.f32 %v2876, -0.16666654
        %v2878 = vmul.f32 %v2873, %v2877
        %v2879 = vadd.f32 %v2878, 1.0
        %v2880 = vmul.f32 %v2879, %v2864
        %vm2881 = vweird.f32 %v1806
        %v2882 = vadd.s32 %v2865, 3
        %v2883 = vand.u32 %v2882, 3
        %vm2884 = vcmp.lt.s32.totalorder %v2883, 2
        %vm2885 = vcmp.eq.s32.totalorder %v2883, 0
        %v2886 = vxor.u32 %v2880, 2147483648
        %v2887 = vsel %vm2885, %v2872, %v2886
        %vm2888 = vcmp.eq.s32.totalorder %v2883, 2
        %v2889 = vxor.u32 %v2872, 2147483648
        %v2890 = vsel %vm2888, %v2889, %v2880
        %v2891 = vsel %vm2884, %v2887, %v2890
        %v2892 = vsel %vm2881, nan, %v2891
        %v2893 = vand.u32 2147483647, %v1807
        %vm2894 = vcmp.le.f32.partialorder %v2893, 0.7853982
        %vm2895 = vcmp.lt.s32.totalorder %v1807, 0
        %v2896 = vand.u32 %v1807, 2139095040
        %v2897 = vshrl.u32 %v2896, 23
        %v2898 = vsub.s32 %v2897, 127
        %v2899 = vand.u32 2147483647, %v1807
        %v2900 = vand.u32 %v2899, 8388607
        %v2901 = vor.u32 %v2900, 8388608
        %v2902 = vsub.s32 0, %v2901
        %v2903 = vadd.s32 %v2898, 1
        %vm2904 = vcmp.gt.s32.totalorder %v2903, 0
        %v2905 = vsel %vm2904, %v2903, 0
        %v2906 = vshrl.u32 %v2905, 5
        %v2907 = vand.u32 %v2905, 31
        %v2908 = vsub.s32 32, %v2907
        %v2909 = vshrl.u32 683565275, %v2908
        %v2910 = vshll.u32 683565275, %v2907
        %v2911 = vshrl.u32 2475754826, %v2908
        %v2912 = vor.u32 %v2910, %v2911
        %v2913 = vshll.u32 2475754826, %v2907
        %v2914 = vshrl.u32 2131351028, %v2908
        %v2915 = vor.u32 %v2913, %v2914
        %v2916 = vshll.u32 2131351028, %v2907
        %v2917 = vshrl.u32 2102212464, %v2908
        %v2918 = vor.u32 %v2916, %v2917
        %v2919 = vshll.u32 2102212464, %v2907
        %v2920 = vshrl.u32 920167782, %v2908
        %v2921 = vor.u32 %v2919, %v2920
        %v2922 = vshll.u32 920167782, %v2907
        %v2923 = vshrl.u32 1326507024, %v2908
        %v2924 = vor.u32 %v2922, %v2923
        %vm2925 = vcmp.lt.s32.totalorder %v2906, 1
        %vm2926 = vcmp.lt.s32.totalorder %v2906, 2
        %vm2927 = vcmp.lt.s32.totalorder %v2906, 3
        %vm2928 = vcmp.lt.s32.totalorder %v2906, 4
        %v2929 = vsel %vm2925, %v2909, %v2912
        %v2930 = vsel %vm2928, %v2918, 2102212464
        %v2931 = vsel %vm2927, %v2915, %v2930
        %v2932 = vsel %vm2926, %v2929, %v2931
        %v2933 = vsel %vm2925, %v2912, %v2915
        %v2934 = vsel %vm2928, %v2921, 920167782
        %v2935 = vsel %vm2927, %v2918, %v2934
        %v2936 = vsel %vm2926, %v2933, %v2935
        %v2937 = vsel %vm2925, %v2915, %v2918
        %v2938 = vsel %vm2928, %v2924, 1326507024
        %v2939 = vsel %vm2927, %v2921, %v2938
        %v2940 = vsel %vm2926, %v2937, %v2939
        %v2941 = vshll.u32 %v2901, 8
        %v2942 = vand.u32 %v2941, 65535
        %v2943 = vshrl.u32 %v2941, 16
        %v2944 = vand.u32 %v2940, 65535
        %v2945 = vshrl.u32 %v2940, 16
        %v2946 = vmul.u32 %v2942, %v2944
        %v2947 = vmul.u32 %v2942, %v2945
        %v2948 = vmul.u32 %v2943, %v2944
        %v2949 = vmul.u32 %v2943, %v2945
        %v2950 = vshll.u32 %v2947, 16
        %v2951 = vshrl.u32 %v2947, 16
        %v2952 = vshll.u32 %v2948, 16
        %v2953 = vshrl.u32 %v2948, 16
        %vm2954 = vc.u32 %v2946, %v2950
        %v2955 = vsel %vm2954, 1, 0
        %v2956 = vadd.s32 %v2946, %v2950
        %v2957 = vadd.s32 %v2949, %v2955
        %vm2958 = vc.u32 %v2956, %v2952
        %v2959 = vsel %vm2958, 1, 0
        %v2960 = vadd.s32 %v2956, %v2952
        %v2961 = vadd.s32 %v2957, %v2959
        %v2962 = vadd.s32 %v2961, %v2951
        %v2963 = vadd.s32 %v2962, %v2953
        %v2964 = vand.u32 %v2941, 65535
        %v2965 = vshrl.u32 %v2941, 16
        %v2966 = vand.u32 %v2936, 65535
        %v2967 = vshrl.u32 %v2936, 16
        %v2968 = vmul.u32 %v2964, %v2966
        %v2969 = vmul.u32 %v2964, %v2967
        %v2970 = vmul.u32 %v2965, %v2966
        %v2971 = vmul.u32 %v2965, %v2967
        %v2972 = vshll.u32 %v2969, 16
        %v2973 = vshrl.u32 %v2969, 16
        %v2974 = vshll.u32 %v2970, 16
        %v2975 = vshrl.u32 %v2970, 16
        %vm2976 = vc.u32 %v2968, %v2972
        %v2977 = vsel %vm2976, 1, 0
        %v2978 = vadd.s32 %v2968, %v2972
        %v2979 = vadd.s32 %v2971, %v2977
        %vm2980 = vc.u32 %v2978, %v2974
        %v2981 = vsel %vm2980, 1, 0
        %v2982 = vadd.s32 %v2978, %v2974
        %v2983 = vadd.s32 %v2979, %v2981
        %v2984 = vadd.s32 %v2983, %v2973
        %v2985 = vadd.s32 %v2984, %v2975
        %v2986 = vmul.u32 %v2941, %v2932
        %v2987 = vadd.s32 %v2963, %v2982
        %vm2988 = vc.u32 %v2963, %v2982
        %v2989 = vadd.s32 %v2985, 1
        %v2990 = vsel %vm2988, %v2989, %v2985
        %v2991 = vadd.s32 %v2986, %v2990
        %v2992 = vadd.s32 %v2991, 536870912
        %v2993 = vshrl.u32 %v2992, 30
        %v2994 = vshll.u32 %v2993, 30
        %v2995 = vsub.s32 %v2991, %v2994
        %vm2996 = vcmp.lt.s32.totalorder %v2995, 0
        %v2997 = vsub.s32 0, %v2995
        %v2998 = vsel %vm2996, %v2997, %v2995
        %v2999 = vclz %v2998
        %v3000 = vsub.s32 %v2999, 2
        %vm3001 = vcmp.gt.s32.totalorder 0, %v3000
        %v3002 = vsel %vm3001, 0, %v3000
        %v3003 = vsub.s32 32, %v3002
        %v3004 = vshll.u32 %v2995, %v3002
        %v3005 = vshrl.u32 %v2987, %v3003
        %v3006 = vor.u32 %v3004, %v3005
        %v3007 = vsub.s32 4294967266, %v3002
        %v3008 = vadd.s32 %v3007, 127
        %v3009 = vshll.u32 %v3008, 23
        %v3010 = vor.u32 4788187, %v3009
        %v3011 = vand.u32 2147483647, %v3010
        %v3013 = vcvt.s32.f32 %v3006
        %v3014 = vmul.f32 %v3013, %v3011
        %v3015 = vxor.u32 %v3014, 2147483648
        %v3016 = vsel %vm2895, %v3015, %v3014
        %v3017 = vsub.s32 4, %v2993
        %v3018 = vsel %vm2895, %v3017, %v2993
        %v3019 = vsel %vm2894, %v1807, %v3016
        %v3020 = vsel %vm2894, 0, %v3018
        %v3021 = vmul.f32 %v3019, %v3019
        %v3022 = vmul.f32 %v3021, -0.001358992
        %v3023 = vadd.f32 %v3022, 0.041655596
        %v3024 = vmul.f32 %v3021, %v3023
        %v3025 = vadd.f32 %v3024, -0.4999988
        %v3026 = vmul.f32 %v3021, %v3025
        %v3027 = vadd.f32 1.0, %v3026
        %v3028 = vmul.f32 %v3019, %v3019
        %v3029 = vmul.f32 %v3028, -0.00019511016
        %v3030 = vadd.f32 %v3029, 0.008332121
        %v3031 = vmul.f32 %v3028, %v3030
        %v3032 = vadd.f32 %v3031, -0.16666654
        %v3033 = vmul.f32 %v3028, %v3032
        %v3034 = vadd.f32 %v3033, 1.0
        %v3035 = vmul.f32 %v3034, %v3019
        %vm3036 = vweird.f32 %v1807
        %v3037 = vadd.s32 %v3020, 3
        %v3038 = vand.u32 %v3037, 3
        %vm3039 = vcmp.lt.s32.totalorder %v3038, 2
        %vm3040 = vcmp.eq.s32.totalorder %v3038, 0
        %v3041 = vxor.u32 %v3035, 2147483648
        %v3042 = vsel %vm3040, %v3027, %v3041
        %vm3043 = vcmp.eq.s32.totalorder %v3038, 2
        %v3044 = vxor.u32 %v3027, 2147483648
        %v3045 = vsel %vm3043, %v3044, %v3035
        %v3046 = vsel %vm3039, %v3042, %v3045
        %v3047 = vsel %vm3036, nan, %v3046
        %v3048 = vsub.f32 0.0, %v1962
        %v3049 = vsub.f32 0.0, %v2117
        %v3050 = vsub.f32 0.0, %v2272
        %v3051 = vsub.f32 0.0, %v2427
        %v3052 = vsub.f32 0.0, %v2582
        %v3053 = vsub.f32 0.0, %v2737
        %v3054 = vsub.f32 0.0, %v2892
        %v3055 = vsub.f32 0.0, %v3047
        %v3056 = vmul.f32 %v1584, %v3048
        %v3057 = vmul.f32 %v1585, %v3049
        %v3058 = vmul.f32 %v1586, %v3050
        %v3059 = vmul.f32 %v1587, %v3051
        %v3060 = vmul.f32 %v1588, %v3052
        %v3061 = vmul.f32 %v1589, %v3053
        %v3062 = vmul.f32 %v1590, %v3054
        %v3063 = vmul.f32 %v1591, %v3055
        %v3064 = vmul.f32 %v1668, %v3048
        %v3065 = vmul.f32 %v1697, %v3049
        %v3066 = vmul.f32 %v1671, %v3050
        %v3067 = vmul.f32 %v1700, %v3051
        %v3068 = vmul.f32 %v1674, %v3052
        %v3069 = vmul.f32 %v1703, %v3053
        %v3070 = vmul.f32 %v1677, %v3054
        %v3071 = vmul.f32 %v1706, %v3055
        %v3072 = vld [vmem:[#allocation13] sm:$0xff]
        %v3073 = vld [vmem:[#allocation13 + $0x8] sm:$0xff]
        %v3074 = vld [vmem:[#allocation13 + $0x10] sm:$0xff]
        %v3075 = vld [vmem:[#allocation13 + $0x18] sm:$0xff]
        %v3076 = vld [vmem:[#allocation13 + $0x20] sm:$0xff]
        %v3077 = vld [vmem:[#allocation13 + $0x28] sm:$0xff]
        %v3078 = vld [vmem:[#allocation13 + $0x30] sm:$0xff]
        %v3079 = vld [vmem:[#allocation13 + $0x38] sm:$0xff]
        %v3080 = vld [vmem:[#allocation13 + $0x40] sm:$0xff]
        %v3081 = vld [vmem:[#allocation13 + $0x48] sm:$0xff]
        %v3082 = vld [vmem:[#allocation13 + $0x50] sm:$0xff]
        %v3083 = vld [vmem:[#allocation13 + $0x58] sm:$0xff]
        %v3084 = vld [vmem:[#allocation13 + $0x60] sm:$0xff]
        %v3085 = vld [vmem:[#allocation13 + $0x68] sm:$0xff]
        %v3086 = vld [vmem:[#allocation13 + $0x70] sm:$0xff]
        %v3087 = vld [vmem:[#allocation13 + $0x78] sm:$0xff]
        %v3088 = vld [vmem:[#allocation13 + $0x80] sm:$0xff]
        %v3089 = vld [vmem:[#allocation13 + $0x88] sm:$0xff]
        %v3090 = vld [vmem:[#allocation13 + $0x90] sm:$0xff]
        %v3091 = vld [vmem:[#allocation13 + $0x98] sm:$0xff]
        %v3092 = vld [vmem:[#allocation13 + $0xa0] sm:$0xff]
        %v3093 = vld [vmem:[#allocation13 + $0xa8] sm:$0xff]
        %v3094 = vld [vmem:[#allocation13 + $0xb0] sm:$0xff]
        %v3095 = vld [vmem:[#allocation13 + $0xb8] sm:$0xff]
        %v3096 = vld [vmem:[#allocation13 + $0xc0] sm:$0xff]
        %v3097 = vld [vmem:[#allocation13 + $0xc8] sm:$0xff]
        %v3098 = vld [vmem:[#allocation13 + $0xd0] sm:$0xff]
        %v3099 = vld [vmem:[#allocation13 + $0xd8] sm:$0xff]
        %v3100 = vld [vmem:[#allocation13 + $0xe0] sm:$0xff]
        %v3101 = vld [vmem:[#allocation13 + $0xe8] sm:$0xff]
        %v3102 = vld [vmem:[#allocation13 + $0xf0] sm:$0xff]
        %v3103 = vld [vmem:[#allocation13 + $0xf8] sm:$0xff]
        %3104 = vmatpush.msra.mxu0 %v3087
        %3105 = vmatpush.msra.mxu0 %v3086
        %3106 = vmatpush.msra.mxu0 %v3085
        %3107 = vmatpush.msra.mxu0 %v3084
        %3108 = vmatpush.msra.mxu0 %v3083
        %3109 = vmatpush.msra.mxu0 %v3082
        %3110 = vmatpush.msra.mxu0 %v3081
        %3111 = vmatpush.msra.mxu0 %v3080
        %3112 = vmatpush.msra.mxu0 %v3079
        %3113 = vmatpush.msra.mxu0 %v3078
        %3114 = vmatpush.msra.mxu0 %v3077
        %3115 = vmatpush.msra.mxu0 %v3076
        %3116 = vmatpush.msra.mxu0 %v3075
        %3117 = vmatpush.msra.mxu0 %v3074
        %3118 = vmatpush.msra.mxu0 %v3073
        %3119 = vmatpush.msra.mxu0 %v3072
        %3120 = vmatmul.f32.gmra.mxu0 %v3058
        %v3121 = vpop.f32.mrf.mxu0
        %v3122 = vadd.f32 0.0, %v3121
        %3123 = vmatmul.f32.gmra.mxu0 %v3060
        %v3124 = vpop.f32.mrf.mxu0
        %v3125 = vadd.f32 0.0, %v3124
        %3126 = vdwg.mxu0
        %3127 = vmatpush.msra.mxu0 %v3103
        %3128 = vmatpush.msra.mxu0 %v3102
        %3129 = vmatpush.msra.mxu0 %v3101
        %3130 = vmatpush.msra.mxu0 %v3100
        %3131 = vmatpush.msra.mxu0 %v3099
        %3132 = vmatpush.msra.mxu0 %v3098
        %3133 = vmatpush.msra.mxu0 %v3097
        %3134 = vmatpush.msra.mxu0 %v3096
        %3135 = vmatpush.msra.mxu0 %v3095
        %3136 = vmatpush.msra.mxu0 %v3094
        %3137 = vmatpush.msra.mxu0 %v3093
        %3138 = vmatpush.msra.mxu0 %v3092
        %3139 = vmatpush.msra.mxu0 %v3091
        %3140 = vmatpush.msra.mxu0 %v3090
        %3141 = vmatpush.msra.mxu0 %v3089
        %3142 = vmatpush.msra.mxu0 %v3088
        %3143 = vmatmul.f32.gmra.mxu0 %v3059
        %v3144 = vpop.f32.mrf.mxu0
        %v3145 = vadd.f32 %v3122, %v3144
        %3146 = vmatmul.f32.gmra.mxu0 %v3061
        %v3147 = vpop.f32.mrf.mxu0
        %v3148 = vadd.f32 %v3125, %v3147
        %3149 = vdwg.mxu0
        %3150 = vst [vmem:[%s882] sm:$0xff] %v3145
        %3151 = vst [vmem:[%s882 + $0x8] sm:$0xff] %v3148
        %3152 = vmatpush.msra.mxu0 %v3087
        %3153 = vmatpush.msra.mxu0 %v3086
        %3154 = vmatpush.msra.mxu0 %v3085
        %3155 = vmatpush.msra.mxu0 %v3084
        %3156 = vmatpush.msra.mxu0 %v3083
        %3157 = vmatpush.msra.mxu0 %v3082
        %3158 = vmatpush.msra.mxu0 %v3081
        %3159 = vmatpush.msra.mxu0 %v3080
        %3160 = vmatpush.msra.mxu0 %v3079
        %3161 = vmatpush.msra.mxu0 %v3078
        %3162 = vmatpush.msra.mxu0 %v3077
        %3163 = vmatpush.msra.mxu0 %v3076
        %3164 = vmatpush.msra.mxu0 %v3075
        %3165 = vmatpush.msra.mxu0 %v3074
        %3166 = vmatpush.msra.mxu0 %v3073
        %3167 = vmatpush.msra.mxu0 %v3072
        %3168 = vmatmul.f32.gmra.mxu0 %v3066
        %v3169 = vpop.f32.mrf.mxu0
        %v3170 = vadd.f32 0.0, %v3169
        %3171 = vmatmul.f32.gmra.mxu0 %v3068
        %v3172 = vpop.f32.mrf.mxu0
        %v3173 = vadd.f32 0.0, %v3172
        %3174 = vdwg.mxu0
        %3175 = vmatpush.msra.mxu0 %v3103
        %3176 = vmatpush.msra.mxu0 %v3102
        %3177 = vmatpush.msra.mxu0 %v3101
        %3178 = vmatpush.msra.mxu0 %v3100
        %3179 = vmatpush.msra.mxu0 %v3099
        %3180 = vmatpush.msra.mxu0 %v3098
        %3181 = vmatpush.msra.mxu0 %v3097
        %3182 = vmatpush.msra.mxu0 %v3096
        %3183 = vmatpush.msra.mxu0 %v3095
        %3184 = vmatpush.msra.mxu0 %v3094
        %3185 = vmatpush.msra.mxu0 %v3093
        %3186 = vmatpush.msra.mxu0 %v3092
        %3187 = vmatpush.msra.mxu0 %v3091
        %3188 = vmatpush.msra.mxu0 %v3090
        %3189 = vmatpush.msra.mxu0 %v3089
        %3190 = vmatpush.msra.mxu0 %v3088
        %3191 = vmatmul.f32.gmra.mxu0 %v3067
        %v3192 = vpop.f32.mrf.mxu0
        %v3193 = vadd.f32 %v3170, %v3192
        %3194 = vmatmul.f32.gmra.mxu0 %v3069
        %v3195 = vpop.f32.mrf.mxu0
        %v3196 = vadd.f32 %v3173, %v3195
        %3197 = vdwg.mxu0
        %3198 = vst [vmem:[%s888] sm:$0xff] %v3193
        %3199 = vst [vmem:[%s888 + $0x8] sm:$0xff] %v3196
        %v3200 = vld [vmem:[%s13] sm:$0xff]
        %v3201 = vld [vmem:[%s13 + $0x8] sm:$0xff]
        %v3202 = vld [vmem:[%s14] sm:$0xff]
        %v3203 = vld [vmem:[%s14 + $0x8] sm:$0xff]
        %vm3204 = vcmask 261120
        %v3206 = vsel %vm3204, %v3200, 0
        %v3209 = vsel %vm3204, %v3201, 0
        %3211 = vmatpush.msra.mxu0 0.0
        %3212 = vmatpush.msra.mxu0 0.0
        %3213 = vmatpush.msra.mxu0 0.0
        %3214 = vmatpush.msra.mxu0 0.0
        %3215 = vmatpush.msra.mxu0 0.0
        %3216 = vmatpush.msra.mxu0 0.0
        %3217 = vmatpush.msra.mxu0 0.0
        %3218 = vmatpush.msra.mxu0 0.0
        %3219 = vmatpush.msra.mxu0 0.0
        %3220 = vmatpush.msra.mxu0 0.0
        %3221 = vmatpush.msra.mxu0 0.0
        %3222 = vmatpush.msra.mxu0 0.0
        %3223 = vmatpush.msra.mxu0 %v3062
        %3224 = vmatpush.msra.mxu0 %v3060
        %3225 = vmatpush.msra.mxu0 %v3058
        %3226 = vmatpush.msra.mxu0 %v3056
        %3227 = vmatmul.f32.gmra.mxu0 %v3206
        %v3228 = vpop.f32.mrf.mxu0
        %v3229 = vadd.f32 0.0, %v3228
        %3230 = vmatmul.f32.gmra.mxu0 %v3209
        %v3231 = vpop.f32.mrf.mxu0
        %v3232 = vadd.f32 0.0, %v3231
        %3233 = vdwg.mxu0
        %3234 = vmatpush.msra.mxu0 0.0
        %3235 = vmatpush.msra.mxu0 0.0
        %3236 = vmatpush.msra.mxu0 0.0
        %3237 = vmatpush.msra.mxu0 0.0
        %3238 = vmatpush.msra.mxu0 0.0
        %3239 = vmatpush.msra.mxu0 0.0
        %3240 = vmatpush.msra.mxu0 0.0
        %3241 = vmatpush.msra.mxu0 0.0
        %3242 = vmatpush.msra.mxu0 0.0
        %3243 = vmatpush.msra.mxu0 0.0
        %3244 = vmatpush.msra.mxu0 0.0
        %3245 = vmatpush.msra.mxu0 0.0
        %3246 = vmatpush.msra.mxu0 %v3063
        %3247 = vmatpush.msra.mxu0 %v3061
        %3248 = vmatpush.msra.mxu0 %v3059
        %3249 = vmatpush.msra.mxu0 %v3057
        %3250 = vmatmul.f32.gmra.mxu0 %v3206
        %v3251 = vpop.f32.mrf.mxu0
        %v3252 = vadd.f32 0.0, %v3251
        %3253 = vmatmul.f32.gmra.mxu0 %v3209
        %v3254 = vpop.f32.mrf.mxu0
        %v3255 = vadd.f32 0.0, %v3254
        %3256 = vdwg.mxu0
        %v3258 = vsel %vm3204, %v3202, 0
        %v3261 = vsel %vm3204, %v3203, 0
        %3263 = vmatpush.msra.mxu0 0.0
        %3264 = vmatpush.msra.mxu0 0.0
        %3265 = vmatpush.msra.mxu0 0.0
        %3266 = vmatpush.msra.mxu0 0.0
        %3267 = vmatpush.msra.mxu0 0.0
        %3268 = vmatpush.msra.mxu0 0.0
        %3269 = vmatpush.msra.mxu0 0.0
        %3270 = vmatpush.msra.mxu0 0.0
        %3271 = vmatpush.msra.mxu0 0.0
        %3272 = vmatpush.msra.mxu0 0.0
        %3273 = vmatpush.msra.mxu0 0.0
        %3274 = vmatpush.msra.mxu0 0.0
        %3275 = vmatpush.msra.mxu0 %v3070
        %3276 = vmatpush.msra.mxu0 %v3068
        %3277 = vmatpush.msra.mxu0 %v3066
        %3278 = vmatpush.msra.mxu0 %v3064
        %3279 = vmatmul.f32.gmra.mxu0 %v3258
        %v3280 = vpop.f32.mrf.mxu0
        %v3281 = vadd.f32 0.0, %v3280
        %3282 = vmatmul.f32.gmra.mxu0 %v3261
        %v3283 = vpop.f32.mrf.mxu0
        %v3284 = vadd.f32 0.0, %v3283
        %3285 = vdwg.mxu0
        %3286 = vmatpush.msra.mxu0 0.0
        %3287 = vmatpush.msra.mxu0 0.0
        %3288 = vmatpush.msra.mxu0 0.0
        %3289 = vmatpush.msra.mxu0 0.0
        %3290 = vmatpush.msra.mxu0 0.0
        %3291 = vmatpush.msra.mxu0 0.0
        %3292 = vmatpush.msra.mxu0 0.0
        %3293 = vmatpush.msra.mxu0 0.0
        %3294 = vmatpush.msra.mxu0 0.0
        %3295 = vmatpush.msra.mxu0 0.0
        %3296 = vmatpush.msra.mxu0 0.0
        %3297 = vmatpush.msra.mxu0 0.0
        %3298 = vmatpush.msra.mxu0 %v3071
        %3299 = vmatpush.msra.mxu0 %v3069
        %3300 = vmatpush.msra.mxu0 %v3067
        %3301 = vmatpush.msra.mxu0 %v3065
        %3302 = vmatmul.f32.gmra.mxu0 %v3258
        %v3303 = vpop.f32.mrf.mxu0
        %v3304 = vadd.f32 0.0, %v3303
        %3305 = vmatmul.f32.gmra.mxu0 %v3261
        %v3306 = vpop.f32.mrf.mxu0
        %v3307 = vadd.f32 0.0, %v3306
        %3308 = vdwg.mxu0
        %v3309 = vsub.f32 %v3229, %v3281
        %v3310 = vsub.f32 %v3252, %v3304
        %v3311 = vsub.f32 %v3232, %v3284
        %v3312 = vsub.f32 %v3255, %v3307
        %3313 = vmatpush.msra.mxu0 0.0
        %3314 = vmatpush.msra.mxu0 0.0
        %3315 = vmatpush.msra.mxu0 0.0
        %3316 = vmatpush.msra.mxu0 0.0
        %3317 = vmatpush.msra.mxu0 0.0
        %3318 = vmatpush.msra.mxu0 0.0
        %3319 = vmatpush.msra.mxu0 0.0
        %3320 = vmatpush.msra.mxu0 0.0
        %3321 = vmatpush.msra.mxu0 0.0
        %3322 = vmatpush.msra.mxu0 0.0
        %3323 = vmatpush.msra.mxu0 0.0
        %3324 = vmatpush.msra.mxu0 0.0
        %3325 = vmatpush.msra.mxu0 %v3062
        %3326 = vmatpush.msra.mxu0 %v3060
        %3327 = vmatpush.msra.mxu0 %v3058
        %3328 = vmatpush.msra.mxu0 %v3056
        %3329 = vmatmul.f32.gmra.mxu0 %v3258
        %v3330 = vpop.f32.mrf.mxu0
        %v3331 = vadd.f32 0.0, %v3330
        %3332 = vmatmul.f32.gmra.mxu0 %v3261
        %v3333 = vpop.f32.mrf.mxu0
        %v3334 = vadd.f32 0.0, %v3333
        %3335 = vdwg.mxu0
        %3336 = vmatpush.msra.mxu0 0.0
        %3337 = vmatpush.msra.mxu0 0.0
        %3338 = vmatpush.msra.mxu0 0.0
        %3339 = vmatpush.msra.mxu0 0.0
        %3340 = vmatpush.msra.mxu0 0.0
        %3341 = vmatpush.msra.mxu0 0.0
        %3342 = vmatpush.msra.mxu0 0.0
        %3343 = vmatpush.msra.mxu0 0.0
        %3344 = vmatpush.msra.mxu0 0.0
        %3345 = vmatpush.msra.mxu0 0.0
        %3346 = vmatpush.msra.mxu0 0.0
        %3347 = vmatpush.msra.mxu0 0.0
        %3348 = vmatpush.msra.mxu0 %v3063
        %3349 = vmatpush.msra.mxu0 %v3061
        %3350 = vmatpush.msra.mxu0 %v3059
        %3351 = vmatpush.msra.mxu0 %v3057
        %3352 = vmatmul.f32.gmra.mxu0 %v3258
        %v3353 = vpop.f32.mrf.mxu0
        %v3354 = vadd.f32 0.0, %v3353
        %3355 = vmatmul.f32.gmra.mxu0 %v3261
        %v3356 = vpop.f32.mrf.mxu0
        %v3357 = vadd.f32 0.0, %v3356
        %3358 = vdwg.mxu0
        %3359 = vmatpush.msra.mxu0 0.0
        %3360 = vmatpush.msra.mxu0 0.0
        %3361 = vmatpush.msra.mxu0 0.0
        %3362 = vmatpush.msra.mxu0 0.0
        %3363 = vmatpush.msra.mxu0 0.0
        %3364 = vmatpush.msra.mxu0 0.0
        %3365 = vmatpush.msra.mxu0 0.0
        %3366 = vmatpush.msra.mxu0 0.0
        %3367 = vmatpush.msra.mxu0 0.0
        %3368 = vmatpush.msra.mxu0 0.0
        %3369 = vmatpush.msra.mxu0 0.0
        %3370 = vmatpush.msra.mxu0 0.0
        %3371 = vmatpush.msra.mxu0 %v3070
        %3372 = vmatpush.msra.mxu0 %v3068
        %3373 = vmatpush.msra.mxu0 %v3066
        %3374 = vmatpush.msra.mxu0 %v3064
        %3375 = vmatmul.f32.gmra.mxu0 %v3206
        %v3376 = vpop.f32.mrf.mxu0
        %v3377 = vadd.f32 %v3331, %v3376
        %3378 = vmatmul.f32.gmra.mxu0 %v3209
        %v3379 = vpop.f32.mrf.mxu0
        %v3380 = vadd.f32 %v3334, %v3379
        %3381 = vdwg.mxu0
        %3382 = vmatpush.msra.mxu0 0.0
        %3383 = vmatpush.msra.mxu0 0.0
        %3384 = vmatpush.msra.mxu0 0.0
        %3385 = vmatpush.msra.mxu0 0.0
        %3386 = vmatpush.msra.mxu0 0.0
        %3387 = vmatpush.msra.mxu0 0.0
        %3388 = vmatpush.msra.mxu0 0.0
        %3389 = vmatpush.msra.mxu0 0.0
        %3390 = vmatpush.msra.mxu0 0.0
        %3391 = vmatpush.msra.mxu0 0.0
        %3392 = vmatpush.msra.mxu0 0.0
        %3393 = vmatpush.msra.mxu0 0.0
        %3394 = vmatpush.msra.mxu0 %v3071
        %3395 = vmatpush.msra.mxu0 %v3069
        %3396 = vmatpush.msra.mxu0 %v3067
        %3397 = vmatpush.msra.mxu0 %v3065
        %3398 = vmatmul.f32.gmra.mxu0 %v3206
        %v3399 = vpop.f32.mrf.mxu0
        %v3400 = vadd.f32 %v3354, %v3399
        %3401 = vmatmul.f32.gmra.mxu0 %v3209
        %v3402 = vpop.f32.mrf.mxu0
        %v3403 = vadd.f32 %v3357, %v3402
        %3404 = vdwg.mxu0
        %v3405 = vld [vmem:[%s15] sm:$0xff]
        %v3406 = vld [vmem:[%s15 + $0x8] sm:$0xff]
        %v3407 = vld [vmem:[%s15 + $0x10] sm:$0xff]
        %v3408 = vld [vmem:[%s15 + $0x18] sm:$0xff]
        %v3409 = vld [vmem:[%s15 + $0x20] sm:$0xff]
        %v3410 = vld [vmem:[%s15 + $0x28] sm:$0xff]
        %v3411 = vld [vmem:[%s15 + $0x30] sm:$0xff]
        %v3412 = vld [vmem:[%s15 + $0x38] sm:$0xff]
        %v3413 = vld [vmem:[%s15 + $0x40] sm:$0xff]
        %v3414 = vld [vmem:[%s15 + $0x48] sm:$0xff]
        %v3415 = vld [vmem:[%s15 + $0x50] sm:$0xff]
        %v3416 = vld [vmem:[%s15 + $0x58] sm:$0xff]
        %v3417 = vld [vmem:[%s15 + $0x60] sm:$0xff]
        %v3418 = vld [vmem:[%s15 + $0x68] sm:$0xff]
        %v3419 = vld [vmem:[%s15 + $0x70] sm:$0xff]
        %v3420 = vld [vmem:[%s15 + $0x78] sm:$0xff]
        %v3421 = vld [vmem:[%s15 + $0x80] sm:$0xff]
        %v3422 = vld [vmem:[%s15 + $0x88] sm:$0xff]
        %v3423 = vld [vmem:[%s15 + $0x90] sm:$0xff]
        %v3424 = vld [vmem:[%s15 + $0x98] sm:$0xff]
        %v3425 = vld [vmem:[%s15 + $0xa0] sm:$0xff]
        %v3426 = vld [vmem:[%s15 + $0xa8] sm:$0xff]
        %v3427 = vld [vmem:[%s15 + $0xb0] sm:$0xff]
        %v3428 = vld [vmem:[%s15 + $0xb8] sm:$0xff]
        %v3429 = vld [vmem:[%s15 + $0xc0] sm:$0xff]
        %v3430 = vld [vmem:[%s15 + $0xc8] sm:$0xff]
        %v3431 = vld [vmem:[%s15 + $0xd0] sm:$0xff]
        %v3432 = vld [vmem:[%s15 + $0xd8] sm:$0xff]
        %v3433 = vld [vmem:[%s15 + $0xe0] sm:$0xff]
        %v3434 = vld [vmem:[%s15 + $0xe8] sm:$0xff]
        %v3435 = vld [vmem:[%s15 + $0xf0] sm:$0xff]
        %v3436 = vld [vmem:[%s15 + $0xf8] sm:$0xff]
        %3437 = vmatpush.msra.mxu0 %v3420
        %3438 = vmatpush.msra.mxu0 %v3419
        %3439 = vmatpush.msra.mxu0 %v3418
        %3440 = vmatpush.msra.mxu0 %v3417
        %3441 = vmatpush.msra.mxu0 %v3416
        %3442 = vmatpush.msra.mxu0 %v3415
        %3443 = vmatpush.msra.mxu0 %v3414
        %3444 = vmatpush.msra.mxu0 %v3413
        %3445 = vmatpush.msra.mxu0 %v3412
        %3446 = vmatpush.msra.mxu0 %v3411
        %3447 = vmatpush.msra.mxu0 %v3410
        %3448 = vmatpush.msra.mxu0 %v3409
        %3449 = vmatpush.msra.mxu0 %v3408
        %3450 = vmatpush.msra.mxu0 %v3407
        %3451 = vmatpush.msra.mxu0 %v3406
        %3452 = vmatpush.msra.mxu0 %v3405
        %3453 = vmatmul.f32.gmra.mxu0 %v3309
        %v3454 = vpop.f32.mrf.mxu0
        %v3455 = vadd.f32 0.0, %v3454
        %3456 = vmatmul.f32.gmra.mxu0 %v3311
        %v3457 = vpop.f32.mrf.mxu0
        %v3458 = vadd.f32 0.0, %v3457
        %3459 = vdwg.mxu0
        %3460 = vmatpush.msra.mxu0 %v3436
        %3461 = vmatpush.msra.mxu0 %v3435
        %3462 = vmatpush.msra.mxu0 %v3434
        %3463 = vmatpush.msra.mxu0 %v3433
        %3464 = vmatpush.msra.mxu0 %v3432
        %3465 = vmatpush.msra.mxu0 %v3431
        %3466 = vmatpush.msra.mxu0 %v3430
        %3467 = vmatpush.msra.mxu0 %v3429
        %3468 = vmatpush.msra.mxu0 %v3428
        %3469 = vmatpush.msra.mxu0 %v3427
        %3470 = vmatpush.msra.mxu0 %v3426
        %3471 = vmatpush.msra.mxu0 %v3425
        %3472 = vmatpush.msra.mxu0 %v3424
        %3473 = vmatpush.msra.mxu0 %v3423
        %3474 = vmatpush.msra.mxu0 %v3422
        %3475 = vmatpush.msra.mxu0 %v3421
        %3476 = vmatmul.f32.gmra.mxu0 %v3310
        %v3477 = vpop.f32.mrf.mxu0
        %v3478 = vadd.f32 %v3455, %v3477
        %3479 = vmatmul.f32.gmra.mxu0 %v3312
        %v3480 = vpop.f32.mrf.mxu0
        %v3481 = vadd.f32 %v3458, %v3480
        %3482 = vdwg.mxu0
        %v3483 = vld [vmem:[%s16] sm:$0xff]
        %v3484 = vld [vmem:[%s16 + $0x8] sm:$0xff]
        %v3485 = vld [vmem:[%s16 + $0x10] sm:$0xff]
        %v3486 = vld [vmem:[%s16 + $0x18] sm:$0xff]
        %v3487 = vld [vmem:[%s16 + $0x20] sm:$0xff]
        %v3488 = vld [vmem:[%s16 + $0x28] sm:$0xff]
        %v3489 = vld [vmem:[%s16 + $0x30] sm:$0xff]
        %v3490 = vld [vmem:[%s16 + $0x38] sm:$0xff]
        %v3491 = vld [vmem:[%s16 + $0x40] sm:$0xff]
        %v3492 = vld [vmem:[%s16 + $0x48] sm:$0xff]
        %v3493 = vld [vmem:[%s16 + $0x50] sm:$0xff]
        %v3494 = vld [vmem:[%s16 + $0x58] sm:$0xff]
        %v3495 = vld [vmem:[%s16 + $0x60] sm:$0xff]
        %v3496 = vld [vmem:[%s16 + $0x68] sm:$0xff]
        %v3497 = vld [vmem:[%s16 + $0x70] sm:$0xff]
        %v3498 = vld [vmem:[%s16 + $0x78] sm:$0xff]
        %v3499 = vld [vmem:[%s16 + $0x80] sm:$0xff]
        %v3500 = vld [vmem:[%s16 + $0x88] sm:$0xff]
        %v3501 = vld [vmem:[%s16 + $0x90] sm:$0xff]
        %v3502 = vld [vmem:[%s16 + $0x98] sm:$0xff]
        %v3503 = vld [vmem:[%s16 + $0xa0] sm:$0xff]
        %v3504 = vld [vmem:[%s16 + $0xa8] sm:$0xff]
        %v3505 = vld [vmem:[%s16 + $0xb0] sm:$0xff]
        %v3506 = vld [vmem:[%s16 + $0xb8] sm:$0xff]
        %v3507 = vld [vmem:[%s16 + $0xc0] sm:$0xff]
        %v3508 = vld [vmem:[%s16 + $0xc8] sm:$0xff]
        %v3509 = vld [vmem:[%s16 + $0xd0] sm:$0xff]
        %v3510 = vld [vmem:[%s16 + $0xd8] sm:$0xff]
        %v3511 = vld [vmem:[%s16 + $0xe0] sm:$0xff]
        %v3512 = vld [vmem:[%s16 + $0xe8] sm:$0xff]
        %v3513 = vld [vmem:[%s16 + $0xf0] sm:$0xff]
        %v3514 = vld [vmem:[%s16 + $0xf8] sm:$0xff]
        %3515 = vmatpush.msra.mxu0 %v3498
        %3516 = vmatpush.msra.mxu0 %v3497
        %3517 = vmatpush.msra.mxu0 %v3496
        %3518 = vmatpush.msra.mxu0 %v3495
        %3519 = vmatpush.msra.mxu0 %v3494
        %3520 = vmatpush.msra.mxu0 %v3493
        %3521 = vmatpush.msra.mxu0 %v3492
        %3522 = vmatpush.msra.mxu0 %v3491
        %3523 = vmatpush.msra.mxu0 %v3490
        %3524 = vmatpush.msra.mxu0 %v3489
        %3525 = vmatpush.msra.mxu0 %v3488
        %3526 = vmatpush.msra.mxu0 %v3487
        %3527 = vmatpush.msra.mxu0 %v3486
        %3528 = vmatpush.msra.mxu0 %v3485
        %3529 = vmatpush.msra.mxu0 %v3484
        %3530 = vmatpush.msra.mxu0 %v3483
        %3531 = vmatmul.f32.gmra.mxu0 %v3377
        %v3532 = vpop.f32.mrf.mxu0
        %v3533 = vadd.f32 0.0, %v3532
        %3534 = vmatmul.f32.gmra.mxu0 %v3380
        %v3535 = vpop.f32.mrf.mxu0
        %v3536 = vadd.f32 0.0, %v3535
        %3537 = vdwg.mxu0
        %3538 = vmatpush.msra.mxu0 %v3514
        %3539 = vmatpush.msra.mxu0 %v3513
        %3540 = vmatpush.msra.mxu0 %v3512
        %3541 = vmatpush.msra.mxu0 %v3511
        %3542 = vmatpush.msra.mxu0 %v3510
        %3543 = vmatpush.msra.mxu0 %v3509
        %3544 = vmatpush.msra.mxu0 %v3508
        %3545 = vmatpush.msra.mxu0 %v3507
        %3546 = vmatpush.msra.mxu0 %v3506
        %3547 = vmatpush.msra.mxu0 %v3505
        %3548 = vmatpush.msra.mxu0 %v3504
        %3549 = vmatpush.msra.mxu0 %v3503
        %3550 = vmatpush.msra.mxu0 %v3502
        %3551 = vmatpush.msra.mxu0 %v3501
        %3552 = vmatpush.msra.mxu0 %v3500
        %3553 = vmatpush.msra.mxu0 %v3499
        %3554 = vmatmul.f32.gmra.mxu0 %v3400
        %v3555 = vpop.f32.mrf.mxu0
        %v3556 = vadd.f32 %v3533, %v3555
        %3557 = vmatmul.f32.gmra.mxu0 %v3403
        %v3558 = vpop.f32.mrf.mxu0
        %v3559 = vadd.f32 %v3536, %v3558
        %3560 = vdwg.mxu0
        %v3561 = vsub.f32 %v3478, %v3556
        %v3562 = vsub.f32 %v3481, %v3559
        %3563 = vst [vmem:[%s894] sm:$0xff] %v3561
        %3564 = vst [vmem:[%s894 + $0x8] sm:$0xff] %v3562
        %s3565 = sand.u32 %s504, 1
        %s3566 = sand.u32 %s504, 1
        %s3567 = smul.addr %s3566, 16
        %s3568 = scalar_lea.vmem [#allocation16], %s3567
        %s3569 = sand.u32 %s530, 1
        %s3570 = sand.u32 %s530, 1
        %s3571 = smul.addr %s3570, 16
        %s3572 = scalar_lea.vmem [#allocation17], %s3571
        %s3573 = sand.u32 %s556, 1
        %s3574 = sand.u32 %s556, 1
        %s3575 = smul.addr %s3574, 16
        %s3576 = scalar_lea.vmem [#allocation18], %s3575
        // Predicated region
        $region141: #{forward.1} parent=103 // pred_check
          %p3577 = pneg %p514
        $region142: #{forward.1} parent=103 // pred_check_branch
          %3579 = sbr.rel (%p3577) target = $region144
        $region143: #{forward.1} parent=103 // pred_region
          %s3580 = smul.addr %s40, 8
          %s3581 = scalar_lea.vmem %s21, %s3580
          // Predicated region
          $region145: #{forward.1} parent=143 // pred_check
            _
          $region146: #{forward.1} parent=143 // pred_check_branch
            %3583 = sbr.rel (0) target = $region148
          $region147: #{forward.1} parent=143 // pred_region
            // Predicated region
            $region149: #{forward.1} parent=147 // pred_check
              _
            $region150: #{forward.1} parent=147 // pred_check_branch
              %3585 = sbr.rel (0) target = $region152
            $region151: #{forward.1} parent=147 // pred_region
              // Predicated region
              $region164: #{forward.1} parent=151 // pred_check
                _
              $region165: #{forward.1} parent=151 // pred_check_branch
                %3603 = sbr.rel (0) target = $region167
              $region166: #{forward.1} parent=151 // pred_region
                loop: start=0, step=1, limit=1
                $region168: #{forward.1} parent=166 // loop_pre_header
                  _
                $region169: #{forward.1} parent=166 // loop_header
                  %s3605 = sphi 0, %s3609
                  %p3606 = scmp.ge.s32.totalorder %s3605, 1
                  %s3610 = sphi %s3568, %s3568
                  %s3611 = sphi %s3581, %s3581
                $region170: #{forward.1} parent=166 // loop_header_branch
                  %3608 = sbr.rel (%p3606) target = $region174
                $region171: #{forward.1} parent=166 // loop_body
                  %v3612 = vld [vmem:[%s3610] sm:$0xff]
                  %3613 = vst [vmem:[%s3611] sm:$0xff] %v3612
                  %v3614 = vld [vmem:[%s3610 + $0x8] sm:$0xff]
                  %3615 = vst [vmem:[%s3611 + $0x10] sm:$0xff] %v3614
                $region172: #{forward.1} parent=166 // loop_footer
                  %s3609 = sadd.s32 1, %s3605
                $region173: #{forward.1} parent=166 // loop_footer_branch
                  %3604 = sbr.rel target = $region169
                $region174: #{forward.1} parent=166 // loop_exit
                  _
              $region167: #{forward.1} parent=151 // pred_fallthru
                _
              // Predicated region
              $region175: #{forward.1} parent=151 // pred_check
                _
              $region176: #{forward.1} parent=151 // pred_check_branch
                %3617 = sbr.rel target = $region178
              $region177: #{forward.1} parent=151 // pred_region
                _
              $region178: #{forward.1} parent=151 // pred_fallthru
                _
            $region152: #{forward.1} parent=147 // pred_fallthru
              _
            // Predicated region
            $region153: #{forward.1} parent=147 // pred_check
              _
            $region154: #{forward.1} parent=147 // pred_check_branch
              %3587 = sbr.rel target = $region156
            $region155: #{forward.1} parent=147 // pred_region
              %s3589 = ssub.s32 256, 1
              loop: start=0, step=1, limit=1
              $region157: #{forward.1} parent=155 // loop_pre_header
                _
              $region158: #{forward.1} parent=155 // loop_header
                %s3591 = sphi 0, %s3595
                %p3592 = scmp.ge.s32.totalorder %s3591, 1
                %s3596 = sphi %s3568, %s3568
                %s3597 = sphi %s3581, %s3581
              $region159: #{forward.1} parent=155 // loop_header_branch
                %3594 = sbr.rel (%p3592) target = $region163
              $region160: #{forward.1} parent=155 // loop_body
                %v3598 = vld [vmem:[%s3596] sm:%s3589]
                %3599 = vst [vmem:[%s3597] sm:%s3589] %v3598
                %v3600 = vld [vmem:[%s3596 + $0x8] sm:%s3589]
                %3601 = vst [vmem:[%s3597 + $0x10] sm:%s3589] %v3600
              $region161: #{forward.1} parent=155 // loop_footer
                %s3595 = sadd.s32 1, %s3591
              $region162: #{forward.1} parent=155 // loop_footer_branch
                %3590 = sbr.rel target = $region158
              $region163: #{forward.1} parent=155 // loop_exit
                _
            $region156: #{forward.1} parent=147 // pred_fallthru
              _
          $region148: #{forward.1} parent=143 // pred_fallthru
            _
          %3618 = vnop
        $region144: #{forward.1} parent=103 // pred_fallthru
          _
        // Predicated region
        $region179: #{forward.1} parent=103 // pred_check
          %p3619 = pneg %p540
        $region180: #{forward.1} parent=103 // pred_check_branch
          %3621 = sbr.rel (%p3619) target = $region182
        $region181: #{forward.1} parent=103 // pred_region
          %s3622 = smul.addr %s40, 8
          %s3623 = scalar_lea.vmem %s22, %s3622
          // Predicated region
          $region183: #{forward.1} parent=181 // pred_check
            _
          $region184: #{forward.1} parent=181 // pred_check_branch
            %3625 = sbr.rel (0) target = $region186
          $region185: #{forward.1} parent=181 // pred_region
            // Predicated region
            $region187: #{forward.1} parent=185 // pred_check
              _
            $region188: #{forward.1} parent=185 // pred_check_branch
              %3627 = sbr.rel (0) target = $region190
            $region189: #{forward.1} parent=185 // pred_region
              // Predicated region
              $region202: #{forward.1} parent=189 // pred_check
                _
              $region203: #{forward.1} parent=189 // pred_check_branch
                %3645 = sbr.rel (0) target = $region205
              $region204: #{forward.1} parent=189 // pred_region
                loop: start=0, step=1, limit=1
                $region206: #{forward.1} parent=204 // loop_pre_header
                  _
                $region207: #{forward.1} parent=204 // loop_header
                  %s3647 = sphi 0, %s3651
                  %p3648 = scmp.ge.s32.totalorder %s3647, 1
                  %s3652 = sphi %s3572, %s3572
                  %s3653 = sphi %s3623, %s3623
                $region208: #{forward.1} parent=204 // loop_header_branch
                  %3650 = sbr.rel (%p3648) target = $region212
                $region209: #{forward.1} parent=204 // loop_body
                  %v3654 = vld [vmem:[%s3652] sm:$0xff]
                  %3655 = vst [vmem:[%s3653] sm:$0xff] %v3654
                  %v3656 = vld [vmem:[%s3652 + $0x8] sm:$0xff]
                  %3657 = vst [vmem:[%s3653 + $0x10] sm:$0xff] %v3656
                $region210: #{forward.1} parent=204 // loop_footer
                  %s3651 = sadd.s32 1, %s3647
                $region211: #{forward.1} parent=204 // loop_footer_branch
                  %3646 = sbr.rel target = $region207
                $region212: #{forward.1} parent=204 // loop_exit
                  _
              $region205: #{forward.1} parent=189 // pred_fallthru
                _
              // Predicated region
              $region213: #{forward.1} parent=189 // pred_check
                _
              $region214: #{forward.1} parent=189 // pred_check_branch
                %3659 = sbr.rel target = $region216
              $region215: #{forward.1} parent=189 // pred_region
                _
              $region216: #{forward.1} parent=189 // pred_fallthru
                _
            $region190: #{forward.1} parent=185 // pred_fallthru
              _
            // Predicated region
            $region191: #{forward.1} parent=185 // pred_check
              _
            $region192: #{forward.1} parent=185 // pred_check_branch
              %3629 = sbr.rel target = $region194
            $region193: #{forward.1} parent=185 // pred_region
              %s3631 = ssub.s32 256, 1
              loop: start=0, step=1, limit=1
              $region195: #{forward.1} parent=193 // loop_pre_header
                _
              $region196: #{forward.1} parent=193 // loop_header
                %s3633 = sphi 0, %s3637
                %p3634 = scmp.ge.s32.totalorder %s3633, 1
                %s3638 = sphi %s3572, %s3572
                %s3639 = sphi %s3623, %s3623
              $region197: #{forward.1} parent=193 // loop_header_branch
                %3636 = sbr.rel (%p3634) target = $region201
              $region198: #{forward.1} parent=193 // loop_body
                %v3640 = vld [vmem:[%s3638] sm:%s3631]
                %3641 = vst [vmem:[%s3639] sm:%s3631] %v3640
                %v3642 = vld [vmem:[%s3638 + $0x8] sm:%s3631]
                %3643 = vst [vmem:[%s3639 + $0x10] sm:%s3631] %v3642
              $region199: #{forward.1} parent=193 // loop_footer
                %s3637 = sadd.s32 1, %s3633
              $region200: #{forward.1} parent=193 // loop_footer_branch
                %3632 = sbr.rel target = $region196
              $region201: #{forward.1} parent=193 // loop_exit
                _
            $region194: #{forward.1} parent=185 // pred_fallthru
              _
          $region186: #{forward.1} parent=181 // pred_fallthru
            _
          %3660 = vnop
        $region182: #{forward.1} parent=103 // pred_fallthru
          _
        // Predicated region
        $region217: #{forward.1} parent=103 // pred_check
          %p3661 = pneg %p566
        $region218: #{forward.1} parent=103 // pred_check_branch
          %3663 = sbr.rel (%p3661) target = $region220
        $region219: #{forward.1} parent=103 // pred_region
          %s3664 = smul.addr %s40, 8
          %s3665 = scalar_lea.vmem %s23, %s3664
          // Predicated region
          $region221: #{forward.1} parent=219 // pred_check
            _
          $region222: #{forward.1} parent=219 // pred_check_branch
            %3667 = sbr.rel (0) target = $region224
          $region223: #{forward.1} parent=219 // pred_region
            // Predicated region
            $region225: #{forward.1} parent=223 // pred_check
              _
            $region226: #{forward.1} parent=223 // pred_check_branch
              %3669 = sbr.rel (0) target = $region228
            $region227: #{forward.1} parent=223 // pred_region
              // Predicated region
              $region240: #{forward.1} parent=227 // pred_check
                _
              $region241: #{forward.1} parent=227 // pred_check_branch
                %3687 = sbr.rel (0) target = $region243
              $region242: #{forward.1} parent=227 // pred_region
                loop: start=0, step=1, limit=1
                $region244: #{forward.1} parent=242 // loop_pre_header
                  _
                $region245: #{forward.1} parent=242 // loop_header
                  %s3689 = sphi 0, %s3693
                  %p3690 = scmp.ge.s32.totalorder %s3689, 1
                  %s3694 = sphi %s3576, %s3576
                  %s3695 = sphi %s3665, %s3665
                $region246: #{forward.1} parent=242 // loop_header_branch
                  %3692 = sbr.rel (%p3690) target = $region250
                $region247: #{forward.1} parent=242 // loop_body
                  %v3696 = vld [vmem:[%s3694] sm:$0xff]
                  %3697 = vst [vmem:[%s3695] sm:$0xff] %v3696
                  %v3698 = vld [vmem:[%s3694 + $0x8] sm:$0xff]
                  %3699 = vst [vmem:[%s3695 + $0x10] sm:$0xff] %v3698
                $region248: #{forward.1} parent=242 // loop_footer
                  %s3693 = sadd.s32 1, %s3689
                $region249: #{forward.1} parent=242 // loop_footer_branch
                  %3688 = sbr.rel target = $region245
                $region250: #{forward.1} parent=242 // loop_exit
                  _
              $region243: #{forward.1} parent=227 // pred_fallthru
                _
              // Predicated region
              $region251: #{forward.1} parent=227 // pred_check
                _
              $region252: #{forward.1} parent=227 // pred_check_branch
                %3701 = sbr.rel target = $region254
              $region253: #{forward.1} parent=227 // pred_region
                _
              $region254: #{forward.1} parent=227 // pred_fallthru
                _
            $region228: #{forward.1} parent=223 // pred_fallthru
              _
            // Predicated region
            $region229: #{forward.1} parent=223 // pred_check
              _
            $region230: #{forward.1} parent=223 // pred_check_branch
              %3671 = sbr.rel target = $region232
            $region231: #{forward.1} parent=223 // pred_region
              %s3673 = ssub.s32 256, 1
              loop: start=0, step=1, limit=1
              $region233: #{forward.1} parent=231 // loop_pre_header
                _
              $region234: #{forward.1} parent=231 // loop_header
                %s3675 = sphi 0, %s3679
                %p3676 = scmp.ge.s32.totalorder %s3675, 1
                %s3680 = sphi %s3576, %s3576
                %s3681 = sphi %s3665, %s3665
              $region235: #{forward.1} parent=231 // loop_header_branch
                %3678 = sbr.rel (%p3676) target = $region239
              $region236: #{forward.1} parent=231 // loop_body
                %v3682 = vld [vmem:[%s3680] sm:%s3673]
                %3683 = vst [vmem:[%s3681] sm:%s3673] %v3682
                %v3684 = vld [vmem:[%s3680 + $0x8] sm:%s3673]
                %3685 = vst [vmem:[%s3681 + $0x10] sm:%s3673] %v3684
              $region237: #{forward.1} parent=231 // loop_footer
                %s3679 = sadd.s32 1, %s3675
              $region238: #{forward.1} parent=231 // loop_footer_branch
                %3674 = sbr.rel target = $region234
              $region239: #{forward.1} parent=231 // loop_exit
                _
            $region232: #{forward.1} parent=223 // pred_fallthru
              _
          $region224: #{forward.1} parent=219 // pred_fallthru
            _
          %3702 = vnop
        $region220: #{forward.1} parent=103 // pred_fallthru
          _
      $region104: #{forward.1} parent=5 // pred_fallthru
        _
      %p3703 = scmp.le.s32.totalorder 2, %s35
      // Predicated region
      $region255: #{forward.1} parent=5 // pred_check
        %p3704 = pneg %p3703
      $region256: #{forward.1} parent=5 // pred_check_branch
        %3706 = sbr.rel (%p3704) target = $region258
      $region257: #{forward.1} parent=5 // pred_region
        %s3707 = ssub.s32 %s35, 2
        // Predicated region
        $region259: #{forward.1} parent=257 // pred_check
          %p3708 = pneg %p520
        $region260: #{forward.1} parent=257 // pred_check_branch
          %3710 = sbr.rel (%p3708) target = $region262
        $region261: #{forward.1} parent=257 // pred_region
          %s3711 = sand.u32 %s505, 1
          %s3712 = sand.u32 %s505, 1
          %s3713 = smul.addr %s3712, 16
          %s3714 = scalar_lea.vmem [#allocation16], %s3713
        $region262: #{forward.1} parent=257 // pred_fallthru
          _
        // Predicated region
        $region263: #{forward.1} parent=257 // pred_check
          %p3715 = pneg %p546
        $region264: #{forward.1} parent=257 // pred_check_branch
          %3717 = sbr.rel (%p3715) target = $region266
        $region265: #{forward.1} parent=257 // pred_region
          %s3718 = sand.u32 %s531, 1
          %s3719 = sand.u32 %s531, 1
          %s3720 = smul.addr %s3719, 16
          %s3721 = scalar_lea.vmem [#allocation17], %s3720
        $region266: #{forward.1} parent=257 // pred_fallthru
          _
        // Predicated region
        $region267: #{forward.1} parent=257 // pred_check
          %p3722 = pneg %p572
        $region268: #{forward.1} parent=257 // pred_check_branch
          %3724 = sbr.rel (%p3722) target = $region270
        $region269: #{forward.1} parent=257 // pred_region
          %s3725 = sand.u32 %s557, 1
          %s3726 = sand.u32 %s557, 1
          %s3727 = smul.addr %s3726, 16
          %s3728 = scalar_lea.vmem [#allocation18], %s3727
        $region270: #{forward.1} parent=257 // pred_fallthru
          _
      $region258: #{forward.1} parent=5 // pred_fallthru
        _
    $region6: #{forward.1} parent=1 // loop_footer
      %s39 = sadd.s32 1, %s35
    $region7: #{forward.1} parent=1 // loop_footer_branch
      %34 = sbr.rel target = $region3
    $region8: #{forward.1} parent=1 // loop_exit
      _
    %3729 = vsyncpa [#allocation3], 1
    %s3730 = scalar_lea.sflag [#allocation3], 1
    %3731 = vsyncpa %s3730, 1
    %3732 = vsyncpa [#allocation5], 1
    %3733 = vsyncpa [#allocation8], 1
    %3734 = vsyncpa [#allocation11], 1
    %3735 = vsyncpa [#allocation14], 1

</llo_original>
